<compile_context>
chip_gen: v7x
topology: tpu7x:2x2x1
jax: 0.10.0
libtpu: 0.0.40
codegen_flags: <defaults>
</compile_context>

<pallas_src>
import jax
import jax.numpy as jnp
from jax import lax
from jax.experimental import pallas as pl
from jax.experimental.pallas import tpu as pltpu

# --- small synthetic config (roberta-base shrunk) ---
PAD_IDX = 1            # roberta pad_token_id
B, L = 2, 8            # batch, seq
BL = B * L
D, H = 32, 2           # hidden, heads
DH = D // H
F = 64                 # FFN dim
V = 64                 # vocab
NL = 2                 # encoder layers
NLAB = 2               # num labels
LN_EPS = 1e-5
OUT_LANES = 128        # lane-dense logits row, sliced to NLAB in the wrapper
HEAD_LANES = 128       # each head's Q/K/V block padded to a full vreg width
QKV_LANES = 3 * H * HEAD_LANES
EMB_ROWS = 128         # [tok(V) ; pos(L) ; zero-pad] -> one lane-vreg wide one-hot
SCALE = 1.0 / (DH ** 0.5)

# rows of the packed per-layer vector block bvec: [NL, 8, 128]
ROW_BO, ROW_LN1G, ROW_LN1B, ROW_B1, ROW_B2, ROW_LN2G, ROW_LN2B, ROW_PAD = range(8)


def _layernorm(x, g, b):
    # single-pass (E[x^2] - mean^2): fine for 0.02-scale synthetic weights.
    # TODO(synk): switch to two-pass / Welford if real pretrained weights
    # (large per-channel means) are ever loaded.
    inv_n = 1.0 / x.shape[-1]
    mu = jnp.sum(x, axis=-1, keepdims=True) * inv_n
    ex2 = jnp.sum(x * x, axis=-1, keepdims=True) * inv_n
    var = ex2 - mu * mu
    return (x - mu) * lax.rsqrt(var + LN_EPS) * g + b


def _gelu(x):
    # tanh-approx GELU (EUP-friendly).  HF RoBERTa uses exact erf GELU (~1e-3 diff).
    return 0.5 * x * (1.0 + jnp.tanh(0.7978845608028654 * (x + 0.044715 * x * x * x)))


def _mm(a, b):
    # bf16 MXU operands, f32 accumulation.
    return jnp.dot(a.astype(jnp.bfloat16), b.astype(jnp.bfloat16),
                   preferred_element_type=jnp.float32)


def _mm_nt(a, b):
    # a[m,k] x b[n,k]^T with contraction on the last dims of BOTH operands, so
    # the k-"transpose" rides the MXU operand path (no standalone XLU vxpose).
    return lax.dot_general(a.astype(jnp.bfloat16), b.astype(jnp.bfloat16),
                           (((1,), (1,)), ((), ())),
                           preferred_element_type=jnp.float32)


def transformer_kernel(ids_ref, emb_ref, wqkv_ref, bqkv_ref, wo_ref, w1_ref,
                       w2_ref, bvec_ref, whead_ref, bhead_ref, out_ref):
    # ---- attention_mask = (input_ids != pad_idx) -> additive key bias rows ----
    # ids live in SMEM; build one [1, L] key-bias vector per batch from scalars.
    iota_l = lax.broadcasted_iota(jnp.int32, (1, L), 1)
    key_bias = []
    for b in range(B):
        bias_b = jnp.zeros((1, L), jnp.float32)
        for j in range(L):
            is_pad = ids_ref[b * L + j] == PAD_IDX
            bias_b = jnp.where(jnp.logical_and(iota_l == j, is_pad), -1e9, bias_b)
        key_bias.append(bias_b)

    # ---- token + position lookup as ONE one-hot matmul over emb=[tok;pos;0] ----
    # TODO(synk): at real roberta-base vocab (~50k) replace the one-hot matmul
    # with a per-token DMA gather; real RoBERTa also offsets positions by
    # pad_idx+1 and skips pad positions (irrelevant for synthetic weights).
    iota_row = lax.broadcasted_iota(jnp.int32, (BL, EMB_ROWS), 0)
    iota_col = lax.broadcasted_iota(jnp.int32, (BL, EMB_ROWS), 1)
    onehot = jnp.where(iota_col == V + (iota_row & (L - 1)), 1.0, 0.0)  # pos part
    for t in range(BL):
        onehot = jnp.where(
            jnp.logical_and(iota_row == t, iota_col == ids_ref[t]), 1.0, onehot)
    x = _mm(onehot, emb_ref[...])                                   # [BL, D] f32

    for l in range(NL):                     # static unrolled layer loop
        # fused QKV for all B*L tokens; per-head blocks lane-padded to 128 so
        # every head slice below starts on a vreg boundary (no relayouts).
        qkv = _mm(x, wqkv_ref[l]) + bqkv_ref[l]                     # [BL, 3*H*128]
        wo_l = wo_ref[l]                                            # [H*128, D] bf16

        attn_rows = []
        for b in range(B):                  # per-batch score/softmax/ctx
            r0 = b * L                      # sublane-aligned (L == 8)
            acc_b = jnp.zeros((L, D), jnp.float32)
            for h in range(H):
                q_lo = h * HEAD_LANES
                k_lo = (H + h) * HEAD_LANES
                v_lo = (2 * H + h) * HEAD_LANES
                qh = qkv[r0:r0 + L, q_lo:q_lo + HEAD_LANES]         # [L, 128]
                kh = qkv[r0:r0 + L, k_lo:k_lo + HEAD_LANES]
                vh = qkv[r0:r0 + L, v_lo:v_lo + HEAD_LANES]
                # zero-padded lanes (>= DH) contribute nothing to the scores.
                s = _mm_nt(qh, kh) * SCALE + key_bias[b]            # [L, L]
                s = s - jnp.max(s, axis=-1, keepdims=True)
                p = jnp.exp(s)
                p = p * pl.reciprocal(jnp.sum(p, axis=-1, keepdims=True),
                                      approx=True)
                ctx = _mm(p, vh)                                    # [L, 128]
                # weight-side static slice of wo (rows h*128..+128; only first
                # DH rows nonzero) instead of a head concat of activations.
                acc_b = acc_b + _mm(ctx, wo_l[h * HEAD_LANES:(h + 1) * HEAD_LANES, :])
            attn_rows.append(acc_b)
        attn = jnp.concatenate(attn_rows, axis=0)                   # [BL, D]
        attn = attn + bvec_ref[l, ROW_BO:ROW_BO + 1, :D]
        x = _layernorm(x + attn,
                       bvec_ref[l, ROW_LN1G:ROW_LN1G + 1, :D],
                       bvec_ref[l, ROW_LN1B:ROW_LN1B + 1, :D])

        # FFN over all B*L tokens at once
        hid = _gelu(_mm(x, w1_ref[l]) + bvec_ref[l, ROW_B1:ROW_B1 + 1, :F])
        ffn = _mm(hid, w2_ref[l]) + bvec_ref[l, ROW_B2:ROW_B2 + 1, :D]
        x = _layernorm(x + ffn,
                       bvec_ref[l, ROW_LN2G:ROW_LN2G + 1, :D],
                       bvec_ref[l, ROW_LN2B:ROW_LN2B + 1, :D])

    # ---- RoBERTa classification head: <s> token -> dense+tanh -> out_proj ----
    # Select the <s> rows with a static 0/1 matrix via the MXU (no sublane
    # gather / relayout), then run the whole head batched over B rows.
    iota_b = lax.broadcasted_iota(jnp.int32, (B, BL), 0)
    iota_t = lax.broadcasted_iota(jnp.int32, (B, BL), 1)
    sel = jnp.where(iota_t == iota_b * L, 1.0, 0.0)                 # [B, BL]
    cls = _mm(sel, x)                                               # [B, D]

    wp = whead_ref[:, :D]                                           # [D, D]
    wc = whead_ref[:, 128:]                                         # [D, 128] (padded)
    bp = bhead_ref[0:1, :D]                                         # [1, D]
    bc = bhead_ref[1:2, :]                                          # [1, 128] (padded)
    pooled = jnp.tanh(_mm(cls, wp) + bp)
    logits = _mm(pooled, wc) + bc                                   # [B, 128]
    out_ref[...] = logits.astype(out_ref.dtype)


def init_params(key):
    ks = jax.random.split(key, 10)
    nrm = lambda k, shape: (0.02 * jax.random.normal(k, shape)).astype(jnp.float32)

    # [tok(V) ; pos(L) ; zero-pad] embedding table, padded to 128 rows.
    emb = jnp.zeros((EMB_ROWS, D), jnp.float32)
    emb = emb.at[:V, :].set(nrm(ks[0], (V, D)))
    emb = emb.at[V:V + L, :].set(nrm(ks[1], (L, D)))

    # fused QKV with each head's Q/K/V block lane-padded to 128 columns:
    # lanes [h*128, +DH)=Q_h, [(H+h)*128, +DH)=K_h, [(2H+h)*128, +DH)=V_h.
    wq = nrm(ks[2], (NL, D, H, DH))
    wk = nrm(ks[3], (NL, D, H, DH))
    wv = nrm(ks[4], (NL, D, H, DH))
    wqkv = jnp.zeros((NL, D, QKV_LANES), jnp.float32)
    for h in range(H):
        wqkv = wqkv.at[:, :, h * 128:h * 128 + DH].set(wq[:, :, :, h].transpose(0, 2, 1)[:, :, :] if False else wq[:, :, h, :])
        wqkv = wqkv.at[:, :, (H + h) * 128:(H + h) * 128 + DH].set(wk[:, :, h, :])
        wqkv = wqkv.at[:, :, (2 * H + h) * 128:(2 * H + h) * 128 + DH].set(wv[:, :, h, :])
    bqkv = jnp.zeros((NL, 1, QKV_LANES), jnp.float32)   # QKV bias (zero, RoBERTa-style init)

    # output projection with head blocks stacked along sublanes (rows h*128..+DH)
    wo_h = nrm(ks[5], (NL, H, DH, D))
    wo = jnp.zeros((NL, H * HEAD_LANES, D), jnp.float32)
    for h in range(H):
        wo = wo.at[:, h * HEAD_LANES:h * HEAD_LANES + DH, :].set(wo_h[:, h])

    w1 = nrm(ks[6], (NL, D, F))
    w2 = nrm(ks[7], (NL, F, D))

    # all per-layer bias / LN vectors lane-padded to 128 and stacked (one input)
    bvec = jnp.zeros((NL, 8, 128), jnp.float32)
    bvec = bvec.at[:, ROW_LN1G, :D].set(1.0)
    bvec = bvec.at[:, ROW_LN2G, :D].set(1.0)

    # head: pooler weight in lanes [0, D), out_proj in lanes [128, 128+NLAB)
    whead = jnp.zeros((D, 256), jnp.float32)
    whead = whead.at[:, :D].set(nrm(ks[8], (D, D)))
    whead = whead.at[:, 128:128 + NLAB].set(nrm(ks[9], (D, NLAB)))
    bhead = jnp.zeros((8, 128), jnp.float32)   # row 0 = pooler bias, row 1 = out_proj bias

    bf16 = lambda a: a.astype(jnp.bfloat16)    # MXU operands stored in bf16
    return dict(emb=bf16(emb), wqkv=bf16(wqkv), bqkv=bqkv, wo=bf16(wo),
                w1=bf16(w1), w2=bf16(w2), bvec=bvec, whead=bf16(whead),
                bhead=bhead)


def custom_transformer_model(input_ids, params):
    ids_flat = input_ids.astype(jnp.int32).reshape(BL)   # scalar control data -> SMEM

    vmem = pl.BlockSpec(memory_space=pltpu.MemorySpace.VMEM)   # whole array, no
    smem = pl.BlockSpec(memory_space=pltpu.MemorySpace.SMEM)   # double-buffering

    weights = (params['emb'], params['wqkv'], params['bqkv'], params['wo'],
               params['w1'], params['w2'], params['bvec'], params['whead'],
               params['bhead'])

    # TODO(synk): for real roberta-base-sized weights, add a layer grid axis
    # marked "arbitrary" with per-layer bf16 BlockSpecs (pipeline_mode=
    # pl.Buffered(2)) instead of whole-array VMEM residency (mandatory on
    # v7x's 64 MiB VMEM); the one-hot embedding also becomes a DMA gather.
    out = pl.pallas_call(
        transformer_kernel,
        out_shape=jax.ShapeDtypeStruct((B, OUT_LANES), jnp.float32),
        in_specs=[smem] + [vmem] * len(weights),
        out_specs=vmem,
    )(ids_flat, *weights)
    return out[:, :NLAB]


if __name__ == "__main__":
    key = jax.random.PRNGKey(0)
    k_ids, k_params = jax.random.split(key)

    # deterministic example input: token ids in [2, V), last 2 positions padded
    input_ids = jax.random.randint(k_ids, (B, L), 2, V, dtype=jnp.int32)
    input_ids = input_ids.at[:, -2:].set(PAD_IDX)   # exercises the attention-mask path

    params = init_params(k_params)

    logits = custom_transformer_model(input_ids, params)
    logits = jax.block_until_ready(logits)
    assert logits.shape == (B, NLAB)
    print("KERNEL_OK")
</pallas_src>

<mosaic_0001>
module attributes {stable_mosaic.version = 11 : i64} {
  func.func @transformer_kernel(%arg0: memref<16xi32, #tpu.memory_space<smem>>, %arg1: memref<128x32xbf16, #tpu.memory_space<vmem>>, %arg2: memref<2x32x768xbf16, #tpu.memory_space<vmem>>, %arg3: memref<2x1x768xf32, #tpu.memory_space<vmem>>, %arg4: memref<2x256x32xbf16, #tpu.memory_space<vmem>>, %arg5: memref<2x32x64xbf16, #tpu.memory_space<vmem>>, %arg6: memref<2x64x32xbf16, #tpu.memory_space<vmem>>, %arg7: memref<2x8x128xf32, #tpu.memory_space<vmem>>, %arg8: memref<32x256xbf16, #tpu.memory_space<vmem>>, %arg9: memref<8x128xf32, #tpu.memory_space<vmem>>, %arg10: memref<2x128xf32, #tpu.memory_space<vmem>>) attributes {dimension_semantics = [], scalar_prefetch = 0 : i64, scratch_operands = 0 : i64, tpu.core_type = #tpu.core_type<tc>} {
    %0 = tpu.iota {dimensions = array<i32: 1>} : vector<1x8xi32>
    %cst = arith.constant 0.000000e+00 : f32
    %1 = vector.broadcast %cst : f32 to vector<1x8xf32>
    %c0 = arith.constant 0 : index
    %2 = memref.load %arg0[%c0] : memref<16xi32, #tpu.memory_space<smem>>
    %c1_i32 = arith.constant 1 : i32
    %3 = arith.cmpi eq, %2, %c1_i32 : i32
    %c0_i32 = arith.constant 0 : i32
    %4 = vector.broadcast %c0_i32 : i32 to vector<1x8xi32>
    %5 = arith.cmpi eq, %0, %4 : vector<1x8xi32>
    %6 = vector.broadcast %3 : i1 to vector<1x8xi1>
    %7 = arith.andi %5, %6 : vector<1x8xi1>
    %cst_0 = arith.constant -1.000000e+09 : f32
    %8 = vector.broadcast %cst_0 : f32 to vector<1x8xf32>
    %9 = arith.select %7, %8, %1 : vector<1x8xi1>, vector<1x8xf32>
    %c1 = arith.constant 1 : index
    %10 = memref.load %arg0[%c1] : memref<16xi32, #tpu.memory_space<smem>>
    %c1_i32_1 = arith.constant 1 : i32
    %11 = arith.cmpi eq, %10, %c1_i32_1 : i32
    %c1_i32_2 = arith.constant 1 : i32
    %12 = vector.broadcast %c1_i32_2 : i32 to vector<1x8xi32>
    %13 = arith.cmpi eq, %0, %12 : vector<1x8xi32>
    %14 = vector.broadcast %11 : i1 to vector<1x8xi1>
    %15 = arith.andi %13, %14 : vector<1x8xi1>
    %cst_3 = arith.constant -1.000000e+09 : f32
    %16 = vector.broadcast %cst_3 : f32 to vector<1x8xf32>
    %17 = arith.select %15, %16, %9 : vector<1x8xi1>, vector<1x8xf32>
    %c2 = arith.constant 2 : index
    %18 = memref.load %arg0[%c2] : memref<16xi32, #tpu.memory_space<smem>>
    %c1_i32_4 = arith.constant 1 : i32
    %19 = arith.cmpi eq, %18, %c1_i32_4 : i32
    %c2_i32 = arith.constant 2 : i32
    %20 = vector.broadcast %c2_i32 : i32 to vector<1x8xi32>
    %21 = arith.cmpi eq, %0, %20 : vector<1x8xi32>
    %22 = vector.broadcast %19 : i1 to vector<1x8xi1>
    %23 = arith.andi %21, %22 : vector<1x8xi1>
    %cst_5 = arith.constant -1.000000e+09 : f32
    %24 = vector.broadcast %cst_5 : f32 to vector<1x8xf32>
    %25 = arith.select %23, %24, %17 : vector<1x8xi1>, vector<1x8xf32>
    %c3 = arith.constant 3 : index
    %26 = memref.load %arg0[%c3] : memref<16xi32, #tpu.memory_space<smem>>
    %c1_i32_6 = arith.constant 1 : i32
    %27 = arith.cmpi eq, %26, %c1_i32_6 : i32
    %c3_i32 = arith.constant 3 : i32
    %28 = vector.broadcast %c3_i32 : i32 to vector<1x8xi32>
    %29 = arith.cmpi eq, %0, %28 : vector<1x8xi32>
    %30 = vector.broadcast %27 : i1 to vector<1x8xi1>
    %31 = arith.andi %29, %30 : vector<1x8xi1>
    %cst_7 = arith.constant -1.000000e+09 : f32
    %32 = vector.broadcast %cst_7 : f32 to vector<1x8xf32>
    %33 = arith.select %31, %32, %25 : vector<1x8xi1>, vector<1x8xf32>
    %c4 = arith.constant 4 : index
    %34 = memref.load %arg0[%c4] : memref<16xi32, #tpu.memory_space<smem>>
    %c1_i32_8 = arith.constant 1 : i32
    %35 = arith.cmpi eq, %34, %c1_i32_8 : i32
    %c4_i32 = arith.constant 4 : i32
    %36 = vector.broadcast %c4_i32 : i32 to vector<1x8xi32>
    %37 = arith.cmpi eq, %0, %36 : vector<1x8xi32>
    %38 = vector.broadcast %35 : i1 to vector<1x8xi1>
    %39 = arith.andi %37, %38 : vector<1x8xi1>
    %cst_9 = arith.constant -1.000000e+09 : f32
    %40 = vector.broadcast %cst_9 : f32 to vector<1x8xf32>
    %41 = arith.select %39, %40, %33 : vector<1x8xi1>, vector<1x8xf32>
    %c5 = arith.constant 5 : index
    %42 = memref.load %arg0[%c5] : memref<16xi32, #tpu.memory_space<smem>>
    %c1_i32_10 = arith.constant 1 : i32
    %43 = arith.cmpi eq, %42, %c1_i32_10 : i32
    %c5_i32 = arith.constant 5 : i32
    %44 = vector.broadcast %c5_i32 : i32 to vector<1x8xi32>
    %45 = arith.cmpi eq, %0, %44 : vector<1x8xi32>
    %46 = vector.broadcast %43 : i1 to vector<1x8xi1>
    %47 = arith.andi %45, %46 : vector<1x8xi1>
    %cst_11 = arith.constant -1.000000e+09 : f32
    %48 = vector.broadcast %cst_11 : f32 to vector<1x8xf32>
    %49 = arith.select %47, %48, %41 : vector<1x8xi1>, vector<1x8xf32>
    %c6 = arith.constant 6 : index
    %50 = memref.load %arg0[%c6] : memref<16xi32, #tpu.memory_space<smem>>
    %c1_i32_12 = arith.constant 1 : i32
    %51 = arith.cmpi eq, %50, %c1_i32_12 : i32
    %c6_i32 = arith.constant 6 : i32
    %52 = vector.broadcast %c6_i32 : i32 to vector<1x8xi32>
    %53 = arith.cmpi eq, %0, %52 : vector<1x8xi32>
    %54 = vector.broadcast %51 : i1 to vector<1x8xi1>
    %55 = arith.andi %53, %54 : vector<1x8xi1>
    %cst_13 = arith.constant -1.000000e+09 : f32
    %56 = vector.broadcast %cst_13 : f32 to vector<1x8xf32>
    %57 = arith.select %55, %56, %49 : vector<1x8xi1>, vector<1x8xf32>
    %c7 = arith.constant 7 : index
    %58 = memref.load %arg0[%c7] : memref<16xi32, #tpu.memory_space<smem>>
    %c1_i32_14 = arith.constant 1 : i32
    %59 = arith.cmpi eq, %58, %c1_i32_14 : i32
    %c7_i32 = arith.constant 7 : i32
    %60 = vector.broadcast %c7_i32 : i32 to vector<1x8xi32>
    %61 = arith.cmpi eq, %0, %60 : vector<1x8xi32>
    %62 = vector.broadcast %59 : i1 to vector<1x8xi1>
    %63 = arith.andi %61, %62 : vector<1x8xi1>
    %cst_15 = arith.constant -1.000000e+09 : f32
    %64 = vector.broadcast %cst_15 : f32 to vector<1x8xf32>
    %65 = arith.select %63, %64, %57 : vector<1x8xi1>, vector<1x8xf32>
    %cst_16 = arith.constant 0.000000e+00 : f32
    %66 = vector.broadcast %cst_16 : f32 to vector<1x8xf32>
    %c8 = arith.constant 8 : index
    %67 = memref.load %arg0[%c8] : memref<16xi32, #tpu.memory_space<smem>>
    %c1_i32_17 = arith.constant 1 : i32
    %68 = arith.cmpi eq, %67, %c1_i32_17 : i32
    %c0_i32_18 = arith.constant 0 : i32
    %69 = vector.broadcast %c0_i32_18 : i32 to vector<1x8xi32>
    %70 = arith.cmpi eq, %0, %69 : vector<1x8xi32>
    %71 = vector.broadcast %68 : i1 to vector<1x8xi1>
    %72 = arith.andi %70, %71 : vector<1x8xi1>
    %cst_19 = arith.constant -1.000000e+09 : f32
    %73 = vector.broadcast %cst_19 : f32 to vector<1x8xf32>
    %74 = arith.select %72, %73, %66 : vector<1x8xi1>, vector<1x8xf32>
    %c9 = arith.constant 9 : index
    %75 = memref.load %arg0[%c9] : memref<16xi32, #tpu.memory_space<smem>>
    %c1_i32_20 = arith.constant 1 : i32
    %76 = arith.cmpi eq, %75, %c1_i32_20 : i32
    %c1_i32_21 = arith.constant 1 : i32
    %77 = vector.broadcast %c1_i32_21 : i32 to vector<1x8xi32>
    %78 = arith.cmpi eq, %0, %77 : vector<1x8xi32>
    %79 = vector.broadcast %76 : i1 to vector<1x8xi1>
    %80 = arith.andi %78, %79 : vector<1x8xi1>
    %cst_22 = arith.constant -1.000000e+09 : f32
    %81 = vector.broadcast %cst_22 : f32 to vector<1x8xf32>
    %82 = arith.select %80, %81, %74 : vector<1x8xi1>, vector<1x8xf32>
    %c10 = arith.constant 10 : index
    %83 = memref.load %arg0[%c10] : memref<16xi32, #tpu.memory_space<smem>>
    %c1_i32_23 = arith.constant 1 : i32
    %84 = arith.cmpi eq, %83, %c1_i32_23 : i32
    %c2_i32_24 = arith.constant 2 : i32
    %85 = vector.broadcast %c2_i32_24 : i32 to vector<1x8xi32>
    %86 = arith.cmpi eq, %0, %85 : vector<1x8xi32>
    %87 = vector.broadcast %84 : i1 to vector<1x8xi1>
    %88 = arith.andi %86, %87 : vector<1x8xi1>
    %cst_25 = arith.constant -1.000000e+09 : f32
    %89 = vector.broadcast %cst_25 : f32 to vector<1x8xf32>
    %90 = arith.select %88, %89, %82 : vector<1x8xi1>, vector<1x8xf32>
    %c11 = arith.constant 11 : index
    %91 = memref.load %arg0[%c11] : memref<16xi32, #tpu.memory_space<smem>>
    %c1_i32_26 = arith.constant 1 : i32
    %92 = arith.cmpi eq, %91, %c1_i32_26 : i32
    %c3_i32_27 = arith.constant 3 : i32
    %93 = vector.broadcast %c3_i32_27 : i32 to vector<1x8xi32>
    %94 = arith.cmpi eq, %0, %93 : vector<1x8xi32>
    %95 = vector.broadcast %92 : i1 to vector<1x8xi1>
    %96 = arith.andi %94, %95 : vector<1x8xi1>
    %cst_28 = arith.constant -1.000000e+09 : f32
    %97 = vector.broadcast %cst_28 : f32 to vector<1x8xf32>
    %98 = arith.select %96, %97, %90 : vector<1x8xi1>, vector<1x8xf32>
    %c12 = arith.constant 12 : index
    %99 = memref.load %arg0[%c12] : memref<16xi32, #tpu.memory_space<smem>>
    %c1_i32_29 = arith.constant 1 : i32
    %100 = arith.cmpi eq, %99, %c1_i32_29 : i32
    %c4_i32_30 = arith.constant 4 : i32
    %101 = vector.broadcast %c4_i32_30 : i32 to vector<1x8xi32>
    %102 = arith.cmpi eq, %0, %101 : vector<1x8xi32>
    %103 = vector.broadcast %100 : i1 to vector<1x8xi1>
    %104 = arith.andi %102, %103 : vector<1x8xi1>
    %cst_31 = arith.constant -1.000000e+09 : f32
    %105 = vector.broadcast %cst_31 : f32 to vector<1x8xf32>
    %106 = arith.select %104, %105, %98 : vector<1x8xi1>, vector<1x8xf32>
    %c13 = arith.constant 13 : index
    %107 = memref.load %arg0[%c13] : memref<16xi32, #tpu.memory_space<smem>>
    %c1_i32_32 = arith.constant 1 : i32
    %108 = arith.cmpi eq, %107, %c1_i32_32 : i32
    %c5_i32_33 = arith.constant 5 : i32
    %109 = vector.broadcast %c5_i32_33 : i32 to vector<1x8xi32>
    %110 = arith.cmpi eq, %0, %109 : vector<1x8xi32>
    %111 = vector.broadcast %108 : i1 to vector<1x8xi1>
    %112 = arith.andi %110, %111 : vector<1x8xi1>
    %cst_34 = arith.constant -1.000000e+09 : f32
    %113 = vector.broadcast %cst_34 : f32 to vector<1x8xf32>
    %114 = arith.select %112, %113, %106 : vector<1x8xi1>, vector<1x8xf32>
    %c14 = arith.constant 14 : index
    %115 = memref.load %arg0[%c14] : memref<16xi32, #tpu.memory_space<smem>>
    %c1_i32_35 = arith.constant 1 : i32
    %116 = arith.cmpi eq, %115, %c1_i32_35 : i32
    %c6_i32_36 = arith.constant 6 : i32
    %117 = vector.broadcast %c6_i32_36 : i32 to vector<1x8xi32>
    %118 = arith.cmpi eq, %0, %117 : vector<1x8xi32>
    %119 = vector.broadcast %116 : i1 to vector<1x8xi1>
    %120 = arith.andi %118, %119 : vector<1x8xi1>
    %cst_37 = arith.constant -1.000000e+09 : f32
    %121 = vector.broadcast %cst_37 : f32 to vector<1x8xf32>
    %122 = arith.select %120, %121, %114 : vector<1x8xi1>, vector<1x8xf32>
    %c15 = arith.constant 15 : index
    %123 = memref.load %arg0[%c15] : memref<16xi32, #tpu.memory_space<smem>>
    %c1_i32_38 = arith.constant 1 : i32
    %124 = arith.cmpi eq, %123, %c1_i32_38 : i32
    %c7_i32_39 = arith.constant 7 : i32
    %125 = vector.broadcast %c7_i32_39 : i32 to vector<1x8xi32>
    %126 = arith.cmpi eq, %0, %125 : vector<1x8xi32>
    %127 = vector.broadcast %124 : i1 to vector<1x8xi1>
    %128 = arith.andi %126, %127 : vector<1x8xi1>
    %cst_40 = arith.constant -1.000000e+09 : f32
    %129 = vector.broadcast %cst_40 : f32 to vector<1x8xf32>
    %130 = arith.select %128, %129, %122 : vector<1x8xi1>, vector<1x8xf32>
    %131 = tpu.iota {dimensions = array<i32: 0>} : vector<16x128xi32>
    %132 = tpu.iota {dimensions = array<i32: 1>} : vector<16x128xi32>
    %c7_i32_41 = arith.constant 7 : i32
    %133 = vector.broadcast %c7_i32_41 : i32 to vector<16x128xi32>
    %134 = arith.andi %131, %133 : vector<16x128xi32>
    %c64_i32 = arith.constant 64 : i32
    %135 = vector.broadcast %c64_i32 : i32 to vector<16x128xi32>
    %136 = arith.addi %135, %134 : vector<16x128xi32>
    %137 = arith.cmpi eq, %132, %136 : vector<16x128xi32>
    %cst_42 = arith.constant 1.000000e+00 : f32
    %cst_43 = arith.constant 0.000000e+00 : f32
    %138 = vector.broadcast %cst_42 : f32 to vector<16x128xf32>
    %139 = vector.broadcast %cst_43 : f32 to vector<16x128xf32>
    %140 = arith.select %137, %138, %139 : vector<16x128xi1>, vector<16x128xf32>
    %c0_i32_44 = arith.constant 0 : i32
    %141 = vector.broadcast %c0_i32_44 : i32 to vector<16x128xi32>
    %142 = arith.cmpi eq, %131, %141 : vector<16x128xi32>
    %c0_45 = arith.constant 0 : index
    %143 = memref.load %arg0[%c0_45] : memref<16xi32, #tpu.memory_space<smem>>
    %144 = vector.broadcast %143 : i32 to vector<16x128xi32>
    %145 = arith.cmpi eq, %132, %144 : vector<16x128xi32>
    %146 = arith.andi %142, %145 : vector<16x128xi1>
    %cst_46 = arith.constant 1.000000e+00 : f32
    %147 = vector.broadcast %cst_46 : f32 to vector<16x128xf32>
    %148 = arith.select %146, %147, %140 : vector<16x128xi1>, vector<16x128xf32>
    %c1_i32_47 = arith.constant 1 : i32
    %149 = vector.broadcast %c1_i32_47 : i32 to vector<16x128xi32>
    %150 = arith.cmpi eq, %131, %149 : vector<16x128xi32>
    %c1_48 = arith.constant 1 : index
    %151 = memref.load %arg0[%c1_48] : memref<16xi32, #tpu.memory_space<smem>>
    %152 = vector.broadcast %151 : i32 to vector<16x128xi32>
    %153 = arith.cmpi eq, %132, %152 : vector<16x128xi32>
    %154 = arith.andi %150, %153 : vector<16x128xi1>
    %cst_49 = arith.constant 1.000000e+00 : f32
    %155 = vector.broadcast %cst_49 : f32 to vector<16x128xf32>
    %156 = arith.select %154, %155, %148 : vector<16x128xi1>, vector<16x128xf32>
    %c2_i32_50 = arith.constant 2 : i32
    %157 = vector.broadcast %c2_i32_50 : i32 to vector<16x128xi32>
    %158 = arith.cmpi eq, %131, %157 : vector<16x128xi32>
    %c2_51 = arith.constant 2 : index
    %159 = memref.load %arg0[%c2_51] : memref<16xi32, #tpu.memory_space<smem>>
    %160 = vector.broadcast %159 : i32 to vector<16x128xi32>
    %161 = arith.cmpi eq, %132, %160 : vector<16x128xi32>
    %162 = arith.andi %158, %161 : vector<16x128xi1>
    %cst_52 = arith.constant 1.000000e+00 : f32
    %163 = vector.broadcast %cst_52 : f32 to vector<16x128xf32>
    %164 = arith.select %162, %163, %156 : vector<16x128xi1>, vector<16x128xf32>
    %c3_i32_53 = arith.constant 3 : i32
    %165 = vector.broadcast %c3_i32_53 : i32 to vector<16x128xi32>
    %166 = arith.cmpi eq, %131, %165 : vector<16x128xi32>
    %c3_54 = arith.constant 3 : index
    %167 = memref.load %arg0[%c3_54] : memref<16xi32, #tpu.memory_space<smem>>
    %168 = vector.broadcast %167 : i32 to vector<16x128xi32>
    %169 = arith.cmpi eq, %132, %168 : vector<16x128xi32>
    %170 = arith.andi %166, %169 : vector<16x128xi1>
    %cst_55 = arith.constant 1.000000e+00 : f32
    %171 = vector.broadcast %cst_55 : f32 to vector<16x128xf32>
    %172 = arith.select %170, %171, %164 : vector<16x128xi1>, vector<16x128xf32>
    %c4_i32_56 = arith.constant 4 : i32
    %173 = vector.broadcast %c4_i32_56 : i32 to vector<16x128xi32>
    %174 = arith.cmpi eq, %131, %173 : vector<16x128xi32>
    %c4_57 = arith.constant 4 : index
    %175 = memref.load %arg0[%c4_57] : memref<16xi32, #tpu.memory_space<smem>>
    %176 = vector.broadcast %175 : i32 to vector<16x128xi32>
    %177 = arith.cmpi eq, %132, %176 : vector<16x128xi32>
    %178 = arith.andi %174, %177 : vector<16x128xi1>
    %cst_58 = arith.constant 1.000000e+00 : f32
    %179 = vector.broadcast %cst_58 : f32 to vector<16x128xf32>
    %180 = arith.select %178, %179, %172 : vector<16x128xi1>, vector<16x128xf32>
    %c5_i32_59 = arith.constant 5 : i32
    %181 = vector.broadcast %c5_i32_59 : i32 to vector<16x128xi32>
    %182 = arith.cmpi eq, %131, %181 : vector<16x128xi32>
    %c5_60 = arith.constant 5 : index
    %183 = memref.load %arg0[%c5_60] : memref<16xi32, #tpu.memory_space<smem>>
    %184 = vector.broadcast %183 : i32 to vector<16x128xi32>
    %185 = arith.cmpi eq, %132, %184 : vector<16x128xi32>
    %186 = arith.andi %182, %185 : vector<16x128xi1>
    %cst_61 = arith.constant 1.000000e+00 : f32
    %187 = vector.broadcast %cst_61 : f32 to vector<16x128xf32>
    %188 = arith.select %186, %187, %180 : vector<16x128xi1>, vector<16x128xf32>
    %c6_i32_62 = arith.constant 6 : i32
    %189 = vector.broadcast %c6_i32_62 : i32 to vector<16x128xi32>
    %190 = arith.cmpi eq, %131, %189 : vector<16x128xi32>
    %c6_63 = arith.constant 6 : index
    %191 = memref.load %arg0[%c6_63] : memref<16xi32, #tpu.memory_space<smem>>
    %192 = vector.broadcast %191 : i32 to vector<16x128xi32>
    %193 = arith.cmpi eq, %132, %192 : vector<16x128xi32>
    %194 = arith.andi %190, %193 : vector<16x128xi1>
    %cst_64 = arith.constant 1.000000e+00 : f32
    %195 = vector.broadcast %cst_64 : f32 to vector<16x128xf32>
    %196 = arith.select %194, %195, %188 : vector<16x128xi1>, vector<16x128xf32>
    %c7_i32_65 = arith.constant 7 : i32
    %197 = vector.broadcast %c7_i32_65 : i32 to vector<16x128xi32>
    %198 = arith.cmpi eq, %131, %197 : vector<16x128xi32>
    %c7_66 = arith.constant 7 : index
    %199 = memref.load %arg0[%c7_66] : memref<16xi32, #tpu.memory_space<smem>>
    %200 = vector.broadcast %199 : i32 to vector<16x128xi32>
    %201 = arith.cmpi eq, %132, %200 : vector<16x128xi32>
    %202 = arith.andi %198, %201 : vector<16x128xi1>
    %cst_67 = arith.constant 1.000000e+00 : f32
    %203 = vector.broadcast %cst_67 : f32 to vector<16x128xf32>
    %204 = arith.select %202, %203, %196 : vector<16x128xi1>, vector<16x128xf32>
    %c8_i32 = arith.constant 8 : i32
    %205 = vector.broadcast %c8_i32 : i32 to vector<16x128xi32>
    %206 = arith.cmpi eq, %131, %205 : vector<16x128xi32>
    %c8_68 = arith.constant 8 : index
    %207 = memref.load %arg0[%c8_68] : memref<16xi32, #tpu.memory_space<smem>>
    %208 = vector.broadcast %207 : i32 to vector<16x128xi32>
    %209 = arith.cmpi eq, %132, %208 : vector<16x128xi32>
    %210 = arith.andi %206, %209 : vector<16x128xi1>
    %cst_69 = arith.constant 1.000000e+00 : f32
    %211 = vector.broadcast %cst_69 : f32 to vector<16x128xf32>
    %212 = arith.select %210, %211, %204 : vector<16x128xi1>, vector<16x128xf32>
    %c9_i32 = arith.constant 9 : i32
    %213 = vector.broadcast %c9_i32 : i32 to vector<16x128xi32>
    %214 = arith.cmpi eq, %131, %213 : vector<16x128xi32>
    %c9_70 = arith.constant 9 : index
    %215 = memref.load %arg0[%c9_70] : memref<16xi32, #tpu.memory_space<smem>>
    %216 = vector.broadcast %215 : i32 to vector<16x128xi32>
    %217 = arith.cmpi eq, %132, %216 : vector<16x128xi32>
    %218 = arith.andi %214, %217 : vector<16x128xi1>
    %cst_71 = arith.constant 1.000000e+00 : f32
    %219 = vector.broadcast %cst_71 : f32 to vector<16x128xf32>
    %220 = arith.select %218, %219, %212 : vector<16x128xi1>, vector<16x128xf32>
    %c10_i32 = arith.constant 10 : i32
    %221 = vector.broadcast %c10_i32 : i32 to vector<16x128xi32>
    %222 = arith.cmpi eq, %131, %221 : vector<16x128xi32>
    %c10_72 = arith.constant 10 : index
    %223 = memref.load %arg0[%c10_72] : memref<16xi32, #tpu.memory_space<smem>>
    %224 = vector.broadcast %223 : i32 to vector<16x128xi32>
    %225 = arith.cmpi eq, %132, %224 : vector<16x128xi32>
    %226 = arith.andi %222, %225 : vector<16x128xi1>
    %cst_73 = arith.constant 1.000000e+00 : f32
    %227 = vector.broadcast %cst_73 : f32 to vector<16x128xf32>
    %228 = arith.select %226, %227, %220 : vector<16x128xi1>, vector<16x128xf32>
    %c11_i32 = arith.constant 11 : i32
    %229 = vector.broadcast %c11_i32 : i32 to vector<16x128xi32>
    %230 = arith.cmpi eq, %131, %229 : vector<16x128xi32>
    %c11_74 = arith.constant 11 : index
    %231 = memref.load %arg0[%c11_74] : memref<16xi32, #tpu.memory_space<smem>>
    %232 = vector.broadcast %231 : i32 to vector<16x128xi32>
    %233 = arith.cmpi eq, %132, %232 : vector<16x128xi32>
    %234 = arith.andi %230, %233 : vector<16x128xi1>
    %cst_75 = arith.constant 1.000000e+00 : f32
    %235 = vector.broadcast %cst_75 : f32 to vector<16x128xf32>
    %236 = arith.select %234, %235, %228 : vector<16x128xi1>, vector<16x128xf32>
    %c12_i32 = arith.constant 12 : i32
    %237 = vector.broadcast %c12_i32 : i32 to vector<16x128xi32>
    %238 = arith.cmpi eq, %131, %237 : vector<16x128xi32>
    %c12_76 = arith.constant 12 : index
    %239 = memref.load %arg0[%c12_76] : memref<16xi32, #tpu.memory_space<smem>>
    %240 = vector.broadcast %239 : i32 to vector<16x128xi32>
    %241 = arith.cmpi eq, %132, %240 : vector<16x128xi32>
    %242 = arith.andi %238, %241 : vector<16x128xi1>
    %cst_77 = arith.constant 1.000000e+00 : f32
    %243 = vector.broadcast %cst_77 : f32 to vector<16x128xf32>
    %244 = arith.select %242, %243, %236 : vector<16x128xi1>, vector<16x128xf32>
    %c13_i32 = arith.constant 13 : i32
    %245 = vector.broadcast %c13_i32 : i32 to vector<16x128xi32>
    %246 = arith.cmpi eq, %131, %245 : vector<16x128xi32>
    %c13_78 = arith.constant 13 : index
    %247 = memref.load %arg0[%c13_78] : memref<16xi32, #tpu.memory_space<smem>>
    %248 = vector.broadcast %247 : i32 to vector<16x128xi32>
    %249 = arith.cmpi eq, %132, %248 : vector<16x128xi32>
    %250 = arith.andi %246, %249 : vector<16x128xi1>
    %cst_79 = arith.constant 1.000000e+00 : f32
    %251 = vector.broadcast %cst_79 : f32 to vector<16x128xf32>
    %252 = arith.select %250, %251, %244 : vector<16x128xi1>, vector<16x128xf32>
    %c14_i32 = arith.constant 14 : i32
    %253 = vector.broadcast %c14_i32 : i32 to vector<16x128xi32>
    %254 = arith.cmpi eq, %131, %253 : vector<16x128xi32>
    %c14_80 = arith.constant 14 : index
    %255 = memref.load %arg0[%c14_80] : memref<16xi32, #tpu.memory_space<smem>>
    %256 = vector.broadcast %255 : i32 to vector<16x128xi32>
    %257 = arith.cmpi eq, %132, %256 : vector<16x128xi32>
    %258 = arith.andi %254, %257 : vector<16x128xi1>
    %cst_81 = arith.constant 1.000000e+00 : f32
    %259 = vector.broadcast %cst_81 : f32 to vector<16x128xf32>
    %260 = arith.select %258, %259, %252 : vector<16x128xi1>, vector<16x128xf32>
    %c15_i32 = arith.constant 15 : i32
    %261 = vector.broadcast %c15_i32 : i32 to vector<16x128xi32>
    %262 = arith.cmpi eq, %131, %261 : vector<16x128xi32>
    %c15_82 = arith.constant 15 : index
    %263 = memref.load %arg0[%c15_82] : memref<16xi32, #tpu.memory_space<smem>>
    %264 = vector.broadcast %263 : i32 to vector<16x128xi32>
    %265 = arith.cmpi eq, %132, %264 : vector<16x128xi32>
    %266 = arith.andi %262, %265 : vector<16x128xi1>
    %cst_83 = arith.constant 1.000000e+00 : f32
    %267 = vector.broadcast %cst_83 : f32 to vector<16x128xf32>
    %268 = arith.select %266, %267, %260 : vector<16x128xi1>, vector<16x128xf32>
    %c0_84 = arith.constant 0 : index
    %c0_85 = arith.constant 0 : index
    %269 = vector.load %arg1[%c0_84, %c0_85] : memref<128x32xbf16, #tpu.memory_space<vmem>>, vector<128x32xbf16>
    %270 = arith.truncf %268 : vector<16x128xf32> to vector<16x128xbf16>
    %cst_86 = arith.constant dense<0.000000e+00> : vector<16x32xf32>
    %271 = tpu.matmul %270, %269, %cst_86 {dimension_numbers = #tpu.dot_dimension_numbers<[1], [0], [0], [1], [0, 0, 1, 1], [], []>} : vector<16x128xbf16>, vector<128x32xbf16>, vector<16x32xf32> -> vector<16x32xf32>
    %c0_87 = arith.constant 0 : index
    %c0_88 = arith.constant 0 : index
    %c0_89 = arith.constant 0 : index
    %272 = vector.load %arg2[%c0_87, %c0_88, %c0_89] : memref<2x32x768xbf16, #tpu.memory_space<vmem>>, vector<1x32x768xbf16>
    %273 = vector.shape_cast %272 : vector<1x32x768xbf16> to vector<32x768xbf16>
    %274 = arith.truncf %271 : vector<16x32xf32> to vector<16x32xbf16>
    %cst_90 = arith.constant dense<0.000000e+00> : vector<16x768xf32>
    %275 = tpu.matmul %274, %273, %cst_90 {dimension_numbers = #tpu.dot_dimension_numbers<[1], [0], [0], [1], [0, 0, 1, 1], [], []>} : vector<16x32xbf16>, vector<32x768xbf16>, vector<16x768xf32> -> vector<16x768xf32>
    %c0_91 = arith.constant 0 : index
    %c0_92 = arith.constant 0 : index
    %c0_93 = arith.constant 0 : index
    %276 = vector.load %arg3[%c0_91, %c0_92, %c0_93] : memref<2x1x768xf32, #tpu.memory_space<vmem>>, vector<1x1x768xf32>
    %277 = vector.shape_cast %276 : vector<1x1x768xf32> to vector<1x768xf32>
    %278 = vector.broadcast %277 : vector<1x768xf32> to vector<16x768xf32>
    %279 = arith.addf %275, %278 : vector<16x768xf32>
    %c0_94 = arith.constant 0 : index
    %c0_95 = arith.constant 0 : index
    %c0_96 = arith.constant 0 : index
    %280 = vector.load %arg4[%c0_94, %c0_95, %c0_96] : memref<2x256x32xbf16, #tpu.memory_space<vmem>>, vector<1x256x32xbf16>
    %281 = vector.shape_cast %280 : vector<1x256x32xbf16> to vector<256x32xbf16>
    %cst_97 = arith.constant 0.000000e+00 : f32
    %282 = vector.broadcast %cst_97 : f32 to vector<8x32xf32>
    %283 = vector.extract_strided_slice %279 {offsets = [0, 0], sizes = [8, 128], strides = [1, 1]} : vector<16x768xf32> to vector<8x128xf32>
    %284 = vector.extract_strided_slice %279 {offsets = [0, 256], sizes = [8, 128], strides = [1, 1]} : vector<16x768xf32> to vector<8x128xf32>
    %285 = vector.extract_strided_slice %279 {offsets = [0, 512], sizes = [8, 128], strides = [1, 1]} : vector<16x768xf32> to vector<8x128xf32>
    %286 = arith.truncf %283 : vector<8x128xf32> to vector<8x128xbf16>
    %287 = arith.truncf %284 : vector<8x128xf32> to vector<8x128xbf16>
    %cst_98 = arith.constant dense<0.000000e+00> : vector<8x8xf32>
    %288 = tpu.matmul %286, %287, %cst_98 {dimension_numbers = #tpu.dot_dimension_numbers<[1], [1], [0], [0], [0, 0, 1, 0], [], []>} : vector<8x128xbf16>, vector<8x128xbf16>, vector<8x8xf32> -> vector<8x8xf32>
    %cst_99 = arith.constant 2.500000e-01 : f32
    %289 = vector.broadcast %cst_99 : f32 to vector<8x8xf32>
    %290 = arith.mulf %288, %289 : vector<8x8xf32>
    %291 = vector.broadcast %65 : vector<1x8xf32> to vector<8x8xf32>
    %292 = arith.addf %290, %291 : vector<8x8xf32>
    %cst_100 = arith.constant dense<0xFF800000> : vector<8xf32>
    %293 = vector.multi_reduction <maximumf>, %292, %cst_100 [1] : vector<8x8xf32> to vector<8xf32>
    %294 = vector.shape_cast %293 : vector<8xf32> to vector<8x1xf32>
    %295 = vector.broadcast %294 : vector<8x1xf32> to vector<8x8xf32>
    %296 = arith.subf %292, %295 : vector<8x8xf32>
    %297 = math.exp %296 : vector<8x8xf32>
    %cst_101 = arith.constant dense<0.000000e+00> : vector<8xf32>
    %298 = vector.multi_reduction <add>, %297, %cst_101 [1] : vector<8x8xf32> to vector<8xf32>
    %299 = vector.shape_cast %298 : vector<8xf32> to vector<8x1xf32>
    %300 = tpu.reciprocal %299 {approx = true} : vector<8x1xf32> -> vector<8x1xf32>
    %301 = vector.broadcast %300 : vector<8x1xf32> to vector<8x8xf32>
    %302 = arith.mulf %297, %301 : vector<8x8xf32>
    %303 = arith.truncf %302 : vector<8x8xf32> to vector<8x8xbf16>
    %304 = arith.truncf %285 : vector<8x128xf32> to vector<8x128xbf16>
    %cst_102 = arith.constant dense<0.000000e+00> : vector<8x128xf32>
    %305 = tpu.matmul %303, %304, %cst_102 {dimension_numbers = #tpu.dot_dimension_numbers<[1], [0], [0], [1], [0, 0, 1, 1], [], []>} : vector<8x8xbf16>, vector<8x128xbf16>, vector<8x128xf32> -> vector<8x128xf32>
    %306 = vector.extract_strided_slice %281 {offsets = [0, 0], sizes = [128, 32], strides = [1, 1]} : vector<256x32xbf16> to vector<128x32xbf16>
    %307 = arith.truncf %305 : vector<8x128xf32> to vector<8x128xbf16>
    %cst_103 = arith.constant dense<0.000000e+00> : vector<8x32xf32>
    %308 = tpu.matmul %307, %306, %cst_103 {dimension_numbers = #tpu.dot_dimension_numbers<[1], [0], [0], [1], [0, 0, 1, 1], [], []>} : vector<8x128xbf16>, vector<128x32xbf16>, vector<8x32xf32> -> vector<8x32xf32>
    %309 = arith.addf %282, %308 : vector<8x32xf32>
    %310 = vector.extract_strided_slice %279 {offsets = [0, 128], sizes = [8, 128], strides = [1, 1]} : vector<16x768xf32> to vector<8x128xf32>
    %311 = vector.extract_strided_slice %279 {offsets = [0, 384], sizes = [8, 128], strides = [1, 1]} : vector<16x768xf32> to vector<8x128xf32>
    %312 = vector.extract_strided_slice %279 {offsets = [0, 640], sizes = [8, 128], strides = [1, 1]} : vector<16x768xf32> to vector<8x128xf32>
    %313 = arith.truncf %310 : vector<8x128xf32> to vector<8x128xbf16>
    %314 = arith.truncf %311 : vector<8x128xf32> to vector<8x128xbf16>
    %cst_104 = arith.constant dense<0.000000e+00> : vector<8x8xf32>
    %315 = tpu.matmul %313, %314, %cst_104 {dimension_numbers = #tpu.dot_dimension_numbers<[1], [1], [0], [0], [0, 0, 1, 0], [], []>} : vector<8x128xbf16>, vector<8x128xbf16>, vector<8x8xf32> -> vector<8x8xf32>
    %cst_105 = arith.constant 2.500000e-01 : f32
    %316 = vector.broadcast %cst_105 : f32 to vector<8x8xf32>
    %317 = arith.mulf %315, %316 : vector<8x8xf32>
    %318 = vector.broadcast %65 : vector<1x8xf32> to vector<8x8xf32>
    %319 = arith.addf %317, %318 : vector<8x8xf32>
    %cst_106 = arith.constant dense<0xFF800000> : vector<8xf32>
    %320 = vector.multi_reduction <maximumf>, %319, %cst_106 [1] : vector<8x8xf32> to vector<8xf32>
    %321 = vector.shape_cast %320 : vector<8xf32> to vector<8x1xf32>
    %322 = vector.broadcast %321 : vector<8x1xf32> to vector<8x8xf32>
    %323 = arith.subf %319, %322 : vector<8x8xf32>
    %324 = math.exp %323 : vector<8x8xf32>
    %cst_107 = arith.constant dense<0.000000e+00> : vector<8xf32>
    %325 = vector.multi_reduction <add>, %324, %cst_107 [1] : vector<8x8xf32> to vector<8xf32>
    %326 = vector.shape_cast %325 : vector<8xf32> to vector<8x1xf32>
    %327 = tpu.reciprocal %326 {approx = true} : vector<8x1xf32> -> vector<8x1xf32>
    %328 = vector.broadcast %327 : vector<8x1xf32> to vector<8x8xf32>
    %329 = arith.mulf %324, %328 : vector<8x8xf32>
    %330 = arith.truncf %329 : vector<8x8xf32> to vector<8x8xbf16>
    %331 = arith.truncf %312 : vector<8x128xf32> to vector<8x128xbf16>
    %cst_108 = arith.constant dense<0.000000e+00> : vector<8x128xf32>
    %332 = tpu.matmul %330, %331, %cst_108 {dimension_numbers = #tpu.dot_dimension_numbers<[1], [0], [0], [1], [0, 0, 1, 1], [], []>} : vector<8x8xbf16>, vector<8x128xbf16>, vector<8x128xf32> -> vector<8x128xf32>
    %333 = vector.extract_strided_slice %281 {offsets = [128, 0], sizes = [128, 32], strides = [1, 1]} : vector<256x32xbf16> to vector<128x32xbf16>
    %334 = arith.truncf %332 : vector<8x128xf32> to vector<8x128xbf16>
    %cst_109 = arith.constant dense<0.000000e+00> : vector<8x32xf32>
    %335 = tpu.matmul %334, %333, %cst_109 {dimension_numbers = #tpu.dot_dimension_numbers<[1], [0], [0], [1], [0, 0, 1, 1], [], []>} : vector<8x128xbf16>, vector<128x32xbf16>, vector<8x32xf32> -> vector<8x32xf32>
    %336 = arith.addf %309, %335 : vector<8x32xf32>
    %cst_110 = arith.constant 0.000000e+00 : f32
    %337 = vector.broadcast %cst_110 : f32 to vector<8x32xf32>
    %338 = vector.extract_strided_slice %279 {offsets = [8, 0], sizes = [8, 128], strides = [1, 1]} : vector<16x768xf32> to vector<8x128xf32>
    %339 = vector.extract_strided_slice %279 {offsets = [8, 256], sizes = [8, 128], strides = [1, 1]} : vector<16x768xf32> to vector<8x128xf32>
    %340 = vector.extract_strided_slice %279 {offsets = [8, 512], sizes = [8, 128], strides = [1, 1]} : vector<16x768xf32> to vector<8x128xf32>
    %341 = arith.truncf %338 : vector<8x128xf32> to vector<8x128xbf16>
    %342 = arith.truncf %339 : vector<8x128xf32> to vector<8x128xbf16>
    %cst_111 = arith.constant dense<0.000000e+00> : vector<8x8xf32>
    %343 = tpu.matmul %341, %342, %cst_111 {dimension_numbers = #tpu.dot_dimension_numbers<[1], [1], [0], [0], [0, 0, 1, 0], [], []>} : vector<8x128xbf16>, vector<8x128xbf16>, vector<8x8xf32> -> vector<8x8xf32>
    %cst_112 = arith.constant 2.500000e-01 : f32
    %344 = vector.broadcast %cst_112 : f32 to vector<8x8xf32>
    %345 = arith.mulf %343, %344 : vector<8x8xf32>
    %346 = vector.broadcast %130 : vector<1x8xf32> to vector<8x8xf32>
    %347 = arith.addf %345, %346 : vector<8x8xf32>
    %cst_113 = arith.constant dense<0xFF800000> : vector<8xf32>
    %348 = vector.multi_reduction <maximumf>, %347, %cst_113 [1] : vector<8x8xf32> to vector<8xf32>
    %349 = vector.shape_cast %348 : vector<8xf32> to vector<8x1xf32>
    %350 = vector.broadcast %349 : vector<8x1xf32> to vector<8x8xf32>
    %351 = arith.subf %347, %350 : vector<8x8xf32>
    %352 = math.exp %351 : vector<8x8xf32>
    %cst_114 = arith.constant dense<0.000000e+00> : vector<8xf32>
    %353 = vector.multi_reduction <add>, %352, %cst_114 [1] : vector<8x8xf32> to vector<8xf32>
    %354 = vector.shape_cast %353 : vector<8xf32> to vector<8x1xf32>
    %355 = tpu.reciprocal %354 {approx = true} : vector<8x1xf32> -> vector<8x1xf32>
    %356 = vector.broadcast %355 : vector<8x1xf32> to vector<8x8xf32>
    %357 = arith.mulf %352, %356 : vector<8x8xf32>
    %358 = arith.truncf %357 : vector<8x8xf32> to vector<8x8xbf16>
    %359 = arith.truncf %340 : vector<8x128xf32> to vector<8x128xbf16>
    %cst_115 = arith.constant dense<0.000000e+00> : vector<8x128xf32>
    %360 = tpu.matmul %358, %359, %cst_115 {dimension_numbers = #tpu.dot_dimension_numbers<[1], [0], [0], [1], [0, 0, 1, 1], [], []>} : vector<8x8xbf16>, vector<8x128xbf16>, vector<8x128xf32> -> vector<8x128xf32>
    %361 = vector.extract_strided_slice %281 {offsets = [0, 0], sizes = [128, 32], strides = [1, 1]} : vector<256x32xbf16> to vector<128x32xbf16>
    %362 = arith.truncf %360 : vector<8x128xf32> to vector<8x128xbf16>
    %cst_116 = arith.constant dense<0.000000e+00> : vector<8x32xf32>
    %363 = tpu.matmul %362, %361, %cst_116 {dimension_numbers = #tpu.dot_dimension_numbers<[1], [0], [0], [1], [0, 0, 1, 1], [], []>} : vector<8x128xbf16>, vector<128x32xbf16>, vector<8x32xf32> -> vector<8x32xf32>
    %364 = arith.addf %337, %363 : vector<8x32xf32>
    %365 = vector.extract_strided_slice %279 {offsets = [8, 128], sizes = [8, 128], strides = [1, 1]} : vector<16x768xf32> to vector<8x128xf32>
    %366 = vector.extract_strided_slice %279 {offsets = [8, 384], sizes = [8, 128], strides = [1, 1]} : vector<16x768xf32> to vector<8x128xf32>
    %367 = vector.extract_strided_slice %279 {offsets = [8, 640], sizes = [8, 128], strides = [1, 1]} : vector<16x768xf32> to vector<8x128xf32>
    %368 = arith.truncf %365 : vector<8x128xf32> to vector<8x128xbf16>
    %369 = arith.truncf %366 : vector<8x128xf32> to vector<8x128xbf16>
    %cst_117 = arith.constant dense<0.000000e+00> : vector<8x8xf32>
    %370 = tpu.matmul %368, %369, %cst_117 {dimension_numbers = #tpu.dot_dimension_numbers<[1], [1], [0], [0], [0, 0, 1, 0], [], []>} : vector<8x128xbf16>, vector<8x128xbf16>, vector<8x8xf32> -> vector<8x8xf32>
    %cst_118 = arith.constant 2.500000e-01 : f32
    %371 = vector.broadcast %cst_118 : f32 to vector<8x8xf32>
    %372 = arith.mulf %370, %371 : vector<8x8xf32>
    %373 = vector.broadcast %130 : vector<1x8xf32> to vector<8x8xf32>
    %374 = arith.addf %372, %373 : vector<8x8xf32>
    %cst_119 = arith.constant dense<0xFF800000> : vector<8xf32>
    %375 = vector.multi_reduction <maximumf>, %374, %cst_119 [1] : vector<8x8xf32> to vector<8xf32>
    %376 = vector.shape_cast %375 : vector<8xf32> to vector<8x1xf32>
    %377 = vector.broadcast %376 : vector<8x1xf32> to vector<8x8xf32>
    %378 = arith.subf %374, %377 : vector<8x8xf32>
    %379 = math.exp %378 : vector<8x8xf32>
    %cst_120 = arith.constant dense<0.000000e+00> : vector<8xf32>
    %380 = vector.multi_reduction <add>, %379, %cst_120 [1] : vector<8x8xf32> to vector<8xf32>
    %381 = vector.shape_cast %380 : vector<8xf32> to vector<8x1xf32>
    %382 = tpu.reciprocal %381 {approx = true} : vector<8x1xf32> -> vector<8x1xf32>
    %383 = vector.broadcast %382 : vector<8x1xf32> to vector<8x8xf32>
    %384 = arith.mulf %379, %383 : vector<8x8xf32>
    %385 = arith.truncf %384 : vector<8x8xf32> to vector<8x8xbf16>
    %386 = arith.truncf %367 : vector<8x128xf32> to vector<8x128xbf16>
    %cst_121 = arith.constant dense<0.000000e+00> : vector<8x128xf32>
    %387 = tpu.matmul %385, %386, %cst_121 {dimension_numbers = #tpu.dot_dimension_numbers<[1], [0], [0], [1], [0, 0, 1, 1], [], []>} : vector<8x8xbf16>, vector<8x128xbf16>, vector<8x128xf32> -> vector<8x128xf32>
    %388 = vector.extract_strided_slice %281 {offsets = [128, 0], sizes = [128, 32], strides = [1, 1]} : vector<256x32xbf16> to vector<128x32xbf16>
    %389 = arith.truncf %387 : vector<8x128xf32> to vector<8x128xbf16>
    %cst_122 = arith.constant dense<0.000000e+00> : vector<8x32xf32>
    %390 = tpu.matmul %389, %388, %cst_122 {dimension_numbers = #tpu.dot_dimension_numbers<[1], [0], [0], [1], [0, 0, 1, 1], [], []>} : vector<8x128xbf16>, vector<128x32xbf16>, vector<8x32xf32> -> vector<8x32xf32>
    %391 = arith.addf %364, %390 : vector<8x32xf32>
    %392 = tpu.concatenate %336, %391 in 0 : vector<8x32xf32>, vector<8x32xf32> -> vector<16x32xf32>
    %c0_123 = arith.constant 0 : index
    %c0_124 = arith.constant 0 : index
    %c0_125 = arith.constant 0 : index
    %393 = vector.load %arg7[%c0_123, %c0_124, %c0_125] : memref<2x8x128xf32, #tpu.memory_space<vmem>>, vector<1x1x32xf32>
    %394 = vector.shape_cast %393 : vector<1x1x32xf32> to vector<1x32xf32>
    %395 = vector.broadcast %394 : vector<1x32xf32> to vector<16x32xf32>
    %396 = arith.addf %392, %395 : vector<16x32xf32>
    %397 = arith.addf %271, %396 : vector<16x32xf32>
    %c0_126 = arith.constant 0 : index
    %c1_127 = arith.constant 1 : index
    %c0_128 = arith.constant 0 : index
    %398 = vector.load %arg7[%c0_126, %c1_127, %c0_128] : memref<2x8x128xf32, #tpu.memory_space<vmem>>, vector<1x1x32xf32>
    %399 = vector.shape_cast %398 : vector<1x1x32xf32> to vector<1x32xf32>
    %c0_129 = arith.constant 0 : index
    %c2_130 = arith.constant 2 : index
    %c0_131 = arith.constant 0 : index
    %400 = vector.load %arg7[%c0_129, %c2_130, %c0_131] : memref<2x8x128xf32, #tpu.memory_space<vmem>>, vector<1x1x32xf32>
    %401 = vector.shape_cast %400 : vector<1x1x32xf32> to vector<1x32xf32>
    %cst_132 = arith.constant dense<0.000000e+00> : vector<16xf32>
    %402 = vector.multi_reduction <add>, %397, %cst_132 [1] : vector<16x32xf32> to vector<16xf32>
    %403 = vector.shape_cast %402 : vector<16xf32> to vector<16x1xf32>
    %cst_133 = arith.constant 3.125000e-02 : f32
    %404 = vector.broadcast %cst_133 : f32 to vector<16x1xf32>
    %405 = arith.mulf %403, %404 : vector<16x1xf32>
    %406 = arith.mulf %397, %397 : vector<16x32xf32>
    %cst_134 = arith.constant dense<0.000000e+00> : vector<16xf32>
    %407 = vector.multi_reduction <add>, %406, %cst_134 [1] : vector<16x32xf32> to vector<16xf32>
    %408 = vector.shape_cast %407 : vector<16xf32> to vector<16x1xf32>
    %cst_135 = arith.constant 3.125000e-02 : f32
    %409 = vector.broadcast %cst_135 : f32 to vector<16x1xf32>
    %410 = arith.mulf %408, %409 : vector<16x1xf32>
    %411 = arith.mulf %405, %405 : vector<16x1xf32>
    %412 = arith.subf %410, %411 : vector<16x1xf32>
    %413 = vector.broadcast %405 : vector<16x1xf32> to vector<16x32xf32>
    %414 = arith.subf %397, %413 : vector<16x32xf32>
    %cst_136 = arith.constant 9.99999974E-6 : f32
    %415 = vector.broadcast %cst_136 : f32 to vector<16x1xf32>
    %416 = arith.addf %412, %415 : vector<16x1xf32>
    %417 = math.rsqrt %416 : vector<16x1xf32>
    %418 = vector.broadcast %417 : vector<16x1xf32> to vector<16x32xf32>
    %419 = arith.mulf %414, %418 : vector<16x32xf32>
    %420 = vector.broadcast %399 : vector<1x32xf32> to vector<16x32xf32>
    %421 = arith.mulf %419, %420 : vector<16x32xf32>
    %422 = vector.broadcast %401 : vector<1x32xf32> to vector<16x32xf32>
    %423 = arith.addf %421, %422 : vector<16x32xf32>
    %c0_137 = arith.constant 0 : index
    %c0_138 = arith.constant 0 : index
    %c0_139 = arith.constant 0 : index
    %424 = vector.load %arg5[%c0_137, %c0_138, %c0_139] : memref<2x32x64xbf16, #tpu.memory_space<vmem>>, vector<1x32x64xbf16>
    %425 = vector.shape_cast %424 : vector<1x32x64xbf16> to vector<32x64xbf16>
    %426 = arith.truncf %423 : vector<16x32xf32> to vector<16x32xbf16>
    %cst_140 = arith.constant dense<0.000000e+00> : vector<16x64xf32>
    %427 = tpu.matmul %426, %425, %cst_140 {dimension_numbers = #tpu.dot_dimension_numbers<[1], [0], [0], [1], [0, 0, 1, 1], [], []>} : vector<16x32xbf16>, vector<32x64xbf16>, vector<16x64xf32> -> vector<16x64xf32>
    %c0_141 = arith.constant 0 : index
    %c3_142 = arith.constant 3 : index
    %c0_143 = arith.constant 0 : index
    %428 = vector.load %arg7[%c0_141, %c3_142, %c0_143] : memref<2x8x128xf32, #tpu.memory_space<vmem>>, vector<1x1x64xf32>
    %429 = vector.shape_cast %428 : vector<1x1x64xf32> to vector<1x64xf32>
    %430 = vector.broadcast %429 : vector<1x64xf32> to vector<16x64xf32>
    %431 = arith.addf %427, %430 : vector<16x64xf32>
    %cst_144 = arith.constant 5.000000e-01 : f32
    %432 = vector.broadcast %cst_144 : f32 to vector<16x64xf32>
    %433 = arith.mulf %432, %431 : vector<16x64xf32>
    %cst_145 = arith.constant 4.471500e-02 : f32
    %434 = vector.broadcast %cst_145 : f32 to vector<16x64xf32>
    %435 = arith.mulf %434, %431 : vector<16x64xf32>
    %436 = arith.mulf %435, %431 : vector<16x64xf32>
    %437 = arith.mulf %436, %431 : vector<16x64xf32>
    %438 = arith.addf %431, %437 : vector<16x64xf32>
    %cst_146 = arith.constant 0.797884583 : f32
    %439 = vector.broadcast %cst_146 : f32 to vector<16x64xf32>
    %440 = arith.mulf %439, %438 : vector<16x64xf32>
    %441 = math.tanh %440 : vector<16x64xf32>
    %cst_147 = arith.constant 1.000000e+00 : f32
    %442 = vector.broadcast %cst_147 : f32 to vector<16x64xf32>
    %443 = arith.addf %442, %441 : vector<16x64xf32>
    %444 = arith.mulf %433, %443 : vector<16x64xf32>
    %c0_148 = arith.constant 0 : index
    %c0_149 = arith.constant 0 : index
    %c0_150 = arith.constant 0 : index
    %445 = vector.load %arg6[%c0_148, %c0_149, %c0_150] : memref<2x64x32xbf16, #tpu.memory_space<vmem>>, vector<1x64x32xbf16>
    %446 = vector.shape_cast %445 : vector<1x64x32xbf16> to vector<64x32xbf16>
    %447 = arith.truncf %444 : vector<16x64xf32> to vector<16x64xbf16>
    %cst_151 = arith.constant dense<0.000000e+00> : vector<16x32xf32>
    %448 = tpu.matmul %447, %446, %cst_151 {dimension_numbers = #tpu.dot_dimension_numbers<[1], [0], [0], [1], [0, 0, 1, 1], [], []>} : vector<16x64xbf16>, vector<64x32xbf16>, vector<16x32xf32> -> vector<16x32xf32>
    %c0_152 = arith.constant 0 : index
    %c4_153 = arith.constant 4 : index
    %c0_154 = arith.constant 0 : index
    %449 = vector.load %arg7[%c0_152, %c4_153, %c0_154] : memref<2x8x128xf32, #tpu.memory_space<vmem>>, vector<1x1x32xf32>
    %450 = vector.shape_cast %449 : vector<1x1x32xf32> to vector<1x32xf32>
    %451 = vector.broadcast %450 : vector<1x32xf32> to vector<16x32xf32>
    %452 = arith.addf %448, %451 : vector<16x32xf32>
    %453 = arith.addf %423, %452 : vector<16x32xf32>
    %c0_155 = arith.constant 0 : index
    %c5_156 = arith.constant 5 : index
    %c0_157 = arith.constant 0 : index
    %454 = vector.load %arg7[%c0_155, %c5_156, %c0_157] : memref<2x8x128xf32, #tpu.memory_space<vmem>>, vector<1x1x32xf32>
    %455 = vector.shape_cast %454 : vector<1x1x32xf32> to vector<1x32xf32>
    %c0_158 = arith.constant 0 : index
    %c6_159 = arith.constant 6 : index
    %c0_160 = arith.constant 0 : index
    %456 = vector.load %arg7[%c0_158, %c6_159, %c0_160] : memref<2x8x128xf32, #tpu.memory_space<vmem>>, vector<1x1x32xf32>
    %457 = vector.shape_cast %456 : vector<1x1x32xf32> to vector<1x32xf32>
    %cst_161 = arith.constant dense<0.000000e+00> : vector<16xf32>
    %458 = vector.multi_reduction <add>, %453, %cst_161 [1] : vector<16x32xf32> to vector<16xf32>
    %459 = vector.shape_cast %458 : vector<16xf32> to vector<16x1xf32>
    %cst_162 = arith.constant 3.125000e-02 : f32
    %460 = vector.broadcast %cst_162 : f32 to vector<16x1xf32>
    %461 = arith.mulf %459, %460 : vector<16x1xf32>
    %462 = arith.mulf %453, %453 : vector<16x32xf32>
    %cst_163 = arith.constant dense<0.000000e+00> : vector<16xf32>
    %463 = vector.multi_reduction <add>, %462, %cst_163 [1] : vector<16x32xf32> to vector<16xf32>
    %464 = vector.shape_cast %463 : vector<16xf32> to vector<16x1xf32>
    %cst_164 = arith.constant 3.125000e-02 : f32
    %465 = vector.broadcast %cst_164 : f32 to vector<16x1xf32>
    %466 = arith.mulf %464, %465 : vector<16x1xf32>
    %467 = arith.mulf %461, %461 : vector<16x1xf32>
    %468 = arith.subf %466, %467 : vector<16x1xf32>
    %469 = vector.broadcast %461 : vector<16x1xf32> to vector<16x32xf32>
    %470 = arith.subf %453, %469 : vector<16x32xf32>
    %cst_165 = arith.constant 9.99999974E-6 : f32
    %471 = vector.broadcast %cst_165 : f32 to vector<16x1xf32>
    %472 = arith.addf %468, %471 : vector<16x1xf32>
    %473 = math.rsqrt %472 : vector<16x1xf32>
    %474 = vector.broadcast %473 : vector<16x1xf32> to vector<16x32xf32>
    %475 = arith.mulf %470, %474 : vector<16x32xf32>
    %476 = vector.broadcast %455 : vector<1x32xf32> to vector<16x32xf32>
    %477 = arith.mulf %475, %476 : vector<16x32xf32>
    %478 = vector.broadcast %457 : vector<1x32xf32> to vector<16x32xf32>
    %479 = arith.addf %477, %478 : vector<16x32xf32>
    %c1_166 = arith.constant 1 : index
    %c0_167 = arith.constant 0 : index
    %c0_168 = arith.constant 0 : index
    %480 = vector.load %arg2[%c1_166, %c0_167, %c0_168] : memref<2x32x768xbf16, #tpu.memory_space<vmem>>, vector<1x32x768xbf16>
    %481 = vector.shape_cast %480 : vector<1x32x768xbf16> to vector<32x768xbf16>
    %482 = arith.truncf %479 : vector<16x32xf32> to vector<16x32xbf16>
    %cst_169 = arith.constant dense<0.000000e+00> : vector<16x768xf32>
    %483 = tpu.matmul %482, %481, %cst_169 {dimension_numbers = #tpu.dot_dimension_numbers<[1], [0], [0], [1], [0, 0, 1, 1], [], []>} : vector<16x32xbf16>, vector<32x768xbf16>, vector<16x768xf32> -> vector<16x768xf32>
    %c1_170 = arith.constant 1 : index
    %c0_171 = arith.constant 0 : index
    %c0_172 = arith.constant 0 : index
    %484 = vector.load %arg3[%c1_170, %c0_171, %c0_172] : memref<2x1x768xf32, #tpu.memory_space<vmem>>, vector<1x1x768xf32>
    %485 = vector.shape_cast %484 : vector<1x1x768xf32> to vector<1x768xf32>
    %486 = vector.broadcast %485 : vector<1x768xf32> to vector<16x768xf32>
    %487 = arith.addf %483, %486 : vector<16x768xf32>
    %c1_173 = arith.constant 1 : index
    %c0_174 = arith.constant 0 : index
    %c0_175 = arith.constant 0 : index
    %488 = vector.load %arg4[%c1_173, %c0_174, %c0_175] : memref<2x256x32xbf16, #tpu.memory_space<vmem>>, vector<1x256x32xbf16>
    %489 = vector.shape_cast %488 : vector<1x256x32xbf16> to vector<256x32xbf16>
    %cst_176 = arith.constant 0.000000e+00 : f32
    %490 = vector.broadcast %cst_176 : f32 to vector<8x32xf32>
    %491 = vector.extract_strided_slice %487 {offsets = [0, 0], sizes = [8, 128], strides = [1, 1]} : vector<16x768xf32> to vector<8x128xf32>
    %492 = vector.extract_strided_slice %487 {offsets = [0, 256], sizes = [8, 128], strides = [1, 1]} : vector<16x768xf32> to vector<8x128xf32>
    %493 = vector.extract_strided_slice %487 {offsets = [0, 512], sizes = [8, 128], strides = [1, 1]} : vector<16x768xf32> to vector<8x128xf32>
    %494 = arith.truncf %491 : vector<8x128xf32> to vector<8x128xbf16>
    %495 = arith.truncf %492 : vector<8x128xf32> to vector<8x128xbf16>
    %cst_177 = arith.constant dense<0.000000e+00> : vector<8x8xf32>
    %496 = tpu.matmul %494, %495, %cst_177 {dimension_numbers = #tpu.dot_dimension_numbers<[1], [1], [0], [0], [0, 0, 1, 0], [], []>} : vector<8x128xbf16>, vector<8x128xbf16>, vector<8x8xf32> -> vector<8x8xf32>
    %cst_178 = arith.constant 2.500000e-01 : f32
    %497 = vector.broadcast %cst_178 : f32 to vector<8x8xf32>
    %498 = arith.mulf %496, %497 : vector<8x8xf32>
    %499 = vector.broadcast %65 : vector<1x8xf32> to vector<8x8xf32>
    %500 = arith.addf %498, %499 : vector<8x8xf32>
    %cst_179 = arith.constant dense<0xFF800000> : vector<8xf32>
    %501 = vector.multi_reduction <maximumf>, %500, %cst_179 [1] : vector<8x8xf32> to vector<8xf32>
    %502 = vector.shape_cast %501 : vector<8xf32> to vector<8x1xf32>
    %503 = vector.broadcast %502 : vector<8x1xf32> to vector<8x8xf32>
    %504 = arith.subf %500, %503 : vector<8x8xf32>
    %505 = math.exp %504 : vector<8x8xf32>
    %cst_180 = arith.constant dense<0.000000e+00> : vector<8xf32>
    %506 = vector.multi_reduction <add>, %505, %cst_180 [1] : vector<8x8xf32> to vector<8xf32>
    %507 = vector.shape_cast %506 : vector<8xf32> to vector<8x1xf32>
    %508 = tpu.reciprocal %507 {approx = true} : vector<8x1xf32> -> vector<8x1xf32>
    %509 = vector.broadcast %508 : vector<8x1xf32> to vector<8x8xf32>
    %510 = arith.mulf %505, %509 : vector<8x8xf32>
    %511 = arith.truncf %510 : vector<8x8xf32> to vector<8x8xbf16>
    %512 = arith.truncf %493 : vector<8x128xf32> to vector<8x128xbf16>
    %cst_181 = arith.constant dense<0.000000e+00> : vector<8x128xf32>
    %513 = tpu.matmul %511, %512, %cst_181 {dimension_numbers = #tpu.dot_dimension_numbers<[1], [0], [0], [1], [0, 0, 1, 1], [], []>} : vector<8x8xbf16>, vector<8x128xbf16>, vector<8x128xf32> -> vector<8x128xf32>
    %514 = vector.extract_strided_slice %489 {offsets = [0, 0], sizes = [128, 32], strides = [1, 1]} : vector<256x32xbf16> to vector<128x32xbf16>
    %515 = arith.truncf %513 : vector<8x128xf32> to vector<8x128xbf16>
    %cst_182 = arith.constant dense<0.000000e+00> : vector<8x32xf32>
    %516 = tpu.matmul %515, %514, %cst_182 {dimension_numbers = #tpu.dot_dimension_numbers<[1], [0], [0], [1], [0, 0, 1, 1], [], []>} : vector<8x128xbf16>, vector<128x32xbf16>, vector<8x32xf32> -> vector<8x32xf32>
    %517 = arith.addf %490, %516 : vector<8x32xf32>
    %518 = vector.extract_strided_slice %487 {offsets = [0, 128], sizes = [8, 128], strides = [1, 1]} : vector<16x768xf32> to vector<8x128xf32>
    %519 = vector.extract_strided_slice %487 {offsets = [0, 384], sizes = [8, 128], strides = [1, 1]} : vector<16x768xf32> to vector<8x128xf32>
    %520 = vector.extract_strided_slice %487 {offsets = [0, 640], sizes = [8, 128], strides = [1, 1]} : vector<16x768xf32> to vector<8x128xf32>
    %521 = arith.truncf %518 : vector<8x128xf32> to vector<8x128xbf16>
    %522 = arith.truncf %519 : vector<8x128xf32> to vector<8x128xbf16>
    %cst_183 = arith.constant dense<0.000000e+00> : vector<8x8xf32>
    %523 = tpu.matmul %521, %522, %cst_183 {dimension_numbers = #tpu.dot_dimension_numbers<[1], [1], [0], [0], [0, 0, 1, 0], [], []>} : vector<8x128xbf16>, vector<8x128xbf16>, vector<8x8xf32> -> vector<8x8xf32>
    %cst_184 = arith.constant 2.500000e-01 : f32
    %524 = vector.broadcast %cst_184 : f32 to vector<8x8xf32>
    %525 = arith.mulf %523, %524 : vector<8x8xf32>
    %526 = vector.broadcast %65 : vector<1x8xf32> to vector<8x8xf32>
    %527 = arith.addf %525, %526 : vector<8x8xf32>
    %cst_185 = arith.constant dense<0xFF800000> : vector<8xf32>
    %528 = vector.multi_reduction <maximumf>, %527, %cst_185 [1] : vector<8x8xf32> to vector<8xf32>
    %529 = vector.shape_cast %528 : vector<8xf32> to vector<8x1xf32>
    %530 = vector.broadcast %529 : vector<8x1xf32> to vector<8x8xf32>
    %531 = arith.subf %527, %530 : vector<8x8xf32>
    %532 = math.exp %531 : vector<8x8xf32>
    %cst_186 = arith.constant dense<0.000000e+00> : vector<8xf32>
    %533 = vector.multi_reduction <add>, %532, %cst_186 [1] : vector<8x8xf32> to vector<8xf32>
    %534 = vector.shape_cast %533 : vector<8xf32> to vector<8x1xf32>
    %535 = tpu.reciprocal %534 {approx = true} : vector<8x1xf32> -> vector<8x1xf32>
    %536 = vector.broadcast %535 : vector<8x1xf32> to vector<8x8xf32>
    %537 = arith.mulf %532, %536 : vector<8x8xf32>
    %538 = arith.truncf %537 : vector<8x8xf32> to vector<8x8xbf16>
    %539 = arith.truncf %520 : vector<8x128xf32> to vector<8x128xbf16>
    %cst_187 = arith.constant dense<0.000000e+00> : vector<8x128xf32>
    %540 = tpu.matmul %538, %539, %cst_187 {dimension_numbers = #tpu.dot_dimension_numbers<[1], [0], [0], [1], [0, 0, 1, 1], [], []>} : vector<8x8xbf16>, vector<8x128xbf16>, vector<8x128xf32> -> vector<8x128xf32>
    %541 = vector.extract_strided_slice %489 {offsets = [128, 0], sizes = [128, 32], strides = [1, 1]} : vector<256x32xbf16> to vector<128x32xbf16>
    %542 = arith.truncf %540 : vector<8x128xf32> to vector<8x128xbf16>
    %cst_188 = arith.constant dense<0.000000e+00> : vector<8x32xf32>
    %543 = tpu.matmul %542, %541, %cst_188 {dimension_numbers = #tpu.dot_dimension_numbers<[1], [0], [0], [1], [0, 0, 1, 1], [], []>} : vector<8x128xbf16>, vector<128x32xbf16>, vector<8x32xf32> -> vector<8x32xf32>
    %544 = arith.addf %517, %543 : vector<8x32xf32>
    %cst_189 = arith.constant 0.000000e+00 : f32
    %545 = vector.broadcast %cst_189 : f32 to vector<8x32xf32>
    %546 = vector.extract_strided_slice %487 {offsets = [8, 0], sizes = [8, 128], strides = [1, 1]} : vector<16x768xf32> to vector<8x128xf32>
    %547 = vector.extract_strided_slice %487 {offsets = [8, 256], sizes = [8, 128], strides = [1, 1]} : vector<16x768xf32> to vector<8x128xf32>
    %548 = vector.extract_strided_slice %487 {offsets = [8, 512], sizes = [8, 128], strides = [1, 1]} : vector<16x768xf32> to vector<8x128xf32>
    %549 = arith.truncf %546 : vector<8x128xf32> to vector<8x128xbf16>
    %550 = arith.truncf %547 : vector<8x128xf32> to vector<8x128xbf16>
    %cst_190 = arith.constant dense<0.000000e+00> : vector<8x8xf32>
    %551 = tpu.matmul %549, %550, %cst_190 {dimension_numbers = #tpu.dot_dimension_numbers<[1], [1], [0], [0], [0, 0, 1, 0], [], []>} : vector<8x128xbf16>, vector<8x128xbf16>, vector<8x8xf32> -> vector<8x8xf32>
    %cst_191 = arith.constant 2.500000e-01 : f32
    %552 = vector.broadcast %cst_191 : f32 to vector<8x8xf32>
    %553 = arith.mulf %551, %552 : vector<8x8xf32>
    %554 = vector.broadcast %130 : vector<1x8xf32> to vector<8x8xf32>
    %555 = arith.addf %553, %554 : vector<8x8xf32>
    %cst_192 = arith.constant dense<0xFF800000> : vector<8xf32>
    %556 = vector.multi_reduction <maximumf>, %555, %cst_192 [1] : vector<8x8xf32> to vector<8xf32>
    %557 = vector.shape_cast %556 : vector<8xf32> to vector<8x1xf32>
    %558 = vector.broadcast %557 : vector<8x1xf32> to vector<8x8xf32>
    %559 = arith.subf %555, %558 : vector<8x8xf32>
    %560 = math.exp %559 : vector<8x8xf32>
    %cst_193 = arith.constant dense<0.000000e+00> : vector<8xf32>
    %561 = vector.multi_reduction <add>, %560, %cst_193 [1] : vector<8x8xf32> to vector<8xf32>
    %562 = vector.shape_cast %561 : vector<8xf32> to vector<8x1xf32>
    %563 = tpu.reciprocal %562 {approx = true} : vector<8x1xf32> -> vector<8x1xf32>
    %564 = vector.broadcast %563 : vector<8x1xf32> to vector<8x8xf32>
    %565 = arith.mulf %560, %564 : vector<8x8xf32>
    %566 = arith.truncf %565 : vector<8x8xf32> to vector<8x8xbf16>
    %567 = arith.truncf %548 : vector<8x128xf32> to vector<8x128xbf16>
    %cst_194 = arith.constant dense<0.000000e+00> : vector<8x128xf32>
    %568 = tpu.matmul %566, %567, %cst_194 {dimension_numbers = #tpu.dot_dimension_numbers<[1], [0], [0], [1], [0, 0, 1, 1], [], []>} : vector<8x8xbf16>, vector<8x128xbf16>, vector<8x128xf32> -> vector<8x128xf32>
    %569 = vector.extract_strided_slice %489 {offsets = [0, 0], sizes = [128, 32], strides = [1, 1]} : vector<256x32xbf16> to vector<128x32xbf16>
    %570 = arith.truncf %568 : vector<8x128xf32> to vector<8x128xbf16>
    %cst_195 = arith.constant dense<0.000000e+00> : vector<8x32xf32>
    %571 = tpu.matmul %570, %569, %cst_195 {dimension_numbers = #tpu.dot_dimension_numbers<[1], [0], [0], [1], [0, 0, 1, 1], [], []>} : vector<8x128xbf16>, vector<128x32xbf16>, vector<8x32xf32> -> vector<8x32xf32>
    %572 = arith.addf %545, %571 : vector<8x32xf32>
    %573 = vector.extract_strided_slice %487 {offsets = [8, 128], sizes = [8, 128], strides = [1, 1]} : vector<16x768xf32> to vector<8x128xf32>
    %574 = vector.extract_strided_slice %487 {offsets = [8, 384], sizes = [8, 128], strides = [1, 1]} : vector<16x768xf32> to vector<8x128xf32>
    %575 = vector.extract_strided_slice %487 {offsets = [8, 640], sizes = [8, 128], strides = [1, 1]} : vector<16x768xf32> to vector<8x128xf32>
    %576 = arith.truncf %573 : vector<8x128xf32> to vector<8x128xbf16>
    %577 = arith.truncf %574 : vector<8x128xf32> to vector<8x128xbf16>
    %cst_196 = arith.constant dense<0.000000e+00> : vector<8x8xf32>
    %578 = tpu.matmul %576, %577, %cst_196 {dimension_numbers = #tpu.dot_dimension_numbers<[1], [1], [0], [0], [0, 0, 1, 0], [], []>} : vector<8x128xbf16>, vector<8x128xbf16>, vector<8x8xf32> -> vector<8x8xf32>
    %cst_197 = arith.constant 2.500000e-01 : f32
    %579 = vector.broadcast %cst_197 : f32 to vector<8x8xf32>
    %580 = arith.mulf %578, %579 : vector<8x8xf32>
    %581 = vector.broadcast %130 : vector<1x8xf32> to vector<8x8xf32>
    %582 = arith.addf %580, %581 : vector<8x8xf32>
    %cst_198 = arith.constant dense<0xFF800000> : vector<8xf32>
    %583 = vector.multi_reduction <maximumf>, %582, %cst_198 [1] : vector<8x8xf32> to vector<8xf32>
    %584 = vector.shape_cast %583 : vector<8xf32> to vector<8x1xf32>
    %585 = vector.broadcast %584 : vector<8x1xf32> to vector<8x8xf32>
    %586 = arith.subf %582, %585 : vector<8x8xf32>
    %587 = math.exp %586 : vector<8x8xf32>
    %cst_199 = arith.constant dense<0.000000e+00> : vector<8xf32>
    %588 = vector.multi_reduction <add>, %587, %cst_199 [1] : vector<8x8xf32> to vector<8xf32>
    %589 = vector.shape_cast %588 : vector<8xf32> to vector<8x1xf32>
    %590 = tpu.reciprocal %589 {approx = true} : vector<8x1xf32> -> vector<8x1xf32>
    %591 = vector.broadcast %590 : vector<8x1xf32> to vector<8x8xf32>
    %592 = arith.mulf %587, %591 : vector<8x8xf32>
    %593 = arith.truncf %592 : vector<8x8xf32> to vector<8x8xbf16>
    %594 = arith.truncf %575 : vector<8x128xf32> to vector<8x128xbf16>
    %cst_200 = arith.constant dense<0.000000e+00> : vector<8x128xf32>
    %595 = tpu.matmul %593, %594, %cst_200 {dimension_numbers = #tpu.dot_dimension_numbers<[1], [0], [0], [1], [0, 0, 1, 1], [], []>} : vector<8x8xbf16>, vector<8x128xbf16>, vector<8x128xf32> -> vector<8x128xf32>
    %596 = vector.extract_strided_slice %489 {offsets = [128, 0], sizes = [128, 32], strides = [1, 1]} : vector<256x32xbf16> to vector<128x32xbf16>
    %597 = arith.truncf %595 : vector<8x128xf32> to vector<8x128xbf16>
    %cst_201 = arith.constant dense<0.000000e+00> : vector<8x32xf32>
    %598 = tpu.matmul %597, %596, %cst_201 {dimension_numbers = #tpu.dot_dimension_numbers<[1], [0], [0], [1], [0, 0, 1, 1], [], []>} : vector<8x128xbf16>, vector<128x32xbf16>, vector<8x32xf32> -> vector<8x32xf32>
    %599 = arith.addf %572, %598 : vector<8x32xf32>
    %600 = tpu.concatenate %544, %599 in 0 : vector<8x32xf32>, vector<8x32xf32> -> vector<16x32xf32>
    %c1_202 = arith.constant 1 : index
    %c0_203 = arith.constant 0 : index
    %c0_204 = arith.constant 0 : index
    %601 = vector.load %arg7[%c1_202, %c0_203, %c0_204] : memref<2x8x128xf32, #tpu.memory_space<vmem>>, vector<1x1x32xf32>
    %602 = vector.shape_cast %601 : vector<1x1x32xf32> to vector<1x32xf32>
    %603 = vector.broadcast %602 : vector<1x32xf32> to vector<16x32xf32>
    %604 = arith.addf %600, %603 : vector<16x32xf32>
    %605 = arith.addf %479, %604 : vector<16x32xf32>
    %c1_205 = arith.constant 1 : index
    %c1_206 = arith.constant 1 : index
    %c0_207 = arith.constant 0 : index
    %606 = vector.load %arg7[%c1_205, %c1_206, %c0_207] : memref<2x8x128xf32, #tpu.memory_space<vmem>>, vector<1x1x32xf32>
    %607 = vector.shape_cast %606 : vector<1x1x32xf32> to vector<1x32xf32>
    %c1_208 = arith.constant 1 : index
    %c2_209 = arith.constant 2 : index
    %c0_210 = arith.constant 0 : index
    %608 = vector.load %arg7[%c1_208, %c2_209, %c0_210] : memref<2x8x128xf32, #tpu.memory_space<vmem>>, vector<1x1x32xf32>
    %609 = vector.shape_cast %608 : vector<1x1x32xf32> to vector<1x32xf32>
    %cst_211 = arith.constant dense<0.000000e+00> : vector<16xf32>
    %610 = vector.multi_reduction <add>, %605, %cst_211 [1] : vector<16x32xf32> to vector<16xf32>
    %611 = vector.shape_cast %610 : vector<16xf32> to vector<16x1xf32>
    %cst_212 = arith.constant 3.125000e-02 : f32
    %612 = vector.broadcast %cst_212 : f32 to vector<16x1xf32>
    %613 = arith.mulf %611, %612 : vector<16x1xf32>
    %614 = arith.mulf %605, %605 : vector<16x32xf32>
    %cst_213 = arith.constant dense<0.000000e+00> : vector<16xf32>
    %615 = vector.multi_reduction <add>, %614, %cst_213 [1] : vector<16x32xf32> to vector<16xf32>
    %616 = vector.shape_cast %615 : vector<16xf32> to vector<16x1xf32>
    %cst_214 = arith.constant 3.125000e-02 : f32
    %617 = vector.broadcast %cst_214 : f32 to vector<16x1xf32>
    %618 = arith.mulf %616, %617 : vector<16x1xf32>
    %619 = arith.mulf %613, %613 : vector<16x1xf32>
    %620 = arith.subf %618, %619 : vector<16x1xf32>
    %621 = vector.broadcast %613 : vector<16x1xf32> to vector<16x32xf32>
    %622 = arith.subf %605, %621 : vector<16x32xf32>
    %cst_215 = arith.constant 9.99999974E-6 : f32
    %623 = vector.broadcast %cst_215 : f32 to vector<16x1xf32>
    %624 = arith.addf %620, %623 : vector<16x1xf32>
    %625 = math.rsqrt %624 : vector<16x1xf32>
    %626 = vector.broadcast %625 : vector<16x1xf32> to vector<16x32xf32>
    %627 = arith.mulf %622, %626 : vector<16x32xf32>
    %628 = vector.broadcast %607 : vector<1x32xf32> to vector<16x32xf32>
    %629 = arith.mulf %627, %628 : vector<16x32xf32>
    %630 = vector.broadcast %609 : vector<1x32xf32> to vector<16x32xf32>
    %631 = arith.addf %629, %630 : vector<16x32xf32>
    %c1_216 = arith.constant 1 : index
    %c0_217 = arith.constant 0 : index
    %c0_218 = arith.constant 0 : index
    %632 = vector.load %arg5[%c1_216, %c0_217, %c0_218] : memref<2x32x64xbf16, #tpu.memory_space<vmem>>, vector<1x32x64xbf16>
    %633 = vector.shape_cast %632 : vector<1x32x64xbf16> to vector<32x64xbf16>
    %634 = arith.truncf %631 : vector<16x32xf32> to vector<16x32xbf16>
    %cst_219 = arith.constant dense<0.000000e+00> : vector<16x64xf32>
    %635 = tpu.matmul %634, %633, %cst_219 {dimension_numbers = #tpu.dot_dimension_numbers<[1], [0], [0], [1], [0, 0, 1, 1], [], []>} : vector<16x32xbf16>, vector<32x64xbf16>, vector<16x64xf32> -> vector<16x64xf32>
    %c1_220 = arith.constant 1 : index
    %c3_221 = arith.constant 3 : index
    %c0_222 = arith.constant 0 : index
    %636 = vector.load %arg7[%c1_220, %c3_221, %c0_222] : memref<2x8x128xf32, #tpu.memory_space<vmem>>, vector<1x1x64xf32>
    %637 = vector.shape_cast %636 : vector<1x1x64xf32> to vector<1x64xf32>
    %638 = vector.broadcast %637 : vector<1x64xf32> to vector<16x64xf32>
    %639 = arith.addf %635, %638 : vector<16x64xf32>
    %cst_223 = arith.constant 5.000000e-01 : f32
    %640 = vector.broadcast %cst_223 : f32 to vector<16x64xf32>
    %641 = arith.mulf %640, %639 : vector<16x64xf32>
    %cst_224 = arith.constant 4.471500e-02 : f32
    %642 = vector.broadcast %cst_224 : f32 to vector<16x64xf32>
    %643 = arith.mulf %642, %639 : vector<16x64xf32>
    %644 = arith.mulf %643, %639 : vector<16x64xf32>
    %645 = arith.mulf %644, %639 : vector<16x64xf32>
    %646 = arith.addf %639, %645 : vector<16x64xf32>
    %cst_225 = arith.constant 0.797884583 : f32
    %647 = vector.broadcast %cst_225 : f32 to vector<16x64xf32>
    %648 = arith.mulf %647, %646 : vector<16x64xf32>
    %649 = math.tanh %648 : vector<16x64xf32>
    %cst_226 = arith.constant 1.000000e+00 : f32
    %650 = vector.broadcast %cst_226 : f32 to vector<16x64xf32>
    %651 = arith.addf %650, %649 : vector<16x64xf32>
    %652 = arith.mulf %641, %651 : vector<16x64xf32>
    %c1_227 = arith.constant 1 : index
    %c0_228 = arith.constant 0 : index
    %c0_229 = arith.constant 0 : index
    %653 = vector.load %arg6[%c1_227, %c0_228, %c0_229] : memref<2x64x32xbf16, #tpu.memory_space<vmem>>, vector<1x64x32xbf16>
    %654 = vector.shape_cast %653 : vector<1x64x32xbf16> to vector<64x32xbf16>
    %655 = arith.truncf %652 : vector<16x64xf32> to vector<16x64xbf16>
    %cst_230 = arith.constant dense<0.000000e+00> : vector<16x32xf32>
    %656 = tpu.matmul %655, %654, %cst_230 {dimension_numbers = #tpu.dot_dimension_numbers<[1], [0], [0], [1], [0, 0, 1, 1], [], []>} : vector<16x64xbf16>, vector<64x32xbf16>, vector<16x32xf32> -> vector<16x32xf32>
    %c1_231 = arith.constant 1 : index
    %c4_232 = arith.constant 4 : index
    %c0_233 = arith.constant 0 : index
    %657 = vector.load %arg7[%c1_231, %c4_232, %c0_233] : memref<2x8x128xf32, #tpu.memory_space<vmem>>, vector<1x1x32xf32>
    %658 = vector.shape_cast %657 : vector<1x1x32xf32> to vector<1x32xf32>
    %659 = vector.broadcast %658 : vector<1x32xf32> to vector<16x32xf32>
    %660 = arith.addf %656, %659 : vector<16x32xf32>
    %661 = arith.addf %631, %660 : vector<16x32xf32>
    %c1_234 = arith.constant 1 : index
    %c5_235 = arith.constant 5 : index
    %c0_236 = arith.constant 0 : index
    %662 = vector.load %arg7[%c1_234, %c5_235, %c0_236] : memref<2x8x128xf32, #tpu.memory_space<vmem>>, vector<1x1x32xf32>
    %663 = vector.shape_cast %662 : vector<1x1x32xf32> to vector<1x32xf32>
    %c1_237 = arith.constant 1 : index
    %c6_238 = arith.constant 6 : index
    %c0_239 = arith.constant 0 : index
    %664 = vector.load %arg7[%c1_237, %c6_238, %c0_239] : memref<2x8x128xf32, #tpu.memory_space<vmem>>, vector<1x1x32xf32>
    %665 = vector.shape_cast %664 : vector<1x1x32xf32> to vector<1x32xf32>
    %cst_240 = arith.constant dense<0.000000e+00> : vector<16xf32>
    %666 = vector.multi_reduction <add>, %661, %cst_240 [1] : vector<16x32xf32> to vector<16xf32>
    %667 = vector.shape_cast %666 : vector<16xf32> to vector<16x1xf32>
    %cst_241 = arith.constant 3.125000e-02 : f32
    %668 = vector.broadcast %cst_241 : f32 to vector<16x1xf32>
    %669 = arith.mulf %667, %668 : vector<16x1xf32>
    %670 = arith.mulf %661, %661 : vector<16x32xf32>
    %cst_242 = arith.constant dense<0.000000e+00> : vector<16xf32>
    %671 = vector.multi_reduction <add>, %670, %cst_242 [1] : vector<16x32xf32> to vector<16xf32>
    %672 = vector.shape_cast %671 : vector<16xf32> to vector<16x1xf32>
    %cst_243 = arith.constant 3.125000e-02 : f32
    %673 = vector.broadcast %cst_243 : f32 to vector<16x1xf32>
    %674 = arith.mulf %672, %673 : vector<16x1xf32>
    %675 = arith.mulf %669, %669 : vector<16x1xf32>
    %676 = arith.subf %674, %675 : vector<16x1xf32>
    %677 = vector.broadcast %669 : vector<16x1xf32> to vector<16x32xf32>
    %678 = arith.subf %661, %677 : vector<16x32xf32>
    %cst_244 = arith.constant 9.99999974E-6 : f32
    %679 = vector.broadcast %cst_244 : f32 to vector<16x1xf32>
    %680 = arith.addf %676, %679 : vector<16x1xf32>
    %681 = math.rsqrt %680 : vector<16x1xf32>
    %682 = vector.broadcast %681 : vector<16x1xf32> to vector<16x32xf32>
    %683 = arith.mulf %678, %682 : vector<16x32xf32>
    %684 = vector.broadcast %663 : vector<1x32xf32> to vector<16x32xf32>
    %685 = arith.mulf %683, %684 : vector<16x32xf32>
    %686 = vector.broadcast %665 : vector<1x32xf32> to vector<16x32xf32>
    %687 = arith.addf %685, %686 : vector<16x32xf32>
    %688 = tpu.iota {dimensions = array<i32: 0>} : vector<2x16xi32>
    %689 = tpu.iota {dimensions = array<i32: 1>} : vector<2x16xi32>
    %c8_i32_245 = arith.constant 8 : i32
    %690 = vector.broadcast %c8_i32_245 : i32 to vector<2x16xi32>
    %691 = arith.muli %688, %690 : vector<2x16xi32>
    %692 = arith.cmpi eq, %689, %691 : vector<2x16xi32>
    %cst_246 = arith.constant 1.000000e+00 : f32
    %cst_247 = arith.constant 0.000000e+00 : f32
    %693 = vector.broadcast %cst_246 : f32 to vector<2x16xf32>
    %694 = vector.broadcast %cst_247 : f32 to vector<2x16xf32>
    %695 = arith.select %692, %693, %694 : vector<2x16xi1>, vector<2x16xf32>
    %696 = arith.truncf %695 : vector<2x16xf32> to vector<2x16xbf16>
    %697 = arith.truncf %687 : vector<16x32xf32> to vector<16x32xbf16>
    %cst_248 = arith.constant dense<0.000000e+00> : vector<2x32xf32>
    %698 = tpu.matmul %696, %697, %cst_248 {dimension_numbers = #tpu.dot_dimension_numbers<[1], [0], [0], [1], [0, 0, 1, 1], [], []>} : vector<2x16xbf16>, vector<16x32xbf16>, vector<2x32xf32> -> vector<2x32xf32>
    %c0_249 = arith.constant 0 : index
    %c0_250 = arith.constant 0 : index
    %699 = vector.load %arg8[%c0_249, %c0_250] : memref<32x256xbf16, #tpu.memory_space<vmem>>, vector<32x32xbf16>
    %c0_251 = arith.constant 0 : index
    %c128 = arith.constant 128 : index
    %700 = vector.load %arg8[%c0_251, %c128] : memref<32x256xbf16, #tpu.memory_space<vmem>>, vector<32x128xbf16>
    %c0_252 = arith.constant 0 : index
    %c0_253 = arith.constant 0 : index
    %701 = vector.load %arg9[%c0_252, %c0_253] : memref<8x128xf32, #tpu.memory_space<vmem>>, vector<1x32xf32>
    %c1_254 = arith.constant 1 : index
    %c0_255 = arith.constant 0 : index
    %702 = vector.load %arg9[%c1_254, %c0_255] : memref<8x128xf32, #tpu.memory_space<vmem>>, vector<1x128xf32>
    %703 = arith.truncf %698 : vector<2x32xf32> to vector<2x32xbf16>
    %cst_256 = arith.constant dense<0.000000e+00> : vector<2x32xf32>
    %704 = tpu.matmul %703, %699, %cst_256 {dimension_numbers = #tpu.dot_dimension_numbers<[1], [0], [0], [1], [0, 0, 1, 1], [], []>} : vector<2x32xbf16>, vector<32x32xbf16>, vector<2x32xf32> -> vector<2x32xf32>
    %705 = vector.broadcast %701 : vector<1x32xf32> to vector<2x32xf32>
    %706 = arith.addf %704, %705 : vector<2x32xf32>
    %707 = math.tanh %706 : vector<2x32xf32>
    %708 = arith.truncf %707 : vector<2x32xf32> to vector<2x32xbf16>
    %cst_257 = arith.constant dense<0.000000e+00> : vector<2x128xf32>
    %709 = tpu.matmul %708, %700, %cst_257 {dimension_numbers = #tpu.dot_dimension_numbers<[1], [0], [0], [1], [0, 0, 1, 1], [], []>} : vector<2x32xbf16>, vector<32x128xbf16>, vector<2x128xf32> -> vector<2x128xf32>
    %710 = vector.broadcast %702 : vector<1x128xf32> to vector<2x128xf32>
    %711 = arith.addf %709, %710 : vector<2x128xf32>
    %c0_258 = arith.constant 0 : index
    %c0_259 = arith.constant 0 : index
    %712 = vector.load %arg10[%c0_258, %c0_259] : memref<2x128xf32, #tpu.memory_space<vmem>>, vector<2x128xf32>
    tpu.vector_store %arg10[%c0_258, %c0_259], %711 {strides = array<i32>} : memref<2x128xf32, #tpu.memory_space<vmem>>, vector<2x128xf32>,
    return
  }
}

</mosaic_0001>

<llo_original>
// kernel: tpu_custom_call.1
$region0: #{tpu_custom_call.1}
  #allocation0 [shape = 'u32[]', space=smem, size = 0x4, offset = 0x4, fixed_abs, tag = 'smem constant byte address 0x4 - core index']
  #allocation1 [shape = 'u32[144,128]{1,0:T(1,128)}', space=vmem, size = 0x12000, scoped, tag = 'internal scratch']
  %s0 = inlined_call_operand.vmem [shape: s32[16], index: 0, kind: input, shape index: {}]
  %s1 = inlined_call_operand.vmem [shape: bf16[128,32], index: 1, kind: input, shape index: {}]
  %s2 = inlined_call_operand.vmem [shape: bf16[2,32,768], index: 2, kind: input, shape index: {}]
  %s3 = inlined_call_operand.vmem [shape: f32[2,1,768], index: 3, kind: input, shape index: {}]
  %s4 = inlined_call_operand.vmem [shape: bf16[2,256,32], index: 4, kind: input, shape index: {}]
  %s5 = inlined_call_operand.vmem [shape: bf16[2,32,64], index: 5, kind: input, shape index: {}]
  %s6 = inlined_call_operand.vmem [shape: bf16[2,64,32], index: 6, kind: input, shape index: {}]
  %s7 = inlined_call_operand.vmem [shape: f32[2,8,128], index: 7, kind: input, shape index: {}]
  %s8 = inlined_call_operand.vmem [shape: bf16[32,256], index: 8, kind: input, shape index: {}]
  %s9 = inlined_call_operand.vmem [shape: f32[8,128], index: 9, kind: input, shape index: {}]
  %s10 = inlined_call_operand.hbm [shape: f32[2,128], index: 10, kind: output, shape index: {}]
  %s11 = sld [smem:[#allocation0]]
  $region54: #{tpu_custom_call.1} parent=0
    _
  %s13 = ssub.s32 1, %s11
  %s14 = scalar_select 0, %s13, %s11
  $region1: #{tpu_custom_call.1} parent=0
    #allocation2 [shape = 'u8[512]{0}', space=smem, size = 0x200, scoped, tag = 'input window, operand 0, single buffered']
    #allocation3 [shape = 's32[1]{0}', space=sflag, size = 0x4, scoped, tag = 'scoped memory for tpu_custom_call.1']
    #allocation4 [shape = 's32[1]{0}', space=sflag, size = 0x4, scoped, tag = 'scoped memory for tpu_custom_call.1']
    #allocation5 [shape = 'u8[1024]{0}', space=vmem, size = 0x400, scoped, tag = 'output window, operand 0, single buffered']
    %15 = vsyncpa [#allocation4], 0
    %16 = vsyncpa [#allocation3], 0
    // Predicated region
    $region2: #{tpu_custom_call.1} parent=1 // pred_check
      _
    $region3: #{tpu_custom_call.1} parent=1 // pred_check_branch
      %18 = sbr.rel (0) target = $region5
    $region4: #{tpu_custom_call.1} parent=1 // pred_region
      %s20 = ssub.s32 16, 16
      %21 = vsyncadd [#allocation4], %s20
      %s23 = sshll.u32 %s0, 4
      %s24 = int_to_ptr.vmem [resolvable:$true] %s23
      %26 = dma.vmem_to_smem %s24, 16, [#allocation2], [#allocation4]
    $region5: #{tpu_custom_call.1} parent=1 // pred_fallthru
      _
    // Predicated region
    $region6: #{tpu_custom_call.1} parent=1 // pred_check
      _
    $region7: #{tpu_custom_call.1} parent=1 // pred_check_branch
      %28 = sbr.rel (0) target = $region9
    $region8: #{tpu_custom_call.1} parent=1 // pred_region
      _
    $region9: #{tpu_custom_call.1} parent=1 // pred_fallthru
      _
    // Predicated region
    $region10: #{tpu_custom_call.1} parent=1 // pred_check
      _
    $region11: #{tpu_custom_call.1} parent=1 // pred_check_branch
      %30 = sbr.rel (0) target = $region13
    $region12: #{tpu_custom_call.1} parent=1 // pred_region
      _
    $region13: #{tpu_custom_call.1} parent=1 // pred_fallthru
      _
    // Predicated region
    $region14: #{tpu_custom_call.1} parent=1 // pred_check
      _
    $region15: #{tpu_custom_call.1} parent=1 // pred_check_branch
      %32 = sbr.rel (0) target = $region17
    $region16: #{tpu_custom_call.1} parent=1 // pred_region
      _
    $region17: #{tpu_custom_call.1} parent=1 // pred_fallthru
      _
    // Predicated region
    $region18: #{tpu_custom_call.1} parent=1 // pred_check
      _
    $region19: #{tpu_custom_call.1} parent=1 // pred_check_branch
      %34 = sbr.rel (0) target = $region21
    $region20: #{tpu_custom_call.1} parent=1 // pred_region
      _
    $region21: #{tpu_custom_call.1} parent=1 // pred_fallthru
      _
    // Predicated region
    $region22: #{tpu_custom_call.1} parent=1 // pred_check
      _
    $region23: #{tpu_custom_call.1} parent=1 // pred_check_branch
      %36 = sbr.rel (0) target = $region25
    $region24: #{tpu_custom_call.1} parent=1 // pred_region
      _
    $region25: #{tpu_custom_call.1} parent=1 // pred_fallthru
      _
    // Predicated region
    $region26: #{tpu_custom_call.1} parent=1 // pred_check
      _
    $region27: #{tpu_custom_call.1} parent=1 // pred_check_branch
      %38 = sbr.rel (0) target = $region29
    $region28: #{tpu_custom_call.1} parent=1 // pred_region
      _
    $region29: #{tpu_custom_call.1} parent=1 // pred_fallthru
      _
    // Predicated region
    $region30: #{tpu_custom_call.1} parent=1 // pred_check
      _
    $region31: #{tpu_custom_call.1} parent=1 // pred_check_branch
      %40 = sbr.rel (0) target = $region33
    $region32: #{tpu_custom_call.1} parent=1 // pred_region
      _
    $region33: #{tpu_custom_call.1} parent=1 // pred_fallthru
      _
    // Predicated region
    $region34: #{tpu_custom_call.1} parent=1 // pred_check
      _
    $region35: #{tpu_custom_call.1} parent=1 // pred_check_branch
      %42 = sbr.rel (0) target = $region37
    $region36: #{tpu_custom_call.1} parent=1 // pred_region
      _
    $region37: #{tpu_custom_call.1} parent=1 // pred_fallthru
      _
    // Predicated region
    $region38: #{tpu_custom_call.1} parent=1 // pred_check
      _
    $region39: #{tpu_custom_call.1} parent=1 // pred_check_branch
      %44 = sbr.rel (0) target = $region41
    $region40: #{tpu_custom_call.1} parent=1 // pred_region
      _
    $region41: #{tpu_custom_call.1} parent=1 // pred_fallthru
      _
    // Predicated region
    $region42: #{tpu_custom_call.1} parent=1 // pred_check
      _
    $region43: #{tpu_custom_call.1} parent=1 // pred_check_branch
      %46 = sbr.rel (0) target = $region45
    $region44: #{tpu_custom_call.1} parent=1 // pred_region
      %47 = dma.done [#allocation4], 16
    $region45: #{tpu_custom_call.1} parent=1 // pred_fallthru
      _
    %48 = sfence
    %v50 = vlaneseq
    %v51 = vand.u32 %v50, 127
    %s52 = sld [smem:[#allocation2]]
    %p53 = scmp.eq.s32.totalorder %s52, 1
    %vm54 = vcmp.eq.s32.totalorder %v51, 0
    %s55 = scalar_select %p53, 1, 0
    %v56 = vstv %s55
    %vm57 = vcmp.eq.s32.totalorder %v56, 1
    %vm58 = vmand %vm54, %vm57
    %v59 = vsel %vm58, -1e+09, 0.0
    %s60 = sld [smem:[#allocation2 + $0x1]]
    %p61 = scmp.eq.s32.totalorder %s60, 1
    %vm62 = vcmp.eq.s32.totalorder %v51, 1
    %s63 = scalar_select %p61, 1, 0
    %v64 = vstv %s63
    %vm65 = vcmp.eq.s32.totalorder %v64, 1
    %vm66 = vmand %vm62, %vm65
    %v67 = vsel %vm66, -1e+09, %v59
    %s68 = sld [smem:[#allocation2 + $0x2]]
    %p69 = scmp.eq.s32.totalorder %s68, 1
    %vm70 = vcmp.eq.s32.totalorder %v51, 2
    %s71 = scalar_select %p69, 1, 0
    %v72 = vstv %s71
    %vm73 = vcmp.eq.s32.totalorder %v72, 1
    %vm74 = vmand %vm70, %vm73
    %v75 = vsel %vm74, -1e+09, %v67
    %s76 = sld [smem:[#allocation2 + $0x3]]
    %p77 = scmp.eq.s32.totalorder %s76, 1
    %vm78 = vcmp.eq.s32.totalorder %v51, 3
    %s79 = scalar_select %p77, 1, 0
    %v80 = vstv %s79
    %vm81 = vcmp.eq.s32.totalorder %v80, 1
    %vm82 = vmand %vm78, %vm81
    %v83 = vsel %vm82, -1e+09, %v75
    %s84 = sld [smem:[#allocation2 + $0x4]]
    %p85 = scmp.eq.s32.totalorder %s84, 1
    %vm86 = vcmp.eq.s32.totalorder %v51, 4
    %s87 = scalar_select %p85, 1, 0
    %v88 = vstv %s87
    %vm89 = vcmp.eq.s32.totalorder %v88, 1
    %vm90 = vmand %vm86, %vm89
    %v91 = vsel %vm90, -1e+09, %v83
    %s92 = sld [smem:[#allocation2 + $0x5]]
    %p93 = scmp.eq.s32.totalorder %s92, 1
    %vm94 = vcmp.eq.s32.totalorder %v51, 5
    %s95 = scalar_select %p93, 1, 0
    %v96 = vstv %s95
    %vm97 = vcmp.eq.s32.totalorder %v96, 1
    %vm98 = vmand %vm94, %vm97
    %v99 = vsel %vm98, -1e+09, %v91
    %s100 = sld [smem:[#allocation2 + $0x6]]
    %p101 = scmp.eq.s32.totalorder %s100, 1
    %vm102 = vcmp.eq.s32.totalorder %v51, 6
    %s103 = scalar_select %p101, 1, 0
    %v104 = vstv %s103
    %vm105 = vcmp.eq.s32.totalorder %v104, 1
    %vm106 = vmand %vm102, %vm105
    %v107 = vsel %vm106, -1e+09, %v99
    %s108 = sld [smem:[#allocation2 + $0x7]]
    %p109 = scmp.eq.s32.totalorder %s108, 1
    %vm110 = vcmp.eq.s32.totalorder %v51, 7
    %s111 = scalar_select %p109, 1, 0
    %v112 = vstv %s111
    %vm113 = vcmp.eq.s32.totalorder %v112, 1
    %vm114 = vmand %vm110, %vm113
    %v115 = vsel %vm114, -1e+09, %v107
    %s116 = sld [smem:[#allocation2 + $0x8]]
    %p117 = scmp.eq.s32.totalorder %s116, 1
    %s118 = scalar_select %p117, 1, 0
    %v119 = vstv %s118
    %vm120 = vcmp.eq.s32.totalorder %v119, 1
    %vm121 = vmand %vm54, %vm120
    %v122 = vsel %vm121, -1e+09, 0.0
    %s123 = sld [smem:[#allocation2 + $0x9]]
    %p124 = scmp.eq.s32.totalorder %s123, 1
    %s125 = scalar_select %p124, 1, 0
    %v126 = vstv %s125
    %vm127 = vcmp.eq.s32.totalorder %v126, 1
    %vm128 = vmand %vm62, %vm127
    %v129 = vsel %vm128, -1e+09, %v122
    %s130 = sld [smem:[#allocation2 + $0xa]]
    %p131 = scmp.eq.s32.totalorder %s130, 1
    %s132 = scalar_select %p131, 1, 0
    %v133 = vstv %s132
    %vm134 = vcmp.eq.s32.totalorder %v133, 1
    %vm135 = vmand %vm70, %vm134
    %v136 = vsel %vm135, -1e+09, %v129
    %s137 = sld [smem:[#allocation2 + $0xb]]
    %p138 = scmp.eq.s32.totalorder %s137, 1
    %s139 = scalar_select %p138, 1, 0
    %v140 = vstv %s139
    %vm141 = vcmp.eq.s32.totalorder %v140, 1
    %vm142 = vmand %vm78, %vm141
    %v143 = vsel %vm142, -1e+09, %v136
    %s144 = sld [smem:[#allocation2 + $0xc]]
    %p145 = scmp.eq.s32.totalorder %s144, 1
    %s146 = scalar_select %p145, 1, 0
    %v147 = vstv %s146
    %vm148 = vcmp.eq.s32.totalorder %v147, 1
    %vm149 = vmand %vm86, %vm148
    %v150 = vsel %vm149, -1e+09, %v143
    %s151 = sld [smem:[#allocation2 + $0xd]]
    %p152 = scmp.eq.s32.totalorder %s151, 1
    %s153 = scalar_select %p152, 1, 0
    %v154 = vstv %s153
    %vm155 = vcmp.eq.s32.totalorder %v154, 1
    %vm156 = vmand %vm94, %vm155
    %v157 = vsel %vm156, -1e+09, %v150
    %s158 = sld [smem:[#allocation2 + $0xe]]
    %p159 = scmp.eq.s32.totalorder %s158, 1
    %s160 = scalar_select %p159, 1, 0
    %v161 = vstv %s160
    %vm162 = vcmp.eq.s32.totalorder %v161, 1
    %vm163 = vmand %vm102, %vm162
    %v164 = vsel %vm163, -1e+09, %v157
    %s165 = sld [smem:[#allocation2 + $0xf]]
    %p166 = scmp.eq.s32.totalorder %s165, 1
    %s167 = scalar_select %p166, 1, 0
    %v168 = vstv %s167
    %vm169 = vcmp.eq.s32.totalorder %v168, 1
    %vm170 = vmand %vm110, %vm169
    %v171 = vsel %vm170, -1e+09, %v164
    %v172 = vlaneseq
    %v173 = vshrl.u32 %v172, 7
    %v174 = vadd.s32 %v173, 8
    %v175 = vand.u32 %v173, 7
    %v176 = vand.u32 %v174, 7
    %v177 = vadd.s32 %v175, 64
    %v178 = vadd.s32 %v176, 64
    %vm179 = vcmp.eq.s32.totalorder %v51, %v177
    %vm180 = vcmp.eq.s32.totalorder %v51, %v178
    %v181 = vsel %vm179, 1.0, 0.0
    %v182 = vsel %vm180, 1.0, 0.0
    %vm183 = vcmp.eq.s32.totalorder %v173, 0
    %vm184 = vcmp.eq.s32.totalorder %v174, 0
    %v185 = vstv %s52
    %vm186 = vcmp.eq.s32.totalorder %v51, %v185
    %vm187 = vmand %vm183, %vm186
    %vm188 = vmand %vm184, %vm186
    %v189 = vsel %vm187, 1.0, %v181
    %v190 = vsel %vm188, 1.0, %v182
    %vm191 = vcmp.eq.s32.totalorder %v173, 1
    %vm192 = vcmp.eq.s32.totalorder %v174, 1
    %v193 = vstv %s60
    %vm194 = vcmp.eq.s32.totalorder %v51, %v193
    %vm195 = vmand %vm191, %vm194
    %vm196 = vmand %vm192, %vm194
    %v197 = vsel %vm195, 1.0, %v189
    %v198 = vsel %vm196, 1.0, %v190
    %vm199 = vcmp.eq.s32.totalorder %v173, 2
    %vm200 = vcmp.eq.s32.totalorder %v174, 2
    %v201 = vstv %s68
    %vm202 = vcmp.eq.s32.totalorder %v51, %v201
    %vm203 = vmand %vm199, %vm202
    %vm204 = vmand %vm200, %vm202
    %v205 = vsel %vm203, 1.0, %v197
    %v206 = vsel %vm204, 1.0, %v198
    %vm207 = vcmp.eq.s32.totalorder %v173, 3
    %vm208 = vcmp.eq.s32.totalorder %v174, 3
    %v209 = vstv %s76
    %vm210 = vcmp.eq.s32.totalorder %v51, %v209
    %vm211 = vmand %vm207, %vm210
    %vm212 = vmand %vm208, %vm210
    %v213 = vsel %vm211, 1.0, %v205
    %v214 = vsel %vm212, 1.0, %v206
    %vm215 = vcmp.eq.s32.totalorder %v173, 4
    %vm216 = vcmp.eq.s32.totalorder %v174, 4
    %v217 = vstv %s84
    %vm218 = vcmp.eq.s32.totalorder %v51, %v217
    %vm219 = vmand %vm215, %vm218
    %vm220 = vmand %vm216, %vm218
    %v221 = vsel %vm219, 1.0, %v213
    %v222 = vsel %vm220, 1.0, %v214
    %vm223 = vcmp.eq.s32.totalorder %v173, 5
    %vm224 = vcmp.eq.s32.totalorder %v174, 5
    %v225 = vstv %s92
    %vm226 = vcmp.eq.s32.totalorder %v51, %v225
    %vm227 = vmand %vm223, %vm226
    %vm228 = vmand %vm224, %vm226
    %v229 = vsel %vm227, 1.0, %v221
    %v230 = vsel %vm228, 1.0, %v222
    %vm231 = vcmp.eq.s32.totalorder %v173, 6
    %vm232 = vcmp.eq.s32.totalorder %v174, 6
    %v233 = vstv %s100
    %vm234 = vcmp.eq.s32.totalorder %v51, %v233
    %vm235 = vmand %vm231, %vm234
    %vm236 = vmand %vm232, %vm234
    %v237 = vsel %vm235, 1.0, %v229
    %v238 = vsel %vm236, 1.0, %v230
    %vm239 = vcmp.eq.s32.totalorder %v173, 7
    %vm240 = vcmp.eq.s32.totalorder %v174, 7
    %v241 = vstv %s108
    %vm242 = vcmp.eq.s32.totalorder %v51, %v241
    %vm243 = vmand %vm239, %vm242
    %vm244 = vmand %vm240, %vm242
    %v245 = vsel %vm243, 1.0, %v237
    %v246 = vsel %vm244, 1.0, %v238
    %vm247 = vcmp.eq.s32.totalorder %v173, 8
    %vm248 = vcmp.eq.s32.totalorder %v174, 8
    %v249 = vstv %s116
    %vm250 = vcmp.eq.s32.totalorder %v51, %v249
    %vm251 = vmand %vm247, %vm250
    %vm252 = vmand %vm248, %vm250
    %v253 = vsel %vm251, 1.0, %v245
    %v254 = vsel %vm252, 1.0, %v246
    %vm255 = vcmp.eq.s32.totalorder %v173, 9
    %vm256 = vcmp.eq.s32.totalorder %v174, 9
    %v257 = vstv %s123
    %vm258 = vcmp.eq.s32.totalorder %v51, %v257
    %vm259 = vmand %vm255, %vm258
    %vm260 = vmand %vm256, %vm258
    %v261 = vsel %vm259, 1.0, %v253
    %v262 = vsel %vm260, 1.0, %v254
    %vm263 = vcmp.eq.s32.totalorder %v173, 10
    %vm264 = vcmp.eq.s32.totalorder %v174, 10
    %v265 = vstv %s130
    %vm266 = vcmp.eq.s32.totalorder %v51, %v265
    %vm267 = vmand %vm263, %vm266
    %vm268 = vmand %vm264, %vm266
    %v269 = vsel %vm267, 1.0, %v261
    %v270 = vsel %vm268, 1.0, %v262
    %vm271 = vcmp.eq.s32.totalorder %v173, 11
    %vm272 = vcmp.eq.s32.totalorder %v174, 11
    %v273 = vstv %s137
    %vm274 = vcmp.eq.s32.totalorder %v51, %v273
    %vm275 = vmand %vm271, %vm274
    %vm276 = vmand %vm272, %vm274
    %v277 = vsel %vm275, 1.0, %v269
    %v278 = vsel %vm276, 1.0, %v270
    %vm279 = vcmp.eq.s32.totalorder %v173, 12
    %vm280 = vcmp.eq.s32.totalorder %v174, 12
    %v281 = vstv %s144
    %vm282 = vcmp.eq.s32.totalorder %v51, %v281
    %vm283 = vmand %vm279, %vm282
    %vm284 = vmand %vm280, %vm282
    %v285 = vsel %vm283, 1.0, %v277
    %v286 = vsel %vm284, 1.0, %v278
    %vm287 = vcmp.eq.s32.totalorder %v173, 13
    %vm288 = vcmp.eq.s32.totalorder %v174, 13
    %v289 = vstv %s151
    %vm290 = vcmp.eq.s32.totalorder %v51, %v289
    %vm291 = vmand %vm287, %vm290
    %vm292 = vmand %vm288, %vm290
    %v293 = vsel %vm291, 1.0, %v285
    %v294 = vsel %vm292, 1.0, %v286
    %vm295 = vcmp.eq.s32.totalorder %v173, 14
    %vm296 = vcmp.eq.s32.totalorder %v174, 14
    %v297 = vstv %s158
    %vm298 = vcmp.eq.s32.totalorder %v51, %v297
    %vm299 = vmand %vm295, %vm298
    %vm300 = vmand %vm296, %vm298
    %v301 = vsel %vm299, 1.0, %v293
    %v302 = vsel %vm300, 1.0, %v294
    %vm303 = vcmp.eq.s32.totalorder %v173, 15
    %vm304 = vcmp.eq.s32.totalorder %v174, 15
    %v305 = vstv %s165
    %vm306 = vcmp.eq.s32.totalorder %v51, %v305
    %vm307 = vmand %vm303, %vm306
    %vm308 = vmand %vm304, %vm306
    %v309 = vsel %vm307, 1.0, %v301
    %v310 = vsel %vm308, 1.0, %v302
    %v311 = vld [vmem:[%s1] sm:$0xf]
    %v312 = vld [vmem:[%s1 + $0x4] sm:$0xf]
    %v313 = vld [vmem:[%s1 + $0x8] sm:$0xf]
    %v314 = vld [vmem:[%s1 + $0xc] sm:$0xf]
    %v315 = vld [vmem:[%s1 + $0x10] sm:$0xf]
    %v316 = vld [vmem:[%s1 + $0x14] sm:$0xf]
    %v317 = vld [vmem:[%s1 + $0x18] sm:$0xf]
    %v318 = vld [vmem:[%s1 + $0x1c] sm:$0xf]
    %v319 = vld [vmem:[%s1 + $0x20] sm:$0xf]
    %v320 = vld [vmem:[%s1 + $0x24] sm:$0xf]
    %v321 = vld [vmem:[%s1 + $0x28] sm:$0xf]
    %v322 = vld [vmem:[%s1 + $0x2c] sm:$0xf]
    %v323 = vld [vmem:[%s1 + $0x30] sm:$0xf]
    %v324 = vld [vmem:[%s1 + $0x34] sm:$0xf]
    %v325 = vld [vmem:[%s1 + $0x38] sm:$0xf]
    %v326 = vld [vmem:[%s1 + $0x3c] sm:$0xf]
    %v327 = vpack.c.bf16 %v310, %v309
    %v344 = vunpack.c.l.b16 %v311
    %v345 = vunpack.c.l.b16 %v312
    %v346 = vunpack.c.l.b16 %v313
    %v347 = vunpack.c.l.b16 %v314
    %v348 = vunpack.c.l.b16 %v315
    %v349 = vunpack.c.l.b16 %v316
    %v350 = vunpack.c.l.b16 %v317
    %v351 = vunpack.c.l.b16 %v318
    %v352 = vunpack.c.l.b16 %v319
    %v353 = vunpack.c.l.b16 %v320
    %v354 = vunpack.c.l.b16 %v321
    %v355 = vunpack.c.l.b16 %v322
    %v356 = vunpack.c.l.b16 %v323
    %v357 = vunpack.c.l.b16 %v324
    %v358 = vunpack.c.l.b16 %v325
    %v359 = vunpack.c.l.b16 %v326
    %v360 = vpack.c.b16 %v345, %v344
    %v361 = vpack.c.b16 %v347, %v346
    %v362 = vpack.c.b16 %v349, %v348
    %v363 = vpack.c.b16 %v351, %v350
    %v364 = vpack.c.b16 %v353, %v352
    %v365 = vpack.c.b16 %v355, %v354
    %v366 = vpack.c.b16 %v357, %v356
    %v367 = vpack.c.b16 %v359, %v358
    %376 = vmatprep.subr.bf16.mxu0 0
    %377 = vmatpush1.bf16.msra.mxu0 %v360
    %378 = vmatprep.subr.bf16.mxu0 0
    %379 = vmatpush1.bf16.msra.mxu0 %v361
    %380 = vmatprep.subr.bf16.mxu0 0
    %381 = vmatpush1.bf16.msra.mxu0 %v362
    %382 = vmatprep.subr.bf16.mxu0 0
    %383 = vmatpush1.bf16.msra.mxu0 %v363
    %384 = vmatprep.subr.bf16.mxu0 0
    %385 = vmatpush1.bf16.msra.mxu0 %v364
    %386 = vmatprep.subr.bf16.mxu0 0
    %387 = vmatpush1.bf16.msra.mxu0 %v365
    %388 = vmatprep.subr.bf16.mxu0 0
    %389 = vmatpush1.bf16.msra.mxu0 %v366
    %390 = vmatprep.subr.bf16.mxu0 0
    %391 = vmatpush1.bf16.msra.mxu0 %v367
    %392 = vmatprep.subr.bf16.mxu0 0
    %393 = vmatpush1.bf16.msra.mxu0 0
    %394 = vmatprep.subr.bf16.mxu0 0
    %395 = vmatpush1.bf16.msra.mxu0 0
    %396 = vmatprep.subr.bf16.mxu0 0
    %397 = vmatpush1.bf16.msra.mxu0 0
    %398 = vmatprep.subr.bf16.mxu0 0
    %399 = vmatpush1.bf16.msra.mxu0 0
    %400 = vmatprep.subr.bf16.mxu0 0
    %401 = vmatpush1.bf16.msra.mxu0 0
    %402 = vmatprep.subr.bf16.mxu0 0
    %403 = vmatpush1.bf16.msra.mxu0 0
    %404 = vmatprep.subr.bf16.mxu0 0
    %405 = vmatpush1.bf16.msra.mxu0 0
    %406 = vmatprep.subr.bf16.mxu0 0
    %407 = vmatpush1.bf16.msra.mxu0 0
    %408 = vmatprep.mubr.bf16.mxu0 0
    %409 = vmatmul.mubr.bf16.gmra.mrb[0].mxu0 %v327
    %v410 = vpop.f32.mrb[0].mxu0
    %v411 = vadd.f32 0.0, %v410
    %v412 = vpop.f32.mrb[0].mxu0
    %v413 = vpop.f32.mrb[0].mxu0
    %v414 = vadd.f32 0.0, %v413
    %v415 = vpop.f32.mrb[0].mxu0
    %416 = vdwg.mxu0
    %v417 = vld [vmem:[%s2] sm:$0xff]
    %v418 = vld [vmem:[%s2 + $0x8] sm:$0xff]
    %v419 = vld [vmem:[%s2 + $0x10] sm:$0xff]
    %v420 = vld [vmem:[%s2 + $0x18] sm:$0xff]
    %v421 = vld [vmem:[%s2 + $0x20] sm:$0xff]
    %v422 = vld [vmem:[%s2 + $0x28] sm:$0xff]
    %v423 = vld [vmem:[%s2 + $0x30] sm:$0xff]
    %v424 = vld [vmem:[%s2 + $0x38] sm:$0xff]
    %v425 = vld [vmem:[%s2 + $0x40] sm:$0xff]
    %v426 = vld [vmem:[%s2 + $0x48] sm:$0xff]
    %v427 = vld [vmem:[%s2 + $0x50] sm:$0xff]
    %v428 = vld [vmem:[%s2 + $0x58] sm:$0xff]
    %v429 = vpack.c.bf16 %v414, %v411
    %v430 = vld [vmem:[%s3] sm:$0x3f]
    %v432 = vlaneseq
    %v433 = vshrl.u32 %v432, 7
    %v434 = vsub.s32 0, %v433
    %v435 = vrot.slane %v430, %v434
    %v436 = vlaneseq
    %v437 = vshrl.u32 %v436, 7
    %v438 = vsub.s32 1, %v437
    %v439 = vrot.slane %v430, %v438
    %v440 = vlaneseq
    %v441 = vshrl.u32 %v440, 7
    %v442 = vsub.s32 2, %v441
    %v443 = vrot.slane %v430, %v442
    %v444 = vlaneseq
    %v445 = vshrl.u32 %v444, 7
    %v446 = vsub.s32 3, %v445
    %v447 = vrot.slane %v430, %v446
    %v448 = vlaneseq
    %v449 = vshrl.u32 %v448, 7
    %v450 = vsub.s32 4, %v449
    %v451 = vrot.slane %v430, %v450
    %v452 = vlaneseq
    %v453 = vshrl.u32 %v452, 7
    %v454 = vsub.s32 5, %v453
    %v455 = vrot.slane %v430, %v454
    %v474 = vunpack.c.l.b16 %v417
    %v475 = vunpack.c.h.b16 %v417
    %v476 = vunpack.c.l.b16 %v418
    %v477 = vunpack.c.h.b16 %v418
    %v478 = vunpack.c.l.b16 %v419
    %v479 = vunpack.c.h.b16 %v419
    %v480 = vunpack.c.l.b16 %v420
    %v481 = vunpack.c.h.b16 %v420
    %v482 = vunpack.c.l.b16 %v421
    %v483 = vunpack.c.h.b16 %v421
    %v484 = vunpack.c.l.b16 %v422
    %v485 = vunpack.c.h.b16 %v422
    %v486 = vunpack.c.l.b16 %v423
    %v487 = vunpack.c.h.b16 %v423
    %v488 = vunpack.c.l.b16 %v424
    %v489 = vunpack.c.h.b16 %v424
    %v490 = vunpack.c.l.b16 %v425
    %v491 = vunpack.c.h.b16 %v425
    %v492 = vunpack.c.l.b16 %v426
    %v493 = vunpack.c.h.b16 %v426
    %v494 = vunpack.c.l.b16 %v427
    %v495 = vunpack.c.h.b16 %v427
    %v496 = vunpack.c.l.b16 %v428
    %v497 = vunpack.c.h.b16 %v428
    %v498 = vpack.c.b16 %v480, %v474
    %v499 = vpack.c.b16 %v481, %v475
    %v500 = vpack.c.b16 %v482, %v476
    %v501 = vpack.c.b16 %v483, %v477
    %v502 = vpack.c.b16 %v484, %v478
    %v503 = vpack.c.b16 %v485, %v479
    %v504 = vpack.c.b16 %v492, %v486
    %v505 = vpack.c.b16 %v493, %v487
    %v506 = vpack.c.b16 %v494, %v488
    %v507 = vpack.c.b16 %v495, %v489
    %v508 = vpack.c.b16 %v496, %v490
    %v509 = vpack.c.b16 %v497, %v491
    %vm522 = vcmask 261120
    %v524 = vsel %vm522, %v429, 0
    %526 = vmatprep.subr.bf16.mxu0 %v499
    %527 = vmatpush1.bf16.msra.mxu0 %v498
    %528 = vmatprep.subr.bf16.mxu0 %v505
    %529 = vmatpush1.bf16.msra.mxu0 %v504
    %530 = vmatprep.subr.bf16.mxu0 0
    %531 = vmatpush1.bf16.msra.mxu0 0
    %532 = vmatprep.subr.bf16.mxu0 0
    %533 = vmatpush1.bf16.msra.mxu0 0
    %534 = vmatprep.subr.bf16.mxu0 0
    %535 = vmatpush1.bf16.msra.mxu0 0
    %536 = vmatprep.subr.bf16.mxu0 0
    %537 = vmatpush1.bf16.msra.mxu0 0
    %538 = vmatprep.subr.bf16.mxu0 0
    %539 = vmatpush1.bf16.msra.mxu0 0
    %540 = vmatprep.subr.bf16.mxu0 0
    %541 = vmatpush1.bf16.msra.mxu0 0
    %542 = vmatprep.subr.bf16.mxu0 0
    %543 = vmatpush1.bf16.msra.mxu0 0
    %544 = vmatprep.subr.bf16.mxu0 0
    %545 = vmatpush1.bf16.msra.mxu0 0
    %546 = vmatprep.subr.bf16.mxu0 0
    %547 = vmatpush1.bf16.msra.mxu0 0
    %548 = vmatprep.subr.bf16.mxu0 0
    %549 = vmatpush1.bf16.msra.mxu0 0
    %550 = vmatprep.subr.bf16.mxu0 0
    %551 = vmatpush1.bf16.msra.mxu0 0
    %552 = vmatprep.subr.bf16.mxu0 0
    %553 = vmatpush1.bf16.msra.mxu0 0
    %554 = vmatprep.subr.bf16.mxu0 0
    %555 = vmatpush1.bf16.msra.mxu0 0
    %556 = vmatprep.subr.bf16.mxu0 0
    %557 = vmatpush1.bf16.msra.mxu0 0
    %558 = vmatprep.mubr.bf16.mxu0 0
    %559 = vmatmul.mubr.bf16.gmra.mrb[0].mxu0 %v524
    %v560 = vpop.f32.mrb[0].mxu0
    %v561 = vadd.f32 %v435, %v560
    %v562 = vpop.f32.mrb[0].mxu0
    %v563 = vadd.f32 %v439, %v562
    %v564 = vpop.f32.mrb[0].mxu0
    %v565 = vadd.f32 %v435, %v564
    %v566 = vpop.f32.mrb[0].mxu0
    %v567 = vadd.f32 %v439, %v566
    %568 = vdwg.mxu0
    %569 = vmatprep.subr.bf16.mxu0 %v501
    %570 = vmatpush1.bf16.msra.mxu0 %v500
    %571 = vmatprep.subr.bf16.mxu0 %v507
    %572 = vmatpush1.bf16.msra.mxu0 %v506
    %573 = vmatprep.subr.bf16.mxu0 0
    %574 = vmatpush1.bf16.msra.mxu0 0
    %575 = vmatprep.subr.bf16.mxu0 0
    %576 = vmatpush1.bf16.msra.mxu0 0
    %577 = vmatprep.subr.bf16.mxu0 0
    %578 = vmatpush1.bf16.msra.mxu0 0
    %579 = vmatprep.subr.bf16.mxu0 0
    %580 = vmatpush1.bf16.msra.mxu0 0
    %581 = vmatprep.subr.bf16.mxu0 0
    %582 = vmatpush1.bf16.msra.mxu0 0
    %583 = vmatprep.subr.bf16.mxu0 0
    %584 = vmatpush1.bf16.msra.mxu0 0
    %585 = vmatprep.subr.bf16.mxu0 0
    %586 = vmatpush1.bf16.msra.mxu0 0
    %587 = vmatprep.subr.bf16.mxu0 0
    %588 = vmatpush1.bf16.msra.mxu0 0
    %589 = vmatprep.subr.bf16.mxu0 0
    %590 = vmatpush1.bf16.msra.mxu0 0
    %591 = vmatprep.subr.bf16.mxu0 0
    %592 = vmatpush1.bf16.msra.mxu0 0
    %593 = vmatprep.subr.bf16.mxu0 0
    %594 = vmatpush1.bf16.msra.mxu0 0
    %595 = vmatprep.subr.bf16.mxu0 0
    %596 = vmatpush1.bf16.msra.mxu0 0
    %597 = vmatprep.subr.bf16.mxu0 0
    %598 = vmatpush1.bf16.msra.mxu0 0
    %599 = vmatprep.subr.bf16.mxu0 0
    %600 = vmatpush1.bf16.msra.mxu0 0
    %601 = vmatprep.mubr.bf16.mxu0 0
    %602 = vmatmul.mubr.bf16.gmra.mrb[0].mxu0 %v524
    %v603 = vpop.f32.mrb[0].mxu0
    %v604 = vadd.f32 %v443, %v603
    %v605 = vpop.f32.mrb[0].mxu0
    %v606 = vadd.f32 %v447, %v605
    %v607 = vpop.f32.mrb[0].mxu0
    %v608 = vadd.f32 %v443, %v607
    %v609 = vpop.f32.mrb[0].mxu0
    %v610 = vadd.f32 %v447, %v609
    %611 = vdwg.mxu0
    %612 = vmatprep.subr.bf16.mxu0 %v503
    %613 = vmatpush1.bf16.msra.mxu0 %v502
    %614 = vmatprep.subr.bf16.mxu0 %v509
    %615 = vmatpush1.bf16.msra.mxu0 %v508
    %616 = vmatprep.subr.bf16.mxu0 0
    %617 = vmatpush1.bf16.msra.mxu0 0
    %618 = vmatprep.subr.bf16.mxu0 0
    %619 = vmatpush1.bf16.msra.mxu0 0
    %620 = vmatprep.subr.bf16.mxu0 0
    %621 = vmatpush1.bf16.msra.mxu0 0
    %622 = vmatprep.subr.bf16.mxu0 0
    %623 = vmatpush1.bf16.msra.mxu0 0
    %624 = vmatprep.subr.bf16.mxu0 0
    %625 = vmatpush1.bf16.msra.mxu0 0
    %626 = vmatprep.subr.bf16.mxu0 0
    %627 = vmatpush1.bf16.msra.mxu0 0
    %628 = vmatprep.subr.bf16.mxu0 0
    %629 = vmatpush1.bf16.msra.mxu0 0
    %630 = vmatprep.subr.bf16.mxu0 0
    %631 = vmatpush1.bf16.msra.mxu0 0
    %632 = vmatprep.subr.bf16.mxu0 0
    %633 = vmatpush1.bf16.msra.mxu0 0
    %634 = vmatprep.subr.bf16.mxu0 0
    %635 = vmatpush1.bf16.msra.mxu0 0
    %636 = vmatprep.subr.bf16.mxu0 0
    %637 = vmatpush1.bf16.msra.mxu0 0
    %638 = vmatprep.subr.bf16.mxu0 0
    %639 = vmatpush1.bf16.msra.mxu0 0
    %640 = vmatprep.subr.bf16.mxu0 0
    %641 = vmatpush1.bf16.msra.mxu0 0
    %642 = vmatprep.subr.bf16.mxu0 0
    %643 = vmatpush1.bf16.msra.mxu0 0
    %644 = vmatprep.mubr.bf16.mxu0 0
    %645 = vmatmul.mubr.bf16.gmra.mrb[0].mxu0 %v524
    %v646 = vpop.f32.mrb[0].mxu0
    %v647 = vadd.f32 %v451, %v646
    %v648 = vpop.f32.mrb[0].mxu0
    %v649 = vadd.f32 %v455, %v648
    %v650 = vpop.f32.mrb[0].mxu0
    %v651 = vadd.f32 %v451, %v650
    %v652 = vpop.f32.mrb[0].mxu0
    %v653 = vadd.f32 %v455, %v652
    %654 = vdwg.mxu0
    %v655 = vld [vmem:[%s4] sm:$0xf]
    %v656 = vld [vmem:[%s4 + $0x4] sm:$0xf]
    %v657 = vld [vmem:[%s4 + $0x8] sm:$0xf]
    %v658 = vld [vmem:[%s4 + $0xc] sm:$0xf]
    %v659 = vld [vmem:[%s4 + $0x10] sm:$0xf]
    %v660 = vld [vmem:[%s4 + $0x14] sm:$0xf]
    %v661 = vld [vmem:[%s4 + $0x18] sm:$0xf]
    %v662 = vld [vmem:[%s4 + $0x1c] sm:$0xf]
    %v663 = vld [vmem:[%s4 + $0x20] sm:$0xf]
    %v664 = vld [vmem:[%s4 + $0x24] sm:$0xf]
    %v665 = vld [vmem:[%s4 + $0x28] sm:$0xf]
    %v666 = vld [vmem:[%s4 + $0x2c] sm:$0xf]
    %v667 = vld [vmem:[%s4 + $0x30] sm:$0xf]
    %v668 = vld [vmem:[%s4 + $0x34] sm:$0xf]
    %v669 = vld [vmem:[%s4 + $0x38] sm:$0xf]
    %v670 = vld [vmem:[%s4 + $0x3c] sm:$0xf]
    %v671 = vld [vmem:[%s4 + $0x40] sm:$0xf]
    %v672 = vld [vmem:[%s4 + $0x44] sm:$0xf]
    %v673 = vld [vmem:[%s4 + $0x48] sm:$0xf]
    %v674 = vld [vmem:[%s4 + $0x4c] sm:$0xf]
    %v675 = vld [vmem:[%s4 + $0x50] sm:$0xf]
    %v676 = vld [vmem:[%s4 + $0x54] sm:$0xf]
    %v677 = vld [vmem:[%s4 + $0x58] sm:$0xf]
    %v678 = vld [vmem:[%s4 + $0x5c] sm:$0xf]
    %v679 = vld [vmem:[%s4 + $0x60] sm:$0xf]
    %v680 = vld [vmem:[%s4 + $0x64] sm:$0xf]
    %v681 = vld [vmem:[%s4 + $0x68] sm:$0xf]
    %v682 = vld [vmem:[%s4 + $0x6c] sm:$0xf]
    %v683 = vld [vmem:[%s4 + $0x70] sm:$0xf]
    %v684 = vld [vmem:[%s4 + $0x74] sm:$0xf]
    %v685 = vld [vmem:[%s4 + $0x78] sm:$0xf]
    %v686 = vld [vmem:[%s4 + $0x7c] sm:$0xf]
    %v687 = vpack.c.bf16 %v561, %v561
    %v688 = vpack.c.bf16 %v604, %v604
    %689 = vmatprep.subr.bf16.mxu0 0
    %690 = vmatpush1.bf16.xpose.msra.mxu0 %v688
    %691 = vmatprep.subr.bf16.mxu0 0
    %692 = vmatpush1.bf16.xpose.msra.mxu0 0
    %693 = vmatprep.subr.bf16.mxu0 0
    %694 = vmatpush1.bf16.xpose.msra.mxu0 0
    %695 = vmatprep.subr.bf16.mxu0 0
    %696 = vmatpush1.bf16.xpose.msra.mxu0 0
    %697 = vmatprep.subr.bf16.mxu0 0
    %698 = vmatpush1.bf16.xpose.msra.mxu0 0
    %699 = vmatprep.subr.bf16.mxu0 0
    %700 = vmatpush1.bf16.xpose.msra.mxu0 0
    %701 = vmatprep.subr.bf16.mxu0 0
    %702 = vmatpush1.bf16.xpose.msra.mxu0 0
    %703 = vmatprep.subr.bf16.mxu0 0
    %704 = vmatpush1.bf16.xpose.msra.mxu0 0
    %705 = vmatprep.subr.bf16.mxu0 0
    %706 = vmatpush1.bf16.xpose.msra.mxu0 0
    %707 = vmatprep.subr.bf16.mxu0 0
    %708 = vmatpush1.bf16.xpose.msra.mxu0 0
    %709 = vmatprep.subr.bf16.mxu0 0
    %710 = vmatpush1.bf16.xpose.msra.mxu0 0
    %711 = vmatprep.subr.bf16.mxu0 0
    %712 = vmatpush1.bf16.xpose.msra.mxu0 0
    %713 = vmatprep.subr.bf16.mxu0 0
    %714 = vmatpush1.bf16.xpose.msra.mxu0 0
    %715 = vmatprep.subr.bf16.mxu0 0
    %716 = vmatpush1.bf16.xpose.msra.mxu0 0
    %717 = vmatprep.subr.bf16.mxu0 0
    %718 = vmatpush1.bf16.xpose.msra.mxu0 0
    %719 = vmatprep.subr.bf16.mxu0 0
    %720 = vmatpush1.bf16.xpose.msra.mxu0 0
    %721 = vmatprep.mubr.bf16.mxu0 0
    %722 = vmatmul.mubr.bf16.gmra.mrb[0].mxu0 %v687
    %v723 = vpop.f32.mrb[0].mxu0
    %v724 = vadd.f32 0.0, %v723
    %v725 = vpop.f32.mrb[0].mxu0
    %v726 = vpop.f32.mrb[0].mxu0
    %v727 = vpop.f32.mrb[0].mxu0
    %728 = vdwg.mxu0
    %v729 = vmul.f32 %v724, 0.25
    %v730 = vadd.f32 %v729, %v115
    %vm731 = vcmask 64512
    %v732 = vsel %vm731, %v730, -inf
    %733 = vmax.xlane.f32.xlu0 %v732
    %v734 = vpop.xlane.xlu0 %733
    %v735 = vsub.f32 %v730, %v734
    %v736 = vmul.f32 %v735, 1.442695
    %v737 = vpow.pop %v736
    %v738 = vsel %vm731, %v737, 0.0
    %739 = vadd.xlane.f32.xlu0 %v738
    %v740 = vpop.xlane.xlu0 %739
    %v741 = vrcp.pop %v740
    %v742 = vmul.f32 %v737, %v741
    %v743 = vpack.c.bf16 %v742, %v742
    %v744 = vpack.c.bf16 %v647, %v647
    %v746 = vsel %vm731, %v743, 0
    %vm748 = vcmask 1043456
    %v750 = vsel %vm748, %v744, 0
    %752 = vmatprep.subr.bf16.mxu0 0
    %753 = vmatpush1.bf16.msra.mxu0 %v750
    %754 = vmatprep.subr.bf16.mxu0 0
    %755 = vmatpush1.bf16.msra.mxu0 0
    %756 = vmatprep.subr.bf16.mxu0 0
    %757 = vmatpush1.bf16.msra.mxu0 0
    %758 = vmatprep.subr.bf16.mxu0 0
    %759 = vmatpush1.bf16.msra.mxu0 0
    %760 = vmatprep.subr.bf16.mxu0 0
    %761 = vmatpush1.bf16.msra.mxu0 0
    %762 = vmatprep.subr.bf16.mxu0 0
    %763 = vmatpush1.bf16.msra.mxu0 0
    %764 = vmatprep.subr.bf16.mxu0 0
    %765 = vmatpush1.bf16.msra.mxu0 0
    %766 = vmatprep.subr.bf16.mxu0 0
    %767 = vmatpush1.bf16.msra.mxu0 0
    %768 = vmatprep.subr.bf16.mxu0 0
    %769 = vmatpush1.bf16.msra.mxu0 0
    %770 = vmatprep.subr.bf16.mxu0 0
    %771 = vmatpush1.bf16.msra.mxu0 0
    %772 = vmatprep.subr.bf16.mxu0 0
    %773 = vmatpush1.bf16.msra.mxu0 0
    %774 = vmatprep.subr.bf16.mxu0 0
    %775 = vmatpush1.bf16.msra.mxu0 0
    %776 = vmatprep.subr.bf16.mxu0 0
    %777 = vmatpush1.bf16.msra.mxu0 0
    %778 = vmatprep.subr.bf16.mxu0 0
    %779 = vmatpush1.bf16.msra.mxu0 0
    %780 = vmatprep.subr.bf16.mxu0 0
    %781 = vmatpush1.bf16.msra.mxu0 0
    %782 = vmatprep.subr.bf16.mxu0 0
    %783 = vmatpush1.bf16.msra.mxu0 0
    %784 = vmatprep.mubr.bf16.mxu0 0
    %785 = vmatmul.mubr.bf16.gmra.mrb[0].mxu0 %v746
    %v786 = vpop.f32.mrb[0].mxu0
    %v787 = vadd.f32 0.0, %v786
    %v788 = vpop.f32.mrb[0].mxu0
    %v789 = vpop.f32.mrb[0].mxu0
    %v790 = vpop.f32.mrb[0].mxu0
    %791 = vdwg.mxu0
    %v792 = vpack.c.bf16 %v787, %v787
    %v793 = vpack.c.bf16 %v563, %v563
    %v794 = vpack.c.bf16 %v606, %v606
    %795 = vmatprep.subr.bf16.mxu0 0
    %796 = vmatpush1.bf16.xpose.msra.mxu0 %v794
    %797 = vmatprep.subr.bf16.mxu0 0
    %798 = vmatpush1.bf16.xpose.msra.mxu0 0
    %799 = vmatprep.subr.bf16.mxu0 0
    %800 = vmatpush1.bf16.xpose.msra.mxu0 0
    %801 = vmatprep.subr.bf16.mxu0 0
    %802 = vmatpush1.bf16.xpose.msra.mxu0 0
    %803 = vmatprep.subr.bf16.mxu0 0
    %804 = vmatpush1.bf16.xpose.msra.mxu0 0
    %805 = vmatprep.subr.bf16.mxu0 0
    %806 = vmatpush1.bf16.xpose.msra.mxu0 0
    %807 = vmatprep.subr.bf16.mxu0 0
    %808 = vmatpush1.bf16.xpose.msra.mxu0 0
    %809 = vmatprep.subr.bf16.mxu0 0
    %810 = vmatpush1.bf16.xpose.msra.mxu0 0
    %811 = vmatprep.subr.bf16.mxu0 0
    %812 = vmatpush1.bf16.xpose.msra.mxu0 0
    %813 = vmatprep.subr.bf16.mxu0 0
    %814 = vmatpush1.bf16.xpose.msra.mxu0 0
    %815 = vmatprep.subr.bf16.mxu0 0
    %816 = vmatpush1.bf16.xpose.msra.mxu0 0
    %817 = vmatprep.subr.bf16.mxu0 0
    %818 = vmatpush1.bf16.xpose.msra.mxu0 0
    %819 = vmatprep.subr.bf16.mxu0 0
    %820 = vmatpush1.bf16.xpose.msra.mxu0 0
    %821 = vmatprep.subr.bf16.mxu0 0
    %822 = vmatpush1.bf16.xpose.msra.mxu0 0
    %823 = vmatprep.subr.bf16.mxu0 0
    %824 = vmatpush1.bf16.xpose.msra.mxu0 0
    %825 = vmatprep.subr.bf16.mxu0 0
    %826 = vmatpush1.bf16.xpose.msra.mxu0 0
    %827 = vmatprep.mubr.bf16.mxu0 0
    %828 = vmatmul.mubr.bf16.gmra.mrb[0].mxu0 %v793
    %v829 = vpop.f32.mrb[0].mxu0
    %v830 = vadd.f32 0.0, %v829
    %v831 = vpop.f32.mrb[0].mxu0
    %v832 = vpop.f32.mrb[0].mxu0
    %v833 = vpop.f32.mrb[0].mxu0
    %834 = vdwg.mxu0
    %v835 = vmul.f32 %v830, 0.25
    %v836 = vadd.f32 %v835, %v115
    %v837 = vsel %vm731, %v836, -inf
    %838 = vmax.xlane.f32.xlu0 %v837
    %v839 = vpop.xlane.xlu0 %838
    %v840 = vsub.f32 %v836, %v839
    %v841 = vmul.f32 %v840, 1.442695
    %v842 = vpow.pop %v841
    %v843 = vsel %vm731, %v842, 0.0
    %844 = vadd.xlane.f32.xlu0 %v843
    %v845 = vpop.xlane.xlu0 %844
    %v846 = vrcp.pop %v845
    %v847 = vmul.f32 %v842, %v846
    %v848 = vpack.c.bf16 %v847, %v847
    %v849 = vpack.c.bf16 %v649, %v649
    %v851 = vsel %vm731, %v848, 0
    %v854 = vsel %vm748, %v849, 0
    %856 = vmatprep.subr.bf16.mxu0 0
    %857 = vmatpush1.bf16.msra.mxu0 %v854
    %858 = vmatprep.subr.bf16.mxu0 0
    %859 = vmatpush1.bf16.msra.mxu0 0
    %860 = vmatprep.subr.bf16.mxu0 0
    %861 = vmatpush1.bf16.msra.mxu0 0
    %862 = vmatprep.subr.bf16.mxu0 0
    %863 = vmatpush1.bf16.msra.mxu0 0
    %864 = vmatprep.subr.bf16.mxu0 0
    %865 = vmatpush1.bf16.msra.mxu0 0
    %866 = vmatprep.subr.bf16.mxu0 0
    %867 = vmatpush1.bf16.msra.mxu0 0
    %868 = vmatprep.subr.bf16.mxu0 0
    %869 = vmatpush1.bf16.msra.mxu0 0
    %870 = vmatprep.subr.bf16.mxu0 0
    %871 = vmatpush1.bf16.msra.mxu0 0
    %872 = vmatprep.subr.bf16.mxu0 0
    %873 = vmatpush1.bf16.msra.mxu0 0
    %874 = vmatprep.subr.bf16.mxu0 0
    %875 = vmatpush1.bf16.msra.mxu0 0
    %876 = vmatprep.subr.bf16.mxu0 0
    %877 = vmatpush1.bf16.msra.mxu0 0
    %878 = vmatprep.subr.bf16.mxu0 0
    %879 = vmatpush1.bf16.msra.mxu0 0
    %880 = vmatprep.subr.bf16.mxu0 0
    %881 = vmatpush1.bf16.msra.mxu0 0
    %882 = vmatprep.subr.bf16.mxu0 0
    %883 = vmatpush1.bf16.msra.mxu0 0
    %884 = vmatprep.subr.bf16.mxu0 0
    %885 = vmatpush1.bf16.msra.mxu0 0
    %886 = vmatprep.subr.bf16.mxu0 0
    %887 = vmatpush1.bf16.msra.mxu0 0
    %888 = vmatprep.mubr.bf16.mxu0 0
    %889 = vmatmul.mubr.bf16.gmra.mrb[0].mxu0 %v851
    %v890 = vpop.f32.mrb[0].mxu0
    %v891 = vadd.f32 0.0, %v890
    %v892 = vpop.f32.mrb[0].mxu0
    %v893 = vpop.f32.mrb[0].mxu0
    %v894 = vpop.f32.mrb[0].mxu0
    %895 = vdwg.mxu0
    %v896 = vpack.c.bf16 %v891, %v891
    %v913 = vunpack.c.l.b16 %v671
    %v914 = vunpack.c.l.b16 %v672
    %v915 = vunpack.c.l.b16 %v673
    %v916 = vunpack.c.l.b16 %v674
    %v917 = vunpack.c.l.b16 %v675
    %v918 = vunpack.c.l.b16 %v676
    %v919 = vunpack.c.l.b16 %v677
    %v920 = vunpack.c.l.b16 %v678
    %v921 = vunpack.c.l.b16 %v679
    %v922 = vunpack.c.l.b16 %v680
    %v923 = vunpack.c.l.b16 %v681
    %v924 = vunpack.c.l.b16 %v682
    %v925 = vunpack.c.l.b16 %v683
    %v926 = vunpack.c.l.b16 %v684
    %v927 = vunpack.c.l.b16 %v685
    %v928 = vunpack.c.l.b16 %v686
    %v929 = vpack.c.b16 %v914, %v913
    %v930 = vpack.c.b16 %v916, %v915
    %v931 = vpack.c.b16 %v918, %v917
    %v932 = vpack.c.b16 %v920, %v919
    %v933 = vpack.c.b16 %v922, %v921
    %v934 = vpack.c.b16 %v924, %v923
    %v935 = vpack.c.b16 %v926, %v925
    %v936 = vpack.c.b16 %v928, %v927
    %945 = vmatprep.subr.bf16.mxu0 0
    %946 = vmatpush1.bf16.msra.mxu0 %v929
    %947 = vmatprep.subr.bf16.mxu0 0
    %948 = vmatpush1.bf16.msra.mxu0 %v930
    %949 = vmatprep.subr.bf16.mxu0 0
    %950 = vmatpush1.bf16.msra.mxu0 %v931
    %951 = vmatprep.subr.bf16.mxu0 0
    %952 = vmatpush1.bf16.msra.mxu0 %v932
    %953 = vmatprep.subr.bf16.mxu0 0
    %954 = vmatpush1.bf16.msra.mxu0 %v933
    %955 = vmatprep.subr.bf16.mxu0 0
    %956 = vmatpush1.bf16.msra.mxu0 %v934
    %957 = vmatprep.subr.bf16.mxu0 0
    %958 = vmatpush1.bf16.msra.mxu0 %v935
    %959 = vmatprep.subr.bf16.mxu0 0
    %960 = vmatpush1.bf16.msra.mxu0 %v936
    %961 = vmatprep.subr.bf16.mxu0 0
    %962 = vmatpush1.bf16.msra.mxu0 0
    %963 = vmatprep.subr.bf16.mxu0 0
    %964 = vmatpush1.bf16.msra.mxu0 0
    %965 = vmatprep.subr.bf16.mxu0 0
    %966 = vmatpush1.bf16.msra.mxu0 0
    %967 = vmatprep.subr.bf16.mxu0 0
    %968 = vmatpush1.bf16.msra.mxu0 0
    %969 = vmatprep.subr.bf16.mxu0 0
    %970 = vmatpush1.bf16.msra.mxu0 0
    %971 = vmatprep.subr.bf16.mxu0 0
    %972 = vmatpush1.bf16.msra.mxu0 0
    %973 = vmatprep.subr.bf16.mxu0 0
    %974 = vmatpush1.bf16.msra.mxu0 0
    %975 = vmatprep.subr.bf16.mxu0 0
    %976 = vmatpush1.bf16.msra.mxu0 0
    %977 = vmatprep.mubr.bf16.mxu0 0
    %978 = vmatmul.mubr.bf16.gmra.mrb[0].mxu0 %v896
    %v979 = vpop.f32.mrb[0].mxu0
    %v980 = vadd.f32 0.0, %v979
    %v981 = vpop.f32.mrb[0].mxu0
    %v982 = vpop.f32.mrb[0].mxu0
    %v983 = vpop.f32.mrb[0].mxu0
    %984 = vdwg.mxu0
    %v1001 = vunpack.c.l.b16 %v655
    %v1002 = vunpack.c.l.b16 %v656
    %v1003 = vunpack.c.l.b16 %v657
    %v1004 = vunpack.c.l.b16 %v658
    %v1005 = vunpack.c.l.b16 %v659
    %v1006 = vunpack.c.l.b16 %v660
    %v1007 = vunpack.c.l.b16 %v661
    %v1008 = vunpack.c.l.b16 %v662
    %v1009 = vunpack.c.l.b16 %v663
    %v1010 = vunpack.c.l.b16 %v664
    %v1011 = vunpack.c.l.b16 %v665
    %v1012 = vunpack.c.l.b16 %v666
    %v1013 = vunpack.c.l.b16 %v667
    %v1014 = vunpack.c.l.b16 %v668
    %v1015 = vunpack.c.l.b16 %v669
    %v1016 = vunpack.c.l.b16 %v670
    %v1017 = vpack.c.b16 %v1002, %v1001
    %v1018 = vpack.c.b16 %v1004, %v1003
    %v1019 = vpack.c.b16 %v1006, %v1005
    %v1020 = vpack.c.b16 %v1008, %v1007
    %v1021 = vpack.c.b16 %v1010, %v1009
    %v1022 = vpack.c.b16 %v1012, %v1011
    %v1023 = vpack.c.b16 %v1014, %v1013
    %v1024 = vpack.c.b16 %v1016, %v1015
    %1033 = vmatprep.subr.bf16.mxu0 0
    %1034 = vmatpush1.bf16.msra.mxu0 %v1017
    %1035 = vmatprep.subr.bf16.mxu0 0
    %1036 = vmatpush1.bf16.msra.mxu0 %v1018
    %1037 = vmatprep.subr.bf16.mxu0 0
    %1038 = vmatpush1.bf16.msra.mxu0 %v1019
    %1039 = vmatprep.subr.bf16.mxu0 0
    %1040 = vmatpush1.bf16.msra.mxu0 %v1020
    %1041 = vmatprep.subr.bf16.mxu0 0
    %1042 = vmatpush1.bf16.msra.mxu0 %v1021
    %1043 = vmatprep.subr.bf16.mxu0 0
    %1044 = vmatpush1.bf16.msra.mxu0 %v1022
    %1045 = vmatprep.subr.bf16.mxu0 0
    %1046 = vmatpush1.bf16.msra.mxu0 %v1023
    %1047 = vmatprep.subr.bf16.mxu0 0
    %1048 = vmatpush1.bf16.msra.mxu0 %v1024
    %1049 = vmatprep.subr.bf16.mxu0 0
    %1050 = vmatpush1.bf16.msra.mxu0 0
    %1051 = vmatprep.subr.bf16.mxu0 0
    %1052 = vmatpush1.bf16.msra.mxu0 0
    %1053 = vmatprep.subr.bf16.mxu0 0
    %1054 = vmatpush1.bf16.msra.mxu0 0
    %1055 = vmatprep.subr.bf16.mxu0 0
    %1056 = vmatpush1.bf16.msra.mxu0 0
    %1057 = vmatprep.subr.bf16.mxu0 0
    %1058 = vmatpush1.bf16.msra.mxu0 0
    %1059 = vmatprep.subr.bf16.mxu0 0
    %1060 = vmatpush1.bf16.msra.mxu0 0
    %1061 = vmatprep.subr.bf16.mxu0 0
    %1062 = vmatpush1.bf16.msra.mxu0 0
    %1063 = vmatprep.subr.bf16.mxu0 0
    %1064 = vmatpush1.bf16.msra.mxu0 0
    %1065 = vmatprep.mubr.bf16.mxu0 0
    %1066 = vmatmul.mubr.bf16.gmra.mrb[0].mxu0 %v792
    %v1067 = vpop.f32.mrb[0].mxu0
    %v1068 = vadd.f32 %v980, %v1067
    %v1069 = vpop.f32.mrb[0].mxu0
    %v1070 = vpop.f32.mrb[0].mxu0
    %v1071 = vpop.f32.mrb[0].mxu0
    %1072 = vdwg.mxu0
    %v1073 = vpack.c.bf16 %v565, %v565
    %v1074 = vpack.c.bf16 %v608, %v608
    %1075 = vmatprep.subr.bf16.mxu0 0
    %1076 = vmatpush1.bf16.xpose.msra.mxu0 %v1074
    %1077 = vmatprep.subr.bf16.mxu0 0
    %1078 = vmatpush1.bf16.xpose.msra.mxu0 0
    %1079 = vmatprep.subr.bf16.mxu0 0
    %1080 = vmatpush1.bf16.xpose.msra.mxu0 0
    %1081 = vmatprep.subr.bf16.mxu0 0
    %1082 = vmatpush1.bf16.xpose.msra.mxu0 0
    %1083 = vmatprep.subr.bf16.mxu0 0
    %1084 = vmatpush1.bf16.xpose.msra.mxu0 0
    %1085 = vmatprep.subr.bf16.mxu0 0
    %1086 = vmatpush1.bf16.xpose.msra.mxu0 0
    %1087 = vmatprep.subr.bf16.mxu0 0
    %1088 = vmatpush1.bf16.xpose.msra.mxu0 0
    %1089 = vmatprep.subr.bf16.mxu0 0
    %1090 = vmatpush1.bf16.xpose.msra.mxu0 0
    %1091 = vmatprep.subr.bf16.mxu0 0
    %1092 = vmatpush1.bf16.xpose.msra.mxu0 0
    %1093 = vmatprep.subr.bf16.mxu0 0
    %1094 = vmatpush1.bf16.xpose.msra.mxu0 0
    %1095 = vmatprep.subr.bf16.mxu0 0
    %1096 = vmatpush1.bf16.xpose.msra.mxu0 0
    %1097 = vmatprep.subr.bf16.mxu0 0
    %1098 = vmatpush1.bf16.xpose.msra.mxu0 0
    %1099 = vmatprep.subr.bf16.mxu0 0
    %1100 = vmatpush1.bf16.xpose.msra.mxu0 0
    %1101 = vmatprep.subr.bf16.mxu0 0
    %1102 = vmatpush1.bf16.xpose.msra.mxu0 0
    %1103 = vmatprep.subr.bf16.mxu0 0
    %1104 = vmatpush1.bf16.xpose.msra.mxu0 0
    %1105 = vmatprep.subr.bf16.mxu0 0
    %1106 = vmatpush1.bf16.xpose.msra.mxu0 0
    %1107 = vmatprep.mubr.bf16.mxu0 0
    %1108 = vmatmul.mubr.bf16.gmra.mrb[0].mxu0 %v1073
    %v1109 = vpop.f32.mrb[0].mxu0
    %v1110 = vadd.f32 0.0, %v1109
    %v1111 = vpop.f32.mrb[0].mxu0
    %v1112 = vpop.f32.mrb[0].mxu0
    %v1113 = vpop.f32.mrb[0].mxu0
    %1114 = vdwg.mxu0
    %v1115 = vmul.f32 %v1110, 0.25
    %v1116 = vadd.f32 %v1115, %v171
    %v1117 = vsel %vm731, %v1116, -inf
    %1118 = vmax.xlane.f32.xlu0 %v1117
    %v1119 = vpop.xlane.xlu0 %1118
    %v1120 = vsub.f32 %v1116, %v1119
    %v1121 = vmul.f32 %v1120, 1.442695
    %v1122 = vpow.pop %v1121
    %v1123 = vsel %vm731, %v1122, 0.0
    %1124 = vadd.xlane.f32.xlu0 %v1123
    %v1125 = vpop.xlane.xlu0 %1124
    %v1126 = vrcp.pop %v1125
    %v1127 = vmul.f32 %v1122, %v1126
    %v1128 = vpack.c.bf16 %v1127, %v1127
    %v1129 = vpack.c.bf16 %v651, %v651
    %v1131 = vsel %vm731, %v1128, 0
    %v1134 = vsel %vm748, %v1129, 0
    %1136 = vmatprep.subr.bf16.mxu0 0
    %1137 = vmatpush1.bf16.msra.mxu0 %v1134
    %1138 = vmatprep.subr.bf16.mxu0 0
    %1139 = vmatpush1.bf16.msra.mxu0 0
    %1140 = vmatprep.subr.bf16.mxu0 0
    %1141 = vmatpush1.bf16.msra.mxu0 0
    %1142 = vmatprep.subr.bf16.mxu0 0
    %1143 = vmatpush1.bf16.msra.mxu0 0
    %1144 = vmatprep.subr.bf16.mxu0 0
    %1145 = vmatpush1.bf16.msra.mxu0 0
    %1146 = vmatprep.subr.bf16.mxu0 0
    %1147 = vmatpush1.bf16.msra.mxu0 0
    %1148 = vmatprep.subr.bf16.mxu0 0
    %1149 = vmatpush1.bf16.msra.mxu0 0
    %1150 = vmatprep.subr.bf16.mxu0 0
    %1151 = vmatpush1.bf16.msra.mxu0 0
    %1152 = vmatprep.subr.bf16.mxu0 0
    %1153 = vmatpush1.bf16.msra.mxu0 0
    %1154 = vmatprep.subr.bf16.mxu0 0
    %1155 = vmatpush1.bf16.msra.mxu0 0
    %1156 = vmatprep.subr.bf16.mxu0 0
    %1157 = vmatpush1.bf16.msra.mxu0 0
    %1158 = vmatprep.subr.bf16.mxu0 0
    %1159 = vmatpush1.bf16.msra.mxu0 0
    %1160 = vmatprep.subr.bf16.mxu0 0
    %1161 = vmatpush1.bf16.msra.mxu0 0
    %1162 = vmatprep.subr.bf16.mxu0 0
    %1163 = vmatpush1.bf16.msra.mxu0 0
    %1164 = vmatprep.subr.bf16.mxu0 0
    %1165 = vmatpush1.bf16.msra.mxu0 0
    %1166 = vmatprep.subr.bf16.mxu0 0
    %1167 = vmatpush1.bf16.msra.mxu0 0
    %1168 = vmatprep.mubr.bf16.mxu0 0
    %1169 = vmatmul.mubr.bf16.gmra.mrb[0].mxu0 %v1131
    %v1170 = vpop.f32.mrb[0].mxu0
    %v1171 = vadd.f32 0.0, %v1170
    %v1172 = vpop.f32.mrb[0].mxu0
    %v1173 = vpop.f32.mrb[0].mxu0
    %v1174 = vpop.f32.mrb[0].mxu0
    %1175 = vdwg.mxu0
    %v1176 = vpack.c.bf16 %v1171, %v1171
    %v1177 = vpack.c.bf16 %v567, %v567
    %v1178 = vpack.c.bf16 %v610, %v610
    %1179 = vmatprep.subr.bf16.mxu0 0
    %1180 = vmatpush1.bf16.xpose.msra.mxu0 %v1178
    %1181 = vmatprep.subr.bf16.mxu0 0
    %1182 = vmatpush1.bf16.xpose.msra.mxu0 0
    %1183 = vmatprep.subr.bf16.mxu0 0
    %1184 = vmatpush1.bf16.xpose.msra.mxu0 0
    %1185 = vmatprep.subr.bf16.mxu0 0
    %1186 = vmatpush1.bf16.xpose.msra.mxu0 0
    %1187 = vmatprep.subr.bf16.mxu0 0
    %1188 = vmatpush1.bf16.xpose.msra.mxu0 0
    %1189 = vmatprep.subr.bf16.mxu0 0
    %1190 = vmatpush1.bf16.xpose.msra.mxu0 0
    %1191 = vmatprep.subr.bf16.mxu0 0
    %1192 = vmatpush1.bf16.xpose.msra.mxu0 0
    %1193 = vmatprep.subr.bf16.mxu0 0
    %1194 = vmatpush1.bf16.xpose.msra.mxu0 0
    %1195 = vmatprep.subr.bf16.mxu0 0
    %1196 = vmatpush1.bf16.xpose.msra.mxu0 0
    %1197 = vmatprep.subr.bf16.mxu0 0
    %1198 = vmatpush1.bf16.xpose.msra.mxu0 0
    %1199 = vmatprep.subr.bf16.mxu0 0
    %1200 = vmatpush1.bf16.xpose.msra.mxu0 0
    %1201 = vmatprep.subr.bf16.mxu0 0
    %1202 = vmatpush1.bf16.xpose.msra.mxu0 0
    %1203 = vmatprep.subr.bf16.mxu0 0
    %1204 = vmatpush1.bf16.xpose.msra.mxu0 0
    %1205 = vmatprep.subr.bf16.mxu0 0
    %1206 = vmatpush1.bf16.xpose.msra.mxu0 0
    %1207 = vmatprep.subr.bf16.mxu0 0
    %1208 = vmatpush1.bf16.xpose.msra.mxu0 0
    %1209 = vmatprep.subr.bf16.mxu0 0
    %1210 = vmatpush1.bf16.xpose.msra.mxu0 0
    %1211 = vmatprep.mubr.bf16.mxu0 0
    %1212 = vmatmul.mubr.bf16.gmra.mrb[0].mxu0 %v1177
    %v1213 = vpop.f32.mrb[0].mxu0
    %v1214 = vadd.f32 0.0, %v1213
    %v1215 = vpop.f32.mrb[0].mxu0
    %v1216 = vpop.f32.mrb[0].mxu0
    %v1217 = vpop.f32.mrb[0].mxu0
    %1218 = vdwg.mxu0
    %v1219 = vmul.f32 %v1214, 0.25
    %v1220 = vadd.f32 %v1219, %v171
    %v1221 = vsel %vm731, %v1220, -inf
    %1222 = vmax.xlane.f32.xlu0 %v1221
    %v1223 = vpop.xlane.xlu0 %1222
    %v1224 = vsub.f32 %v1220, %v1223
    %v1225 = vmul.f32 %v1224, 1.442695
    %v1226 = vpow.pop %v1225
    %v1227 = vsel %vm731, %v1226, 0.0
    %1228 = vadd.xlane.f32.xlu0 %v1227
    %v1229 = vpop.xlane.xlu0 %1228
    %v1230 = vrcp.pop %v1229
    %v1231 = vmul.f32 %v1226, %v1230
    %v1232 = vpack.c.bf16 %v1231, %v1231
    %v1233 = vpack.c.bf16 %v653, %v653
    %v1235 = vsel %vm731, %v1232, 0
    %v1238 = vsel %vm748, %v1233, 0
    %1240 = vmatprep.subr.bf16.mxu0 0
    %1241 = vmatpush1.bf16.msra.mxu0 %v1238
    %1242 = vmatprep.subr.bf16.mxu0 0
    %1243 = vmatpush1.bf16.msra.mxu0 0
    %1244 = vmatprep.subr.bf16.mxu0 0
    %1245 = vmatpush1.bf16.msra.mxu0 0
    %1246 = vmatprep.subr.bf16.mxu0 0
    %1247 = vmatpush1.bf16.msra.mxu0 0
    %1248 = vmatprep.subr.bf16.mxu0 0
    %1249 = vmatpush1.bf16.msra.mxu0 0
    %1250 = vmatprep.subr.bf16.mxu0 0
    %1251 = vmatpush1.bf16.msra.mxu0 0
    %1252 = vmatprep.subr.bf16.mxu0 0
    %1253 = vmatpush1.bf16.msra.mxu0 0
    %1254 = vmatprep.subr.bf16.mxu0 0
    %1255 = vmatpush1.bf16.msra.mxu0 0
    %1256 = vmatprep.subr.bf16.mxu0 0
    %1257 = vmatpush1.bf16.msra.mxu0 0
    %1258 = vmatprep.subr.bf16.mxu0 0
    %1259 = vmatpush1.bf16.msra.mxu0 0
    %1260 = vmatprep.subr.bf16.mxu0 0
    %1261 = vmatpush1.bf16.msra.mxu0 0
    %1262 = vmatprep.subr.bf16.mxu0 0
    %1263 = vmatpush1.bf16.msra.mxu0 0
    %1264 = vmatprep.subr.bf16.mxu0 0
    %1265 = vmatpush1.bf16.msra.mxu0 0
    %1266 = vmatprep.subr.bf16.mxu0 0
    %1267 = vmatpush1.bf16.msra.mxu0 0
    %1268 = vmatprep.subr.bf16.mxu0 0
    %1269 = vmatpush1.bf16.msra.mxu0 0
    %1270 = vmatprep.subr.bf16.mxu0 0
    %1271 = vmatpush1.bf16.msra.mxu0 0
    %1272 = vmatprep.mubr.bf16.mxu0 0
    %1273 = vmatmul.mubr.bf16.gmra.mrb[0].mxu0 %v1235
    %v1274 = vpop.f32.mrb[0].mxu0
    %v1275 = vadd.f32 0.0, %v1274
    %v1276 = vpop.f32.mrb[0].mxu0
    %v1277 = vpop.f32.mrb[0].mxu0
    %v1278 = vpop.f32.mrb[0].mxu0
    %1279 = vdwg.mxu0
    %v1280 = vpack.c.bf16 %v1275, %v1275
    %1281 = vmatprep.subr.bf16.mxu0 0
    %1282 = vmatpush1.bf16.msra.mxu0 %v929
    %1283 = vmatprep.subr.bf16.mxu0 0
    %1284 = vmatpush1.bf16.msra.mxu0 %v930
    %1285 = vmatprep.subr.bf16.mxu0 0
    %1286 = vmatpush1.bf16.msra.mxu0 %v931
    %1287 = vmatprep.subr.bf16.mxu0 0
    %1288 = vmatpush1.bf16.msra.mxu0 %v932
    %1289 = vmatprep.subr.bf16.mxu0 0
    %1290 = vmatpush1.bf16.msra.mxu0 %v933
    %1291 = vmatprep.subr.bf16.mxu0 0
    %1292 = vmatpush1.bf16.msra.mxu0 %v934
    %1293 = vmatprep.subr.bf16.mxu0 0
    %1294 = vmatpush1.bf16.msra.mxu0 %v935
    %1295 = vmatprep.subr.bf16.mxu0 0
    %1296 = vmatpush1.bf16.msra.mxu0 %v936
    %1297 = vmatprep.subr.bf16.mxu0 0
    %1298 = vmatpush1.bf16.msra.mxu0 0
    %1299 = vmatprep.subr.bf16.mxu0 0
    %1300 = vmatpush1.bf16.msra.mxu0 0
    %1301 = vmatprep.subr.bf16.mxu0 0
    %1302 = vmatpush1.bf16.msra.mxu0 0
    %1303 = vmatprep.subr.bf16.mxu0 0
    %1304 = vmatpush1.bf16.msra.mxu0 0
    %1305 = vmatprep.subr.bf16.mxu0 0
    %1306 = vmatpush1.bf16.msra.mxu0 0
    %1307 = vmatprep.subr.bf16.mxu0 0
    %1308 = vmatpush1.bf16.msra.mxu0 0
    %1309 = vmatprep.subr.bf16.mxu0 0
    %1310 = vmatpush1.bf16.msra.mxu0 0
    %1311 = vmatprep.subr.bf16.mxu0 0
    %1312 = vmatpush1.bf16.msra.mxu0 0
    %1313 = vmatprep.mubr.bf16.mxu0 0
    %1314 = vmatmul.mubr.bf16.gmra.mrb[0].mxu0 %v1280
    %v1315 = vpop.f32.mrb[0].mxu0
    %v1316 = vadd.f32 0.0, %v1315
    %v1317 = vpop.f32.mrb[0].mxu0
    %v1318 = vpop.f32.mrb[0].mxu0
    %v1319 = vpop.f32.mrb[0].mxu0
    %1320 = vdwg.mxu0
    %1321 = vmatprep.subr.bf16.mxu0 0
    %1322 = vmatpush1.bf16.msra.mxu0 %v1017
    %1323 = vmatprep.subr.bf16.mxu0 0
    %1324 = vmatpush1.bf16.msra.mxu0 %v1018
    %1325 = vmatprep.subr.bf16.mxu0 0
    %1326 = vmatpush1.bf16.msra.mxu0 %v1019
    %1327 = vmatprep.subr.bf16.mxu0 0
    %1328 = vmatpush1.bf16.msra.mxu0 %v1020
    %1329 = vmatprep.subr.bf16.mxu0 0
    %1330 = vmatpush1.bf16.msra.mxu0 %v1021
    %1331 = vmatprep.subr.bf16.mxu0 0
    %1332 = vmatpush1.bf16.msra.mxu0 %v1022
    %1333 = vmatprep.subr.bf16.mxu0 0
    %1334 = vmatpush1.bf16.msra.mxu0 %v1023
    %1335 = vmatprep.subr.bf16.mxu0 0
    %1336 = vmatpush1.bf16.msra.mxu0 %v1024
    %1337 = vmatprep.subr.bf16.mxu0 0
    %1338 = vmatpush1.bf16.msra.mxu0 0
    %1339 = vmatprep.subr.bf16.mxu0 0
    %1340 = vmatpush1.bf16.msra.mxu0 0
    %1341 = vmatprep.subr.bf16.mxu0 0
    %1342 = vmatpush1.bf16.msra.mxu0 0
    %1343 = vmatprep.subr.bf16.mxu0 0
    %1344 = vmatpush1.bf16.msra.mxu0 0
    %1345 = vmatprep.subr.bf16.mxu0 0
    %1346 = vmatpush1.bf16.msra.mxu0 0
    %1347 = vmatprep.subr.bf16.mxu0 0
    %1348 = vmatpush1.bf16.msra.mxu0 0
    %1349 = vmatprep.subr.bf16.mxu0 0
    %1350 = vmatpush1.bf16.msra.mxu0 0
    %1351 = vmatprep.subr.bf16.mxu0 0
    %1352 = vmatpush1.bf16.msra.mxu0 0
    %1353 = vmatprep.mubr.bf16.mxu0 0
    %1354 = vmatmul.mubr.bf16.gmra.mrb[0].mxu0 %v1176
    %v1355 = vpop.f32.mrb[0].mxu0
    %v1356 = vadd.f32 %v1316, %v1355
    %v1357 = vpop.f32.mrb[0].mxu0
    %v1358 = vpop.f32.mrb[0].mxu0
    %v1359 = vpop.f32.mrb[0].mxu0
    %1360 = vdwg.mxu0
    %v1361 = vld [vmem:[%s7] sm:$0x1]
    %v1362 = vlaneseq
    %v1363 = vshrl.u32 %v1362, 7
    %v1364 = vsub.s32 0, %v1363
    %v1365 = vrot.slane %v1361, %v1364
    %v1366 = vadd.f32 %v1068, %v1365
    %v1367 = vadd.f32 %v1356, %v1365
    %v1368 = vadd.f32 %v411, %v1366
    %v1369 = vadd.f32 %v414, %v1367
    %v1370 = vld [vmem:[%s7 + $0x1] sm:$0x1]
    %v1371 = vld [vmem:[%s7 + $0x2] sm:$0x1]
    %v1372 = vsel %vm522, %v1368, 0.0
    %1373 = vadd.xlane.f32.xlu0 %v1372
    %v1374 = vpop.xlane.xlu0 %1373
    %v1375 = vsel %vm522, %v1369, 0.0
    %1376 = vadd.xlane.f32.xlu0 %v1375
    %v1377 = vpop.xlane.xlu0 %1376
    %v1378 = vmul.f32 %v1374, 0.03125
    %v1379 = vmul.f32 %v1377, 0.03125
    %v1380 = vmul.f32 %v1368, %v1368
    %v1381 = vmul.f32 %v1369, %v1369
    %v1382 = vsel %vm522, %v1380, 0.0
    %1383 = vadd.xlane.f32.xlu0 %v1382
    %v1384 = vpop.xlane.xlu0 %1383
    %v1385 = vsel %vm522, %v1381, 0.0
    %1386 = vadd.xlane.f32.xlu0 %v1385
    %v1387 = vpop.xlane.xlu0 %1386
    %v1388 = vmul.f32 %v1384, 0.03125
    %v1389 = vmul.f32 %v1387, 0.03125
    %v1390 = vmul.f32 %v1378, %v1378
    %v1391 = vmul.f32 %v1379, %v1379
    %v1392 = vsub.f32 %v1388, %v1390
    %v1393 = vsub.f32 %v1389, %v1391
    %v1394 = vsub.f32 %v1368, %v1378
    %v1395 = vsub.f32 %v1369, %v1379
    %v1396 = vadd.f32 %v1392, 1e-05
    %v1397 = vadd.f32 %v1393, 1e-05
    %v1398 = vrsqrt.pop %v1396
    %v1399 = vrsqrt.pop %v1397
    %v1400 = vmul.f32 %v1394, %v1398
    %v1401 = vmul.f32 %v1395, %v1399
    %v1402 = vlaneseq
    %v1403 = vshrl.u32 %v1402, 7
    %v1404 = vsub.s32 0, %v1403
    %v1405 = vrot.slane %v1370, %v1404
    %v1406 = vmul.f32 %v1400, %v1405
    %v1407 = vmul.f32 %v1401, %v1405
    %v1408 = vlaneseq
    %v1409 = vshrl.u32 %v1408, 7
    %v1410 = vsub.s32 0, %v1409
    %v1411 = vrot.slane %v1371, %v1410
    %v1412 = vadd.f32 %v1406, %v1411
    %v1413 = vadd.f32 %v1407, %v1411
    %v1414 = vld [vmem:[%s5] sm:$0xf]
    %v1415 = vld [vmem:[%s5 + $0x4] sm:$0xf]
    %v1416 = vld [vmem:[%s5 + $0x8] sm:$0xf]
    %v1417 = vld [vmem:[%s5 + $0xc] sm:$0xf]
    %v1418 = vpack.c.bf16 %v1413, %v1412
    %v1419 = vld [vmem:[%s7 + $0x3] sm:$0x1]
    %v1420 = vlaneseq
    %v1421 = vshrl.u32 %v1420, 7
    %v1422 = vsub.s32 0, %v1421
    %v1423 = vrot.slane %v1419, %v1422
    %v1428 = vunpack.c.l.b16 %v1414
    %v1429 = vunpack.c.l.b16 %v1415
    %v1430 = vunpack.c.l.b16 %v1416
    %v1431 = vunpack.c.l.b16 %v1417
    %v1432 = vpack.c.b16 %v1429, %v1428
    %v1433 = vpack.c.b16 %v1431, %v1430
    %v1437 = vsel %vm522, %v1418, 0
    %1439 = vmatprep.subr.bf16.mxu0 0
    %1440 = vmatpush1.bf16.msra.mxu0 %v1432
    %1441 = vmatprep.subr.bf16.mxu0 0
    %1442 = vmatpush1.bf16.msra.mxu0 %v1433
    %1443 = vmatprep.subr.bf16.mxu0 0
    %1444 = vmatpush1.bf16.msra.mxu0 0
    %1445 = vmatprep.subr.bf16.mxu0 0
    %1446 = vmatpush1.bf16.msra.mxu0 0
    %1447 = vmatprep.subr.bf16.mxu0 0
    %1448 = vmatpush1.bf16.msra.mxu0 0
    %1449 = vmatprep.subr.bf16.mxu0 0
    %1450 = vmatpush1.bf16.msra.mxu0 0
    %1451 = vmatprep.subr.bf16.mxu0 0
    %1452 = vmatpush1.bf16.msra.mxu0 0
    %1453 = vmatprep.subr.bf16.mxu0 0
    %1454 = vmatpush1.bf16.msra.mxu0 0
    %1455 = vmatprep.subr.bf16.mxu0 0
    %1456 = vmatpush1.bf16.msra.mxu0 0
    %1457 = vmatprep.subr.bf16.mxu0 0
    %1458 = vmatpush1.bf16.msra.mxu0 0
    %1459 = vmatprep.subr.bf16.mxu0 0
    %1460 = vmatpush1.bf16.msra.mxu0 0
    %1461 = vmatprep.subr.bf16.mxu0 0
    %1462 = vmatpush1.bf16.msra.mxu0 0
    %1463 = vmatprep.subr.bf16.mxu0 0
    %1464 = vmatpush1.bf16.msra.mxu0 0
    %1465 = vmatprep.subr.bf16.mxu0 0
    %1466 = vmatpush1.bf16.msra.mxu0 0
    %1467 = vmatprep.subr.bf16.mxu0 0
    %1468 = vmatpush1.bf16.msra.mxu0 0
    %1469 = vmatprep.subr.bf16.mxu0 0
    %1470 = vmatpush1.bf16.msra.mxu0 0
    %1471 = vmatprep.mubr.bf16.mxu0 0
    %1472 = vmatmul.mubr.bf16.gmra.mrb[0].mxu0 %v1437
    %v1473 = vpop.f32.mrb[0].mxu0
    %v1474 = vadd.f32 %v1423, %v1473
    %v1475 = vpop.f32.mrb[0].mxu0
    %v1476 = vpop.f32.mrb[0].mxu0
    %v1477 = vadd.f32 %v1423, %v1476
    %v1478 = vpop.f32.mrb[0].mxu0
    %1479 = vdwg.mxu0
    %v1480 = vmul.f32 %v1474, 0.5
    %v1481 = vmul.f32 %v1477, 0.5
    %v1482 = vmul.f32 %v1474, 0.044715
    %v1483 = vmul.f32 %v1477, 0.044715
    %v1484 = vmul.f32 %v1482, %v1474
    %v1485 = vmul.f32 %v1483, %v1477
    %v1486 = vmul.f32 %v1484, %v1474
    %v1487 = vmul.f32 %v1485, %v1477
    %v1488 = vadd.f32 %v1474, %v1486
    %v1489 = vadd.f32 %v1477, %v1487
    %v1490 = vmul.f32 %v1488, 0.7978846
    %v1491 = vmul.f32 %v1489, 0.7978846
    %v1492 = vtanh.pop %v1490
    %v1493 = vtanh.pop %v1491
    %v1494 = vadd.f32 %v1492, 1.0
    %v1495 = vadd.f32 %v1493, 1.0
    %v1496 = vmul.f32 %v1480, %v1494
    %v1497 = vmul.f32 %v1481, %v1495
    %v1498 = vld [vmem:[%s6] sm:$0xf]
    %v1499 = vld [vmem:[%s6 + $0x4] sm:$0xf]
    %v1500 = vld [vmem:[%s6 + $0x8] sm:$0xf]
    %v1501 = vld [vmem:[%s6 + $0xc] sm:$0xf]
    %v1502 = vld [vmem:[%s6 + $0x10] sm:$0xf]
    %v1503 = vld [vmem:[%s6 + $0x14] sm:$0xf]
    %v1504 = vld [vmem:[%s6 + $0x18] sm:$0xf]
    %v1505 = vld [vmem:[%s6 + $0x1c] sm:$0xf]
    %v1506 = vpack.c.bf16 %v1497, %v1496
    %v1507 = vld [vmem:[%s7 + $0x4] sm:$0x1]
    %v1508 = vlaneseq
    %v1509 = vshrl.u32 %v1508, 7
    %v1510 = vsub.s32 0, %v1509
    %v1511 = vrot.slane %v1507, %v1510
    %v1520 = vunpack.c.l.b16 %v1498
    %v1521 = vunpack.c.l.b16 %v1499
    %v1522 = vunpack.c.l.b16 %v1500
    %v1523 = vunpack.c.l.b16 %v1501
    %v1524 = vunpack.c.l.b16 %v1502
    %v1525 = vunpack.c.l.b16 %v1503
    %v1526 = vunpack.c.l.b16 %v1504
    %v1527 = vunpack.c.l.b16 %v1505
    %v1528 = vpack.c.b16 %v1521, %v1520
    %v1529 = vpack.c.b16 %v1523, %v1522
    %v1530 = vpack.c.b16 %v1525, %v1524
    %v1531 = vpack.c.b16 %v1527, %v1526
    %vm1536 = vcmask 523264
    %v1538 = vsel %vm1536, %v1506, 0
    %1540 = vmatprep.subr.bf16.mxu0 0
    %1541 = vmatpush1.bf16.msra.mxu0 %v1528
    %1542 = vmatprep.subr.bf16.mxu0 0
    %1543 = vmatpush1.bf16.msra.mxu0 %v1529
    %1544 = vmatprep.subr.bf16.mxu0 0
    %1545 = vmatpush1.bf16.msra.mxu0 %v1530
    %1546 = vmatprep.subr.bf16.mxu0 0
    %1547 = vmatpush1.bf16.msra.mxu0 %v1531
    %1548 = vmatprep.subr.bf16.mxu0 0
    %1549 = vmatpush1.bf16.msra.mxu0 0
    %1550 = vmatprep.subr.bf16.mxu0 0
    %1551 = vmatpush1.bf16.msra.mxu0 0
    %1552 = vmatprep.subr.bf16.mxu0 0
    %1553 = vmatpush1.bf16.msra.mxu0 0
    %1554 = vmatprep.subr.bf16.mxu0 0
    %1555 = vmatpush1.bf16.msra.mxu0 0
    %1556 = vmatprep.subr.bf16.mxu0 0
    %1557 = vmatpush1.bf16.msra.mxu0 0
    %1558 = vmatprep.subr.bf16.mxu0 0
    %1559 = vmatpush1.bf16.msra.mxu0 0
    %1560 = vmatprep.subr.bf16.mxu0 0
    %1561 = vmatpush1.bf16.msra.mxu0 0
    %1562 = vmatprep.subr.bf16.mxu0 0
    %1563 = vmatpush1.bf16.msra.mxu0 0
    %1564 = vmatprep.subr.bf16.mxu0 0
    %1565 = vmatpush1.bf16.msra.mxu0 0
    %1566 = vmatprep.subr.bf16.mxu0 0
    %1567 = vmatpush1.bf16.msra.mxu0 0
    %1568 = vmatprep.subr.bf16.mxu0 0
    %1569 = vmatpush1.bf16.msra.mxu0 0
    %1570 = vmatprep.subr.bf16.mxu0 0
    %1571 = vmatpush1.bf16.msra.mxu0 0
    %1572 = vmatprep.mubr.bf16.mxu0 0
    %1573 = vmatmul.mubr.bf16.gmra.mrb[0].mxu0 %v1538
    %v1574 = vpop.f32.mrb[0].mxu0
    %v1575 = vadd.f32 %v1511, %v1574
    %v1576 = vpop.f32.mrb[0].mxu0
    %v1577 = vpop.f32.mrb[0].mxu0
    %v1578 = vadd.f32 %v1511, %v1577
    %v1579 = vpop.f32.mrb[0].mxu0
    %1580 = vdwg.mxu0
    %v1581 = vadd.f32 %v1412, %v1575
    %v1582 = vadd.f32 %v1413, %v1578
    %v1583 = vld [vmem:[%s7 + $0x5] sm:$0x1]
    %v1584 = vld [vmem:[%s7 + $0x6] sm:$0x1]
    %v1585 = vsel %vm522, %v1581, 0.0
    %1586 = vadd.xlane.f32.xlu0 %v1585
    %v1587 = vpop.xlane.xlu0 %1586
    %v1588 = vsel %vm522, %v1582, 0.0
    %1589 = vadd.xlane.f32.xlu0 %v1588
    %v1590 = vpop.xlane.xlu0 %1589
    %v1591 = vmul.f32 %v1587, 0.03125
    %v1592 = vmul.f32 %v1590, 0.03125
    %v1593 = vmul.f32 %v1581, %v1581
    %v1594 = vmul.f32 %v1582, %v1582
    %v1595 = vsel %vm522, %v1593, 0.0
    %1596 = vadd.xlane.f32.xlu0 %v1595
    %v1597 = vpop.xlane.xlu0 %1596
    %v1598 = vsel %vm522, %v1594, 0.0
    %1599 = vadd.xlane.f32.xlu0 %v1598
    %v1600 = vpop.xlane.xlu0 %1599
    %v1601 = vmul.f32 %v1597, 0.03125
    %v1602 = vmul.f32 %v1600, 0.03125
    %v1603 = vmul.f32 %v1591, %v1591
    %v1604 = vmul.f32 %v1592, %v1592
    %v1605 = vsub.f32 %v1601, %v1603
    %v1606 = vsub.f32 %v1602, %v1604
    %v1607 = vsub.f32 %v1581, %v1591
    %v1608 = vsub.f32 %v1582, %v1592
    %v1609 = vadd.f32 %v1605, 1e-05
    %v1610 = vadd.f32 %v1606, 1e-05
    %v1611 = vrsqrt.pop %v1609
    %v1612 = vrsqrt.pop %v1610
    %v1613 = vmul.f32 %v1607, %v1611
    %v1614 = vmul.f32 %v1608, %v1612
    %v1615 = vlaneseq
    %v1616 = vshrl.u32 %v1615, 7
    %v1617 = vsub.s32 0, %v1616
    %v1618 = vrot.slane %v1583, %v1617
    %v1619 = vmul.f32 %v1613, %v1618
    %v1620 = vmul.f32 %v1614, %v1618
    %v1621 = vlaneseq
    %v1622 = vshrl.u32 %v1621, 7
    %v1623 = vsub.s32 0, %v1622
    %v1624 = vrot.slane %v1584, %v1623
    %v1625 = vadd.f32 %v1619, %v1624
    %v1626 = vadd.f32 %v1620, %v1624
    %s1627 = scalar_lea.vmem %s2, 96
    %v1628 = vld [vmem:[%s1627] sm:$0xff]
    %v1629 = vld [vmem:[%s1627 + $0x8] sm:$0xff]
    %v1630 = vld [vmem:[%s1627 + $0x10] sm:$0xff]
    %v1631 = vld [vmem:[%s1627 + $0x18] sm:$0xff]
    %v1632 = vld [vmem:[%s1627 + $0x20] sm:$0xff]
    %v1633 = vld [vmem:[%s1627 + $0x28] sm:$0xff]
    %v1634 = vld [vmem:[%s1627 + $0x30] sm:$0xff]
    %v1635 = vld [vmem:[%s1627 + $0x38] sm:$0xff]
    %v1636 = vld [vmem:[%s1627 + $0x40] sm:$0xff]
    %v1637 = vld [vmem:[%s1627 + $0x48] sm:$0xff]
    %v1638 = vld [vmem:[%s1627 + $0x50] sm:$0xff]
    %v1639 = vld [vmem:[%s1627 + $0x58] sm:$0xff]
    %v1640 = vpack.c.bf16 %v1626, %v1625
    %s1641 = scalar_lea.vmem %s3, 6
    %v1642 = vld [vmem:[%s1641] sm:$0x3f]
    %v1644 = vlaneseq
    %v1645 = vshrl.u32 %v1644, 7
    %v1646 = vsub.s32 0, %v1645
    %v1647 = vrot.slane %v1642, %v1646
    %v1648 = vlaneseq
    %v1649 = vshrl.u32 %v1648, 7
    %v1650 = vsub.s32 1, %v1649
    %v1651 = vrot.slane %v1642, %v1650
    %v1652 = vlaneseq
    %v1653 = vshrl.u32 %v1652, 7
    %v1654 = vsub.s32 2, %v1653
    %v1655 = vrot.slane %v1642, %v1654
    %v1656 = vlaneseq
    %v1657 = vshrl.u32 %v1656, 7
    %v1658 = vsub.s32 3, %v1657
    %v1659 = vrot.slane %v1642, %v1658
    %v1660 = vlaneseq
    %v1661 = vshrl.u32 %v1660, 7
    %v1662 = vsub.s32 4, %v1661
    %v1663 = vrot.slane %v1642, %v1662
    %v1664 = vlaneseq
    %v1665 = vshrl.u32 %v1664, 7
    %v1666 = vsub.s32 5, %v1665
    %v1667 = vrot.slane %v1642, %v1666
    %v1686 = vunpack.c.l.b16 %v1628
    %v1687 = vunpack.c.h.b16 %v1628
    %v1688 = vunpack.c.l.b16 %v1629
    %v1689 = vunpack.c.h.b16 %v1629
    %v1690 = vunpack.c.l.b16 %v1630
    %v1691 = vunpack.c.h.b16 %v1630
    %v1692 = vunpack.c.l.b16 %v1631
    %v1693 = vunpack.c.h.b16 %v1631
    %v1694 = vunpack.c.l.b16 %v1632
    %v1695 = vunpack.c.h.b16 %v1632
    %v1696 = vunpack.c.l.b16 %v1633
    %v1697 = vunpack.c.h.b16 %v1633
    %v1698 = vunpack.c.l.b16 %v1634
    %v1699 = vunpack.c.h.b16 %v1634
    %v1700 = vunpack.c.l.b16 %v1635
    %v1701 = vunpack.c.h.b16 %v1635
    %v1702 = vunpack.c.l.b16 %v1636
    %v1703 = vunpack.c.h.b16 %v1636
    %v1704 = vunpack.c.l.b16 %v1637
    %v1705 = vunpack.c.h.b16 %v1637
    %v1706 = vunpack.c.l.b16 %v1638
    %v1707 = vunpack.c.h.b16 %v1638
    %v1708 = vunpack.c.l.b16 %v1639
    %v1709 = vunpack.c.h.b16 %v1639
    %v1710 = vpack.c.b16 %v1692, %v1686
    %v1711 = vpack.c.b16 %v1693, %v1687
    %v1712 = vpack.c.b16 %v1694, %v1688
    %v1713 = vpack.c.b16 %v1695, %v1689
    %v1714 = vpack.c.b16 %v1696, %v1690
    %v1715 = vpack.c.b16 %v1697, %v1691
    %v1716 = vpack.c.b16 %v1704, %v1698
    %v1717 = vpack.c.b16 %v1705, %v1699
    %v1718 = vpack.c.b16 %v1706, %v1700
    %v1719 = vpack.c.b16 %v1707, %v1701
    %v1720 = vpack.c.b16 %v1708, %v1702
    %v1721 = vpack.c.b16 %v1709, %v1703
    %v1735 = vsel %vm522, %v1640, 0
    %1737 = vmatprep.subr.bf16.mxu0 %v1711
    %1738 = vmatpush1.bf16.msra.mxu0 %v1710
    %1739 = vmatprep.subr.bf16.mxu0 %v1717
    %1740 = vmatpush1.bf16.msra.mxu0 %v1716
    %1741 = vmatprep.subr.bf16.mxu0 0
    %1742 = vmatpush1.bf16.msra.mxu0 0
    %1743 = vmatprep.subr.bf16.mxu0 0
    %1744 = vmatpush1.bf16.msra.mxu0 0
    %1745 = vmatprep.subr.bf16.mxu0 0
    %1746 = vmatpush1.bf16.msra.mxu0 0
    %1747 = vmatprep.subr.bf16.mxu0 0
    %1748 = vmatpush1.bf16.msra.mxu0 0
    %1749 = vmatprep.subr.bf16.mxu0 0
    %1750 = vmatpush1.bf16.msra.mxu0 0
    %1751 = vmatprep.subr.bf16.mxu0 0
    %1752 = vmatpush1.bf16.msra.mxu0 0
    %1753 = vmatprep.subr.bf16.mxu0 0
    %1754 = vmatpush1.bf16.msra.mxu0 0
    %1755 = vmatprep.subr.bf16.mxu0 0
    %1756 = vmatpush1.bf16.msra.mxu0 0
    %1757 = vmatprep.subr.bf16.mxu0 0
    %1758 = vmatpush1.bf16.msra.mxu0 0
    %1759 = vmatprep.subr.bf16.mxu0 0
    %1760 = vmatpush1.bf16.msra.mxu0 0
    %1761 = vmatprep.subr.bf16.mxu0 0
    %1762 = vmatpush1.bf16.msra.mxu0 0
    %1763 = vmatprep.subr.bf16.mxu0 0
    %1764 = vmatpush1.bf16.msra.mxu0 0
    %1765 = vmatprep.subr.bf16.mxu0 0
    %1766 = vmatpush1.bf16.msra.mxu0 0
    %1767 = vmatprep.subr.bf16.mxu0 0
    %1768 = vmatpush1.bf16.msra.mxu0 0
    %1769 = vmatprep.mubr.bf16.mxu0 0
    %1770 = vmatmul.mubr.bf16.gmra.mrb[0].mxu0 %v1735
    %v1771 = vpop.f32.mrb[0].mxu0
    %v1772 = vadd.f32 %v1647, %v1771
    %v1773 = vpop.f32.mrb[0].mxu0
    %v1774 = vadd.f32 %v1651, %v1773
    %v1775 = vpop.f32.mrb[0].mxu0
    %v1776 = vadd.f32 %v1647, %v1775
    %v1777 = vpop.f32.mrb[0].mxu0
    %v1778 = vadd.f32 %v1651, %v1777
    %1779 = vdwg.mxu0
    %1780 = vmatprep.subr.bf16.mxu0 %v1713
    %1781 = vmatpush1.bf16.msra.mxu0 %v1712
    %1782 = vmatprep.subr.bf16.mxu0 %v1719
    %1783 = vmatpush1.bf16.msra.mxu0 %v1718
    %1784 = vmatprep.subr.bf16.mxu0 0
    %1785 = vmatpush1.bf16.msra.mxu0 0
    %1786 = vmatprep.subr.bf16.mxu0 0
    %1787 = vmatpush1.bf16.msra.mxu0 0
    %1788 = vmatprep.subr.bf16.mxu0 0
    %1789 = vmatpush1.bf16.msra.mxu0 0
    %1790 = vmatprep.subr.bf16.mxu0 0
    %1791 = vmatpush1.bf16.msra.mxu0 0
    %1792 = vmatprep.subr.bf16.mxu0 0
    %1793 = vmatpush1.bf16.msra.mxu0 0
    %1794 = vmatprep.subr.bf16.mxu0 0
    %1795 = vmatpush1.bf16.msra.mxu0 0
    %1796 = vmatprep.subr.bf16.mxu0 0
    %1797 = vmatpush1.bf16.msra.mxu0 0
    %1798 = vmatprep.subr.bf16.mxu0 0
    %1799 = vmatpush1.bf16.msra.mxu0 0
    %1800 = vmatprep.subr.bf16.mxu0 0
    %1801 = vmatpush1.bf16.msra.mxu0 0
    %1802 = vmatprep.subr.bf16.mxu0 0
    %1803 = vmatpush1.bf16.msra.mxu0 0
    %1804 = vmatprep.subr.bf16.mxu0 0
    %1805 = vmatpush1.bf16.msra.mxu0 0
    %1806 = vmatprep.subr.bf16.mxu0 0
    %1807 = vmatpush1.bf16.msra.mxu0 0
    %1808 = vmatprep.subr.bf16.mxu0 0
    %1809 = vmatpush1.bf16.msra.mxu0 0
    %1810 = vmatprep.subr.bf16.mxu0 0
    %1811 = vmatpush1.bf16.msra.mxu0 0
    %1812 = vmatprep.mubr.bf16.mxu0 0
    %1813 = vmatmul.mubr.bf16.gmra.mrb[0].mxu0 %v1735
    %v1814 = vpop.f32.mrb[0].mxu0
    %v1815 = vadd.f32 %v1655, %v1814
    %v1816 = vpop.f32.mrb[0].mxu0
    %v1817 = vadd.f32 %v1659, %v1816
    %v1818 = vpop.f32.mrb[0].mxu0
    %v1819 = vadd.f32 %v1655, %v1818
    %v1820 = vpop.f32.mrb[0].mxu0
    %v1821 = vadd.f32 %v1659, %v1820
    %1822 = vdwg.mxu0
    %1823 = vmatprep.subr.bf16.mxu0 %v1715
    %1824 = vmatpush1.bf16.msra.mxu0 %v1714
    %1825 = vmatprep.subr.bf16.mxu0 %v1721
    %1826 = vmatpush1.bf16.msra.mxu0 %v1720
    %1827 = vmatprep.subr.bf16.mxu0 0
    %1828 = vmatpush1.bf16.msra.mxu0 0
    %1829 = vmatprep.subr.bf16.mxu0 0
    %1830 = vmatpush1.bf16.msra.mxu0 0
    %1831 = vmatprep.subr.bf16.mxu0 0
    %1832 = vmatpush1.bf16.msra.mxu0 0
    %1833 = vmatprep.subr.bf16.mxu0 0
    %1834 = vmatpush1.bf16.msra.mxu0 0
    %1835 = vmatprep.subr.bf16.mxu0 0
    %1836 = vmatpush1.bf16.msra.mxu0 0
    %1837 = vmatprep.subr.bf16.mxu0 0
    %1838 = vmatpush1.bf16.msra.mxu0 0
    %1839 = vmatprep.subr.bf16.mxu0 0
    %1840 = vmatpush1.bf16.msra.mxu0 0
    %1841 = vmatprep.subr.bf16.mxu0 0
    %1842 = vmatpush1.bf16.msra.mxu0 0
    %1843 = vmatprep.subr.bf16.mxu0 0
    %1844 = vmatpush1.bf16.msra.mxu0 0
    %1845 = vmatprep.subr.bf16.mxu0 0
    %1846 = vmatpush1.bf16.msra.mxu0 0
    %1847 = vmatprep.subr.bf16.mxu0 0
    %1848 = vmatpush1.bf16.msra.mxu0 0
    %1849 = vmatprep.subr.bf16.mxu0 0
    %1850 = vmatpush1.bf16.msra.mxu0 0
    %1851 = vmatprep.subr.bf16.mxu0 0
    %1852 = vmatpush1.bf16.msra.mxu0 0
    %1853 = vmatprep.subr.bf16.mxu0 0
    %1854 = vmatpush1.bf16.msra.mxu0 0
    %1855 = vmatprep.mubr.bf16.mxu0 0
    %1856 = vmatmul.mubr.bf16.gmra.mrb[0].mxu0 %v1735
    %v1857 = vpop.f32.mrb[0].mxu0
    %v1858 = vadd.f32 %v1663, %v1857
    %v1859 = vpop.f32.mrb[0].mxu0
    %v1860 = vadd.f32 %v1667, %v1859
    %v1861 = vpop.f32.mrb[0].mxu0
    %v1862 = vadd.f32 %v1663, %v1861
    %v1863 = vpop.f32.mrb[0].mxu0
    %v1864 = vadd.f32 %v1667, %v1863
    %1865 = vdwg.mxu0
    %s1866 = scalar_lea.vmem %s4, 128
    %v1867 = vld [vmem:[%s1866] sm:$0xf]
    %v1868 = vld [vmem:[%s1866 + $0x4] sm:$0xf]
    %v1869 = vld [vmem:[%s1866 + $0x8] sm:$0xf]
    %v1870 = vld [vmem:[%s1866 + $0xc] sm:$0xf]
    %v1871 = vld [vmem:[%s1866 + $0x10] sm:$0xf]
    %v1872 = vld [vmem:[%s1866 + $0x14] sm:$0xf]
    %v1873 = vld [vmem:[%s1866 + $0x18] sm:$0xf]
    %v1874 = vld [vmem:[%s1866 + $0x1c] sm:$0xf]
    %v1875 = vld [vmem:[%s1866 + $0x20] sm:$0xf]
    %v1876 = vld [vmem:[%s1866 + $0x24] sm:$0xf]
    %v1877 = vld [vmem:[%s1866 + $0x28] sm:$0xf]
    %v1878 = vld [vmem:[%s1866 + $0x2c] sm:$0xf]
    %v1879 = vld [vmem:[%s1866 + $0x30] sm:$0xf]
    %v1880 = vld [vmem:[%s1866 + $0x34] sm:$0xf]
    %v1881 = vld [vmem:[%s1866 + $0x38] sm:$0xf]
    %v1882 = vld [vmem:[%s1866 + $0x3c] sm:$0xf]
    %v1883 = vld [vmem:[%s1866 + $0x40] sm:$0xf]
    %v1884 = vld [vmem:[%s1866 + $0x44] sm:$0xf]
    %v1885 = vld [vmem:[%s1866 + $0x48] sm:$0xf]
    %v1886 = vld [vmem:[%s1866 + $0x4c] sm:$0xf]
    %v1887 = vld [vmem:[%s1866 + $0x50] sm:$0xf]
    %v1888 = vld [vmem:[%s1866 + $0x54] sm:$0xf]
    %v1889 = vld [vmem:[%s1866 + $0x58] sm:$0xf]
    %v1890 = vld [vmem:[%s1866 + $0x5c] sm:$0xf]
    %v1891 = vld [vmem:[%s1866 + $0x60] sm:$0xf]
    %v1892 = vld [vmem:[%s1866 + $0x64] sm:$0xf]
    %v1893 = vld [vmem:[%s1866 + $0x68] sm:$0xf]
    %v1894 = vld [vmem:[%s1866 + $0x6c] sm:$0xf]
    %v1895 = vld [vmem:[%s1866 + $0x70] sm:$0xf]
    %v1896 = vld [vmem:[%s1866 + $0x74] sm:$0xf]
    %v1897 = vld [vmem:[%s1866 + $0x78] sm:$0xf]
    %v1898 = vld [vmem:[%s1866 + $0x7c] sm:$0xf]
    %v1899 = vpack.c.bf16 %v1772, %v1772
    %v1900 = vpack.c.bf16 %v1815, %v1815
    %1901 = vmatprep.subr.bf16.mxu0 0
    %1902 = vmatpush1.bf16.xpose.msra.mxu0 %v1900
    %1903 = vmatprep.subr.bf16.mxu0 0
    %1904 = vmatpush1.bf16.xpose.msra.mxu0 0
    %1905 = vmatprep.subr.bf16.mxu0 0
    %1906 = vmatpush1.bf16.xpose.msra.mxu0 0
    %1907 = vmatprep.subr.bf16.mxu0 0
    %1908 = vmatpush1.bf16.xpose.msra.mxu0 0
    %1909 = vmatprep.subr.bf16.mxu0 0
    %1910 = vmatpush1.bf16.xpose.msra.mxu0 0
    %1911 = vmatprep.subr.bf16.mxu0 0
    %1912 = vmatpush1.bf16.xpose.msra.mxu0 0
    %1913 = vmatprep.subr.bf16.mxu0 0
    %1914 = vmatpush1.bf16.xpose.msra.mxu0 0
    %1915 = vmatprep.subr.bf16.mxu0 0
    %1916 = vmatpush1.bf16.xpose.msra.mxu0 0
    %1917 = vmatprep.subr.bf16.mxu0 0
    %1918 = vmatpush1.bf16.xpose.msra.mxu0 0
    %1919 = vmatprep.subr.bf16.mxu0 0
    %1920 = vmatpush1.bf16.xpose.msra.mxu0 0
    %1921 = vmatprep.subr.bf16.mxu0 0
    %1922 = vmatpush1.bf16.xpose.msra.mxu0 0
    %1923 = vmatprep.subr.bf16.mxu0 0
    %1924 = vmatpush1.bf16.xpose.msra.mxu0 0
    %1925 = vmatprep.subr.bf16.mxu0 0
    %1926 = vmatpush1.bf16.xpose.msra.mxu0 0
    %1927 = vmatprep.subr.bf16.mxu0 0
    %1928 = vmatpush1.bf16.xpose.msra.mxu0 0
    %1929 = vmatprep.subr.bf16.mxu0 0
    %1930 = vmatpush1.bf16.xpose.msra.mxu0 0
    %1931 = vmatprep.subr.bf16.mxu0 0
    %1932 = vmatpush1.bf16.xpose.msra.mxu0 0
    %1933 = vmatprep.mubr.bf16.mxu0 0
    %1934 = vmatmul.mubr.bf16.gmra.mrb[0].mxu0 %v1899
    %v1935 = vpop.f32.mrb[0].mxu0
    %v1936 = vadd.f32 0.0, %v1935
    %v1937 = vpop.f32.mrb[0].mxu0
    %v1938 = vpop.f32.mrb[0].mxu0
    %v1939 = vpop.f32.mrb[0].mxu0
    %1940 = vdwg.mxu0
    %v1941 = vmul.f32 %v1936, 0.25
    %v1942 = vadd.f32 %v1941, %v115
    %v1943 = vsel %vm731, %v1942, -inf
    %1944 = vmax.xlane.f32.xlu0 %v1943
    %v1945 = vpop.xlane.xlu0 %1944
    %v1946 = vsub.f32 %v1942, %v1945
    %v1947 = vmul.f32 %v1946, 1.442695
    %v1948 = vpow.pop %v1947
    %v1949 = vsel %vm731, %v1948, 0.0
    %1950 = vadd.xlane.f32.xlu0 %v1949
    %v1951 = vpop.xlane.xlu0 %1950
    %v1952 = vrcp.pop %v1951
    %v1953 = vmul.f32 %v1948, %v1952
    %v1954 = vpack.c.bf16 %v1953, %v1953
    %v1955 = vpack.c.bf16 %v1858, %v1858
    %v1957 = vsel %vm731, %v1954, 0
    %v1960 = vsel %vm748, %v1955, 0
    %1962 = vmatprep.subr.bf16.mxu0 0
    %1963 = vmatpush1.bf16.msra.mxu0 %v1960
    %1964 = vmatprep.subr.bf16.mxu0 0
    %1965 = vmatpush1.bf16.msra.mxu0 0
    %1966 = vmatprep.subr.bf16.mxu0 0
    %1967 = vmatpush1.bf16.msra.mxu0 0
    %1968 = vmatprep.subr.bf16.mxu0 0
    %1969 = vmatpush1.bf16.msra.mxu0 0
    %1970 = vmatprep.subr.bf16.mxu0 0
    %1971 = vmatpush1.bf16.msra.mxu0 0
    %1972 = vmatprep.subr.bf16.mxu0 0
    %1973 = vmatpush1.bf16.msra.mxu0 0
    %1974 = vmatprep.subr.bf16.mxu0 0
    %1975 = vmatpush1.bf16.msra.mxu0 0
    %1976 = vmatprep.subr.bf16.mxu0 0
    %1977 = vmatpush1.bf16.msra.mxu0 0
    %1978 = vmatprep.subr.bf16.mxu0 0
    %1979 = vmatpush1.bf16.msra.mxu0 0
    %1980 = vmatprep.subr.bf16.mxu0 0
    %1981 = vmatpush1.bf16.msra.mxu0 0
    %1982 = vmatprep.subr.bf16.mxu0 0
    %1983 = vmatpush1.bf16.msra.mxu0 0
    %1984 = vmatprep.subr.bf16.mxu0 0
    %1985 = vmatpush1.bf16.msra.mxu0 0
    %1986 = vmatprep.subr.bf16.mxu0 0
    %1987 = vmatpush1.bf16.msra.mxu0 0
    %1988 = vmatprep.subr.bf16.mxu0 0
    %1989 = vmatpush1.bf16.msra.mxu0 0
    %1990 = vmatprep.subr.bf16.mxu0 0
    %1991 = vmatpush1.bf16.msra.mxu0 0
    %1992 = vmatprep.subr.bf16.mxu0 0
    %1993 = vmatpush1.bf16.msra.mxu0 0
    %1994 = vmatprep.mubr.bf16.mxu0 0
    %1995 = vmatmul.mubr.bf16.gmra.mrb[0].mxu0 %v1957
    %v1996 = vpop.f32.mrb[0].mxu0
    %v1997 = vadd.f32 0.0, %v1996
    %v1998 = vpop.f32.mrb[0].mxu0
    %v1999 = vpop.f32.mrb[0].mxu0
    %v2000 = vpop.f32.mrb[0].mxu0
    %2001 = vdwg.mxu0
    %v2002 = vpack.c.bf16 %v1997, %v1997
    %v2003 = vpack.c.bf16 %v1774, %v1774
    %v2004 = vpack.c.bf16 %v1817, %v1817
    %2005 = vmatprep.subr.bf16.mxu0 0
    %2006 = vmatpush1.bf16.xpose.msra.mxu0 %v2004
    %2007 = vmatprep.subr.bf16.mxu0 0
    %2008 = vmatpush1.bf16.xpose.msra.mxu0 0
    %2009 = vmatprep.subr.bf16.mxu0 0
    %2010 = vmatpush1.bf16.xpose.msra.mxu0 0
    %2011 = vmatprep.subr.bf16.mxu0 0
    %2012 = vmatpush1.bf16.xpose.msra.mxu0 0
    %2013 = vmatprep.subr.bf16.mxu0 0
    %2014 = vmatpush1.bf16.xpose.msra.mxu0 0
    %2015 = vmatprep.subr.bf16.mxu0 0
    %2016 = vmatpush1.bf16.xpose.msra.mxu0 0
    %2017 = vmatprep.subr.bf16.mxu0 0
    %2018 = vmatpush1.bf16.xpose.msra.mxu0 0
    %2019 = vmatprep.subr.bf16.mxu0 0
    %2020 = vmatpush1.bf16.xpose.msra.mxu0 0
    %2021 = vmatprep.subr.bf16.mxu0 0
    %2022 = vmatpush1.bf16.xpose.msra.mxu0 0
    %2023 = vmatprep.subr.bf16.mxu0 0
    %2024 = vmatpush1.bf16.xpose.msra.mxu0 0
    %2025 = vmatprep.subr.bf16.mxu0 0
    %2026 = vmatpush1.bf16.xpose.msra.mxu0 0
    %2027 = vmatprep.subr.bf16.mxu0 0
    %2028 = vmatpush1.bf16.xpose.msra.mxu0 0
    %2029 = vmatprep.subr.bf16.mxu0 0
    %2030 = vmatpush1.bf16.xpose.msra.mxu0 0
    %2031 = vmatprep.subr.bf16.mxu0 0
    %2032 = vmatpush1.bf16.xpose.msra.mxu0 0
    %2033 = vmatprep.subr.bf16.mxu0 0
    %2034 = vmatpush1.bf16.xpose.msra.mxu0 0
    %2035 = vmatprep.subr.bf16.mxu0 0
    %2036 = vmatpush1.bf16.xpose.msra.mxu0 0
    %2037 = vmatprep.mubr.bf16.mxu0 0
    %2038 = vmatmul.mubr.bf16.gmra.mrb[0].mxu0 %v2003
    %v2039 = vpop.f32.mrb[0].mxu0
    %v2040 = vadd.f32 0.0, %v2039
    %v2041 = vpop.f32.mrb[0].mxu0
    %v2042 = vpop.f32.mrb[0].mxu0
    %v2043 = vpop.f32.mrb[0].mxu0
    %2044 = vdwg.mxu0
    %v2045 = vmul.f32 %v2040, 0.25
    %v2046 = vadd.f32 %v2045, %v115
    %v2047 = vsel %vm731, %v2046, -inf
    %2048 = vmax.xlane.f32.xlu0 %v2047
    %v2049 = vpop.xlane.xlu0 %2048
    %v2050 = vsub.f32 %v2046, %v2049
    %v2051 = vmul.f32 %v2050, 1.442695
    %v2052 = vpow.pop %v2051
    %v2053 = vsel %vm731, %v2052, 0.0
    %2054 = vadd.xlane.f32.xlu0 %v2053
    %v2055 = vpop.xlane.xlu0 %2054
    %v2056 = vrcp.pop %v2055
    %v2057 = vmul.f32 %v2052, %v2056
    %v2058 = vpack.c.bf16 %v2057, %v2057
    %v2059 = vpack.c.bf16 %v1860, %v1860
    %v2061 = vsel %vm731, %v2058, 0
    %v2064 = vsel %vm748, %v2059, 0
    %2066 = vmatprep.subr.bf16.mxu0 0
    %2067 = vmatpush1.bf16.msra.mxu0 %v2064
    %2068 = vmatprep.subr.bf16.mxu0 0
    %2069 = vmatpush1.bf16.msra.mxu0 0
    %2070 = vmatprep.subr.bf16.mxu0 0
    %2071 = vmatpush1.bf16.msra.mxu0 0
    %2072 = vmatprep.subr.bf16.mxu0 0
    %2073 = vmatpush1.bf16.msra.mxu0 0
    %2074 = vmatprep.subr.bf16.mxu0 0
    %2075 = vmatpush1.bf16.msra.mxu0 0
    %2076 = vmatprep.subr.bf16.mxu0 0
    %2077 = vmatpush1.bf16.msra.mxu0 0
    %2078 = vmatprep.subr.bf16.mxu0 0
    %2079 = vmatpush1.bf16.msra.mxu0 0
    %2080 = vmatprep.subr.bf16.mxu0 0
    %2081 = vmatpush1.bf16.msra.mxu0 0
    %2082 = vmatprep.subr.bf16.mxu0 0
    %2083 = vmatpush1.bf16.msra.mxu0 0
    %2084 = vmatprep.subr.bf16.mxu0 0
    %2085 = vmatpush1.bf16.msra.mxu0 0
    %2086 = vmatprep.subr.bf16.mxu0 0
    %2087 = vmatpush1.bf16.msra.mxu0 0
    %2088 = vmatprep.subr.bf16.mxu0 0
    %2089 = vmatpush1.bf16.msra.mxu0 0
    %2090 = vmatprep.subr.bf16.mxu0 0
    %2091 = vmatpush1.bf16.msra.mxu0 0
    %2092 = vmatprep.subr.bf16.mxu0 0
    %2093 = vmatpush1.bf16.msra.mxu0 0
    %2094 = vmatprep.subr.bf16.mxu0 0
    %2095 = vmatpush1.bf16.msra.mxu0 0
    %2096 = vmatprep.subr.bf16.mxu0 0
    %2097 = vmatpush1.bf16.msra.mxu0 0
    %2098 = vmatprep.mubr.bf16.mxu0 0
    %2099 = vmatmul.mubr.bf16.gmra.mrb[0].mxu0 %v2061
    %v2100 = vpop.f32.mrb[0].mxu0
    %v2101 = vadd.f32 0.0, %v2100
    %v2102 = vpop.f32.mrb[0].mxu0
    %v2103 = vpop.f32.mrb[0].mxu0
    %v2104 = vpop.f32.mrb[0].mxu0
    %2105 = vdwg.mxu0
    %v2106 = vpack.c.bf16 %v2101, %v2101
    %v2123 = vunpack.c.l.b16 %v1883
    %v2124 = vunpack.c.l.b16 %v1884
    %v2125 = vunpack.c.l.b16 %v1885
    %v2126 = vunpack.c.l.b16 %v1886
    %v2127 = vunpack.c.l.b16 %v1887
    %v2128 = vunpack.c.l.b16 %v1888
    %v2129 = vunpack.c.l.b16 %v1889
    %v2130 = vunpack.c.l.b16 %v1890
    %v2131 = vunpack.c.l.b16 %v1891
    %v2132 = vunpack.c.l.b16 %v1892
    %v2133 = vunpack.c.l.b16 %v1893
    %v2134 = vunpack.c.l.b16 %v1894
    %v2135 = vunpack.c.l.b16 %v1895
    %v2136 = vunpack.c.l.b16 %v1896
    %v2137 = vunpack.c.l.b16 %v1897
    %v2138 = vunpack.c.l.b16 %v1898
    %v2139 = vpack.c.b16 %v2124, %v2123
    %v2140 = vpack.c.b16 %v2126, %v2125
    %v2141 = vpack.c.b16 %v2128, %v2127
    %v2142 = vpack.c.b16 %v2130, %v2129
    %v2143 = vpack.c.b16 %v2132, %v2131
    %v2144 = vpack.c.b16 %v2134, %v2133
    %v2145 = vpack.c.b16 %v2136, %v2135
    %v2146 = vpack.c.b16 %v2138, %v2137
    %2155 = vmatprep.subr.bf16.mxu0 0
    %2156 = vmatpush1.bf16.msra.mxu0 %v2139
    %2157 = vmatprep.subr.bf16.mxu0 0
    %2158 = vmatpush1.bf16.msra.mxu0 %v2140
    %2159 = vmatprep.subr.bf16.mxu0 0
    %2160 = vmatpush1.bf16.msra.mxu0 %v2141
    %2161 = vmatprep.subr.bf16.mxu0 0
    %2162 = vmatpush1.bf16.msra.mxu0 %v2142
    %2163 = vmatprep.subr.bf16.mxu0 0
    %2164 = vmatpush1.bf16.msra.mxu0 %v2143
    %2165 = vmatprep.subr.bf16.mxu0 0
    %2166 = vmatpush1.bf16.msra.mxu0 %v2144
    %2167 = vmatprep.subr.bf16.mxu0 0
    %2168 = vmatpush1.bf16.msra.mxu0 %v2145
    %2169 = vmatprep.subr.bf16.mxu0 0
    %2170 = vmatpush1.bf16.msra.mxu0 %v2146
    %2171 = vmatprep.subr.bf16.mxu0 0
    %2172 = vmatpush1.bf16.msra.mxu0 0
    %2173 = vmatprep.subr.bf16.mxu0 0
    %2174 = vmatpush1.bf16.msra.mxu0 0
    %2175 = vmatprep.subr.bf16.mxu0 0
    %2176 = vmatpush1.bf16.msra.mxu0 0
    %2177 = vmatprep.subr.bf16.mxu0 0
    %2178 = vmatpush1.bf16.msra.mxu0 0
    %2179 = vmatprep.subr.bf16.mxu0 0
    %2180 = vmatpush1.bf16.msra.mxu0 0
    %2181 = vmatprep.subr.bf16.mxu0 0
    %2182 = vmatpush1.bf16.msra.mxu0 0
    %2183 = vmatprep.subr.bf16.mxu0 0
    %2184 = vmatpush1.bf16.msra.mxu0 0
    %2185 = vmatprep.subr.bf16.mxu0 0
    %2186 = vmatpush1.bf16.msra.mxu0 0
    %2187 = vmatprep.mubr.bf16.mxu0 0
    %2188 = vmatmul.mubr.bf16.gmra.mrb[0].mxu0 %v2106
    %v2189 = vpop.f32.mrb[0].mxu0
    %v2190 = vadd.f32 0.0, %v2189
    %v2191 = vpop.f32.mrb[0].mxu0
    %v2192 = vpop.f32.mrb[0].mxu0
    %v2193 = vpop.f32.mrb[0].mxu0
    %2194 = vdwg.mxu0
    %v2211 = vunpack.c.l.b16 %v1867
    %v2212 = vunpack.c.l.b16 %v1868
    %v2213 = vunpack.c.l.b16 %v1869
    %v2214 = vunpack.c.l.b16 %v1870
    %v2215 = vunpack.c.l.b16 %v1871
    %v2216 = vunpack.c.l.b16 %v1872
    %v2217 = vunpack.c.l.b16 %v1873
    %v2218 = vunpack.c.l.b16 %v1874
    %v2219 = vunpack.c.l.b16 %v1875
    %v2220 = vunpack.c.l.b16 %v1876
    %v2221 = vunpack.c.l.b16 %v1877
    %v2222 = vunpack.c.l.b16 %v1878
    %v2223 = vunpack.c.l.b16 %v1879
    %v2224 = vunpack.c.l.b16 %v1880
    %v2225 = vunpack.c.l.b16 %v1881
    %v2226 = vunpack.c.l.b16 %v1882
    %v2227 = vpack.c.b16 %v2212, %v2211
    %v2228 = vpack.c.b16 %v2214, %v2213
    %v2229 = vpack.c.b16 %v2216, %v2215
    %v2230 = vpack.c.b16 %v2218, %v2217
    %v2231 = vpack.c.b16 %v2220, %v2219
    %v2232 = vpack.c.b16 %v2222, %v2221
    %v2233 = vpack.c.b16 %v2224, %v2223
    %v2234 = vpack.c.b16 %v2226, %v2225
    %2243 = vmatprep.subr.bf16.mxu0 0
    %2244 = vmatpush1.bf16.msra.mxu0 %v2227
    %2245 = vmatprep.subr.bf16.mxu0 0
    %2246 = vmatpush1.bf16.msra.mxu0 %v2228
    %2247 = vmatprep.subr.bf16.mxu0 0
    %2248 = vmatpush1.bf16.msra.mxu0 %v2229
    %2249 = vmatprep.subr.bf16.mxu0 0
    %2250 = vmatpush1.bf16.msra.mxu0 %v2230
    %2251 = vmatprep.subr.bf16.mxu0 0
    %2252 = vmatpush1.bf16.msra.mxu0 %v2231
    %2253 = vmatprep.subr.bf16.mxu0 0
    %2254 = vmatpush1.bf16.msra.mxu0 %v2232
    %2255 = vmatprep.subr.bf16.mxu0 0
    %2256 = vmatpush1.bf16.msra.mxu0 %v2233
    %2257 = vmatprep.subr.bf16.mxu0 0
    %2258 = vmatpush1.bf16.msra.mxu0 %v2234
    %2259 = vmatprep.subr.bf16.mxu0 0
    %2260 = vmatpush1.bf16.msra.mxu0 0
    %2261 = vmatprep.subr.bf16.mxu0 0
    %2262 = vmatpush1.bf16.msra.mxu0 0
    %2263 = vmatprep.subr.bf16.mxu0 0
    %2264 = vmatpush1.bf16.msra.mxu0 0
    %2265 = vmatprep.subr.bf16.mxu0 0
    %2266 = vmatpush1.bf16.msra.mxu0 0
    %2267 = vmatprep.subr.bf16.mxu0 0
    %2268 = vmatpush1.bf16.msra.mxu0 0
    %2269 = vmatprep.subr.bf16.mxu0 0
    %2270 = vmatpush1.bf16.msra.mxu0 0
    %2271 = vmatprep.subr.bf16.mxu0 0
    %2272 = vmatpush1.bf16.msra.mxu0 0
    %2273 = vmatprep.subr.bf16.mxu0 0
    %2274 = vmatpush1.bf16.msra.mxu0 0
    %2275 = vmatprep.mubr.bf16.mxu0 0
    %2276 = vmatmul.mubr.bf16.gmra.mrb[0].mxu0 %v2002
    %v2277 = vpop.f32.mrb[0].mxu0
    %v2278 = vadd.f32 %v2190, %v2277
    %v2279 = vpop.f32.mrb[0].mxu0
    %v2280 = vpop.f32.mrb[0].mxu0
    %v2281 = vpop.f32.mrb[0].mxu0
    %2282 = vdwg.mxu0
    %v2283 = vpack.c.bf16 %v1776, %v1776
    %v2284 = vpack.c.bf16 %v1819, %v1819
    %2285 = vmatprep.subr.bf16.mxu0 0
    %2286 = vmatpush1.bf16.xpose.msra.mxu0 %v2284
    %2287 = vmatprep.subr.bf16.mxu0 0
    %2288 = vmatpush1.bf16.xpose.msra.mxu0 0
    %2289 = vmatprep.subr.bf16.mxu0 0
    %2290 = vmatpush1.bf16.xpose.msra.mxu0 0
    %2291 = vmatprep.subr.bf16.mxu0 0
    %2292 = vmatpush1.bf16.xpose.msra.mxu0 0
    %2293 = vmatprep.subr.bf16.mxu0 0
    %2294 = vmatpush1.bf16.xpose.msra.mxu0 0
    %2295 = vmatprep.subr.bf16.mxu0 0
    %2296 = vmatpush1.bf16.xpose.msra.mxu0 0
    %2297 = vmatprep.subr.bf16.mxu0 0
    %2298 = vmatpush1.bf16.xpose.msra.mxu0 0
    %2299 = vmatprep.subr.bf16.mxu0 0
    %2300 = vmatpush1.bf16.xpose.msra.mxu0 0
    %2301 = vmatprep.subr.bf16.mxu0 0
    %2302 = vmatpush1.bf16.xpose.msra.mxu0 0
    %2303 = vmatprep.subr.bf16.mxu0 0
    %2304 = vmatpush1.bf16.xpose.msra.mxu0 0
    %2305 = vmatprep.subr.bf16.mxu0 0
    %2306 = vmatpush1.bf16.xpose.msra.mxu0 0
    %2307 = vmatprep.subr.bf16.mxu0 0
    %2308 = vmatpush1.bf16.xpose.msra.mxu0 0
    %2309 = vmatprep.subr.bf16.mxu0 0
    %2310 = vmatpush1.bf16.xpose.msra.mxu0 0
    %2311 = vmatprep.subr.bf16.mxu0 0
    %2312 = vmatpush1.bf16.xpose.msra.mxu0 0
    %2313 = vmatprep.subr.bf16.mxu0 0
    %2314 = vmatpush1.bf16.xpose.msra.mxu0 0
    %2315 = vmatprep.subr.bf16.mxu0 0
    %2316 = vmatpush1.bf16.xpose.msra.mxu0 0
    %2317 = vmatprep.mubr.bf16.mxu0 0
    %2318 = vmatmul.mubr.bf16.gmra.mrb[0].mxu0 %v2283
    %v2319 = vpop.f32.mrb[0].mxu0
    %v2320 = vadd.f32 0.0, %v2319
    %v2321 = vpop.f32.mrb[0].mxu0
    %v2322 = vpop.f32.mrb[0].mxu0
    %v2323 = vpop.f32.mrb[0].mxu0
    %2324 = vdwg.mxu0
    %v2325 = vmul.f32 %v2320, 0.25
    %v2326 = vadd.f32 %v2325, %v171
    %v2327 = vsel %vm731, %v2326, -inf
    %2328 = vmax.xlane.f32.xlu0 %v2327
    %v2329 = vpop.xlane.xlu0 %2328
    %v2330 = vsub.f32 %v2326, %v2329
    %v2331 = vmul.f32 %v2330, 1.442695
    %v2332 = vpow.pop %v2331
    %v2333 = vsel %vm731, %v2332, 0.0
    %2334 = vadd.xlane.f32.xlu0 %v2333
    %v2335 = vpop.xlane.xlu0 %2334
    %v2336 = vrcp.pop %v2335
    %v2337 = vmul.f32 %v2332, %v2336
    %v2338 = vpack.c.bf16 %v2337, %v2337
    %v2339 = vpack.c.bf16 %v1862, %v1862
    %v2341 = vsel %vm731, %v2338, 0
    %v2344 = vsel %vm748, %v2339, 0
    %2346 = vmatprep.subr.bf16.mxu0 0
    %2347 = vmatpush1.bf16.msra.mxu0 %v2344
    %2348 = vmatprep.subr.bf16.mxu0 0
    %2349 = vmatpush1.bf16.msra.mxu0 0
    %2350 = vmatprep.subr.bf16.mxu0 0
    %2351 = vmatpush1.bf16.msra.mxu0 0
    %2352 = vmatprep.subr.bf16.mxu0 0
    %2353 = vmatpush1.bf16.msra.mxu0 0
    %2354 = vmatprep.subr.bf16.mxu0 0
    %2355 = vmatpush1.bf16.msra.mxu0 0
    %2356 = vmatprep.subr.bf16.mxu0 0
    %2357 = vmatpush1.bf16.msra.mxu0 0
    %2358 = vmatprep.subr.bf16.mxu0 0
    %2359 = vmatpush1.bf16.msra.mxu0 0
    %2360 = vmatprep.subr.bf16.mxu0 0
    %2361 = vmatpush1.bf16.msra.mxu0 0
    %2362 = vmatprep.subr.bf16.mxu0 0
    %2363 = vmatpush1.bf16.msra.mxu0 0
    %2364 = vmatprep.subr.bf16.mxu0 0
    %2365 = vmatpush1.bf16.msra.mxu0 0
    %2366 = vmatprep.subr.bf16.mxu0 0
    %2367 = vmatpush1.bf16.msra.mxu0 0
    %2368 = vmatprep.subr.bf16.mxu0 0
    %2369 = vmatpush1.bf16.msra.mxu0 0
    %2370 = vmatprep.subr.bf16.mxu0 0
    %2371 = vmatpush1.bf16.msra.mxu0 0
    %2372 = vmatprep.subr.bf16.mxu0 0
    %2373 = vmatpush1.bf16.msra.mxu0 0
    %2374 = vmatprep.subr.bf16.mxu0 0
    %2375 = vmatpush1.bf16.msra.mxu0 0
    %2376 = vmatprep.subr.bf16.mxu0 0
    %2377 = vmatpush1.bf16.msra.mxu0 0
    %2378 = vmatprep.mubr.bf16.mxu0 0
    %2379 = vmatmul.mubr.bf16.gmra.mrb[0].mxu0 %v2341
    %v2380 = vpop.f32.mrb[0].mxu0
    %v2381 = vadd.f32 0.0, %v2380
    %v2382 = vpop.f32.mrb[0].mxu0
    %v2383 = vpop.f32.mrb[0].mxu0
    %v2384 = vpop.f32.mrb[0].mxu0
    %2385 = vdwg.mxu0
    %v2386 = vpack.c.bf16 %v2381, %v2381
    %v2387 = vpack.c.bf16 %v1778, %v1778
    %v2388 = vpack.c.bf16 %v1821, %v1821
    %2389 = vmatprep.subr.bf16.mxu0 0
    %2390 = vmatpush1.bf16.xpose.msra.mxu0 %v2388
    %2391 = vmatprep.subr.bf16.mxu0 0
    %2392 = vmatpush1.bf16.xpose.msra.mxu0 0
    %2393 = vmatprep.subr.bf16.mxu0 0
    %2394 = vmatpush1.bf16.xpose.msra.mxu0 0
    %2395 = vmatprep.subr.bf16.mxu0 0
    %2396 = vmatpush1.bf16.xpose.msra.mxu0 0
    %2397 = vmatprep.subr.bf16.mxu0 0
    %2398 = vmatpush1.bf16.xpose.msra.mxu0 0
    %2399 = vmatprep.subr.bf16.mxu0 0
    %2400 = vmatpush1.bf16.xpose.msra.mxu0 0
    %2401 = vmatprep.subr.bf16.mxu0 0
    %2402 = vmatpush1.bf16.xpose.msra.mxu0 0
    %2403 = vmatprep.subr.bf16.mxu0 0
    %2404 = vmatpush1.bf16.xpose.msra.mxu0 0
    %2405 = vmatprep.subr.bf16.mxu0 0
    %2406 = vmatpush1.bf16.xpose.msra.mxu0 0
    %2407 = vmatprep.subr.bf16.mxu0 0
    %2408 = vmatpush1.bf16.xpose.msra.mxu0 0
    %2409 = vmatprep.subr.bf16.mxu0 0
    %2410 = vmatpush1.bf16.xpose.msra.mxu0 0
    %2411 = vmatprep.subr.bf16.mxu0 0
    %2412 = vmatpush1.bf16.xpose.msra.mxu0 0
    %2413 = vmatprep.subr.bf16.mxu0 0
    %2414 = vmatpush1.bf16.xpose.msra.mxu0 0
    %2415 = vmatprep.subr.bf16.mxu0 0
    %2416 = vmatpush1.bf16.xpose.msra.mxu0 0
    %2417 = vmatprep.subr.bf16.mxu0 0
    %2418 = vmatpush1.bf16.xpose.msra.mxu0 0
    %2419 = vmatprep.subr.bf16.mxu0 0
    %2420 = vmatpush1.bf16.xpose.msra.mxu0 0
    %2421 = vmatprep.mubr.bf16.mxu0 0
    %2422 = vmatmul.mubr.bf16.gmra.mrb[0].mxu0 %v2387
    %v2423 = vpop.f32.mrb[0].mxu0
    %v2424 = vadd.f32 0.0, %v2423
    %v2425 = vpop.f32.mrb[0].mxu0
    %v2426 = vpop.f32.mrb[0].mxu0
    %v2427 = vpop.f32.mrb[0].mxu0
    %2428 = vdwg.mxu0
    %v2429 = vmul.f32 %v2424, 0.25
    %v2430 = vadd.f32 %v2429, %v171
    %v2431 = vsel %vm731, %v2430, -inf
    %2432 = vmax.xlane.f32.xlu0 %v2431
    %v2433 = vpop.xlane.xlu0 %2432
    %v2434 = vsub.f32 %v2430, %v2433
    %v2435 = vmul.f32 %v2434, 1.442695
    %v2436 = vpow.pop %v2435
    %v2437 = vsel %vm731, %v2436, 0.0
    %2438 = vadd.xlane.f32.xlu0 %v2437
    %v2439 = vpop.xlane.xlu0 %2438
    %v2440 = vrcp.pop %v2439
    %v2441 = vmul.f32 %v2436, %v2440
    %v2442 = vpack.c.bf16 %v2441, %v2441
    %v2443 = vpack.c.bf16 %v1864, %v1864
    %v2445 = vsel %vm731, %v2442, 0
    %v2448 = vsel %vm748, %v2443, 0
    %2450 = vmatprep.subr.bf16.mxu0 0
    %2451 = vmatpush1.bf16.msra.mxu0 %v2448
    %2452 = vmatprep.subr.bf16.mxu0 0
    %2453 = vmatpush1.bf16.msra.mxu0 0
    %2454 = vmatprep.subr.bf16.mxu0 0
    %2455 = vmatpush1.bf16.msra.mxu0 0
    %2456 = vmatprep.subr.bf16.mxu0 0
    %2457 = vmatpush1.bf16.msra.mxu0 0
    %2458 = vmatprep.subr.bf16.mxu0 0
    %2459 = vmatpush1.bf16.msra.mxu0 0
    %2460 = vmatprep.subr.bf16.mxu0 0
    %2461 = vmatpush1.bf16.msra.mxu0 0
    %2462 = vmatprep.subr.bf16.mxu0 0
    %2463 = vmatpush1.bf16.msra.mxu0 0
    %2464 = vmatprep.subr.bf16.mxu0 0
    %2465 = vmatpush1.bf16.msra.mxu0 0
    %2466 = vmatprep.subr.bf16.mxu0 0
    %2467 = vmatpush1.bf16.msra.mxu0 0
    %2468 = vmatprep.subr.bf16.mxu0 0
    %2469 = vmatpush1.bf16.msra.mxu0 0
    %2470 = vmatprep.subr.bf16.mxu0 0
    %2471 = vmatpush1.bf16.msra.mxu0 0
    %2472 = vmatprep.subr.bf16.mxu0 0
    %2473 = vmatpush1.bf16.msra.mxu0 0
    %2474 = vmatprep.subr.bf16.mxu0 0
    %2475 = vmatpush1.bf16.msra.mxu0 0
    %2476 = vmatprep.subr.bf16.mxu0 0
    %2477 = vmatpush1.bf16.msra.mxu0 0
    %2478 = vmatprep.subr.bf16.mxu0 0
    %2479 = vmatpush1.bf16.msra.mxu0 0
    %2480 = vmatprep.subr.bf16.mxu0 0
    %2481 = vmatpush1.bf16.msra.mxu0 0
    %2482 = vmatprep.mubr.bf16.mxu0 0
    %2483 = vmatmul.mubr.bf16.gmra.mrb[0].mxu0 %v2445
    %v2484 = vpop.f32.mrb[0].mxu0
    %v2485 = vadd.f32 0.0, %v2484
    %v2486 = vpop.f32.mrb[0].mxu0
    %v2487 = vpop.f32.mrb[0].mxu0
    %v2488 = vpop.f32.mrb[0].mxu0
    %2489 = vdwg.mxu0
    %v2490 = vpack.c.bf16 %v2485, %v2485
    %2491 = vmatprep.subr.bf16.mxu0 0
    %2492 = vmatpush1.bf16.msra.mxu0 %v2139
    %2493 = vmatprep.subr.bf16.mxu0 0
    %2494 = vmatpush1.bf16.msra.mxu0 %v2140
    %2495 = vmatprep.subr.bf16.mxu0 0
    %2496 = vmatpush1.bf16.msra.mxu0 %v2141
    %2497 = vmatprep.subr.bf16.mxu0 0
    %2498 = vmatpush1.bf16.msra.mxu0 %v2142
    %2499 = vmatprep.subr.bf16.mxu0 0
    %2500 = vmatpush1.bf16.msra.mxu0 %v2143
    %2501 = vmatprep.subr.bf16.mxu0 0
    %2502 = vmatpush1.bf16.msra.mxu0 %v2144
    %2503 = vmatprep.subr.bf16.mxu0 0
    %2504 = vmatpush1.bf16.msra.mxu0 %v2145
    %2505 = vmatprep.subr.bf16.mxu0 0
    %2506 = vmatpush1.bf16.msra.mxu0 %v2146
    %2507 = vmatprep.subr.bf16.mxu0 0
    %2508 = vmatpush1.bf16.msra.mxu0 0
    %2509 = vmatprep.subr.bf16.mxu0 0
    %2510 = vmatpush1.bf16.msra.mxu0 0
    %2511 = vmatprep.subr.bf16.mxu0 0
    %2512 = vmatpush1.bf16.msra.mxu0 0
    %2513 = vmatprep.subr.bf16.mxu0 0
    %2514 = vmatpush1.bf16.msra.mxu0 0
    %2515 = vmatprep.subr.bf16.mxu0 0
    %2516 = vmatpush1.bf16.msra.mxu0 0
    %2517 = vmatprep.subr.bf16.mxu0 0
    %2518 = vmatpush1.bf16.msra.mxu0 0
    %2519 = vmatprep.subr.bf16.mxu0 0
    %2520 = vmatpush1.bf16.msra.mxu0 0
    %2521 = vmatprep.subr.bf16.mxu0 0
    %2522 = vmatpush1.bf16.msra.mxu0 0
    %2523 = vmatprep.mubr.bf16.mxu0 0
    %2524 = vmatmul.mubr.bf16.gmra.mrb[0].mxu0 %v2490
    %v2525 = vpop.f32.mrb[0].mxu0
    %v2526 = vadd.f32 0.0, %v2525
    %v2527 = vpop.f32.mrb[0].mxu0
    %v2528 = vpop.f32.mrb[0].mxu0
    %v2529 = vpop.f32.mrb[0].mxu0
    %2530 = vdwg.mxu0
    %2531 = vmatprep.subr.bf16.mxu0 0
    %2532 = vmatpush1.bf16.msra.mxu0 %v2227
    %2533 = vmatprep.subr.bf16.mxu0 0
    %2534 = vmatpush1.bf16.msra.mxu0 %v2228
    %2535 = vmatprep.subr.bf16.mxu0 0
    %2536 = vmatpush1.bf16.msra.mxu0 %v2229
    %2537 = vmatprep.subr.bf16.mxu0 0
    %2538 = vmatpush1.bf16.msra.mxu0 %v2230
    %2539 = vmatprep.subr.bf16.mxu0 0
    %2540 = vmatpush1.bf16.msra.mxu0 %v2231
    %2541 = vmatprep.subr.bf16.mxu0 0
    %2542 = vmatpush1.bf16.msra.mxu0 %v2232
    %2543 = vmatprep.subr.bf16.mxu0 0
    %2544 = vmatpush1.bf16.msra.mxu0 %v2233
    %2545 = vmatprep.subr.bf16.mxu0 0
    %2546 = vmatpush1.bf16.msra.mxu0 %v2234
    %2547 = vmatprep.subr.bf16.mxu0 0
    %2548 = vmatpush1.bf16.msra.mxu0 0
    %2549 = vmatprep.subr.bf16.mxu0 0
    %2550 = vmatpush1.bf16.msra.mxu0 0
    %2551 = vmatprep.subr.bf16.mxu0 0
    %2552 = vmatpush1.bf16.msra.mxu0 0
    %2553 = vmatprep.subr.bf16.mxu0 0
    %2554 = vmatpush1.bf16.msra.mxu0 0
    %2555 = vmatprep.subr.bf16.mxu0 0
    %2556 = vmatpush1.bf16.msra.mxu0 0
    %2557 = vmatprep.subr.bf16.mxu0 0
    %2558 = vmatpush1.bf16.msra.mxu0 0
    %2559 = vmatprep.subr.bf16.mxu0 0
    %2560 = vmatpush1.bf16.msra.mxu0 0
    %2561 = vmatprep.subr.bf16.mxu0 0
    %2562 = vmatpush1.bf16.msra.mxu0 0
    %2563 = vmatprep.mubr.bf16.mxu0 0
    %2564 = vmatmul.mubr.bf16.gmra.mrb[0].mxu0 %v2386
    %v2565 = vpop.f32.mrb[0].mxu0
    %v2566 = vadd.f32 %v2526, %v2565
    %v2567 = vpop.f32.mrb[0].mxu0
    %v2568 = vpop.f32.mrb[0].mxu0
    %v2569 = vpop.f32.mrb[0].mxu0
    %2570 = vdwg.mxu0
    %s2571 = scalar_lea.vmem %s7, 8
    %v2572 = vld [vmem:[%s2571] sm:$0x1]
    %v2573 = vlaneseq
    %v2574 = vshrl.u32 %v2573, 7
    %v2575 = vsub.s32 0, %v2574
    %v2576 = vrot.slane %v2572, %v2575
    %v2577 = vadd.f32 %v2278, %v2576
    %v2578 = vadd.f32 %v2566, %v2576
    %v2579 = vadd.f32 %v1625, %v2577
    %v2580 = vadd.f32 %v1626, %v2578
    %v2581 = vld [vmem:[%s2571 + $0x1] sm:$0x1]
    %v2582 = vld [vmem:[%s2571 + $0x2] sm:$0x1]
    %v2583 = vsel %vm522, %v2579, 0.0
    %2584 = vadd.xlane.f32.xlu0 %v2583
    %v2585 = vpop.xlane.xlu0 %2584
    %v2586 = vsel %vm522, %v2580, 0.0
    %2587 = vadd.xlane.f32.xlu0 %v2586
    %v2588 = vpop.xlane.xlu0 %2587
    %v2589 = vmul.f32 %v2585, 0.03125
    %v2590 = vmul.f32 %v2588, 0.03125
    %v2591 = vmul.f32 %v2579, %v2579
    %v2592 = vmul.f32 %v2580, %v2580
    %v2593 = vsel %vm522, %v2591, 0.0
    %2594 = vadd.xlane.f32.xlu0 %v2593
    %v2595 = vpop.xlane.xlu0 %2594
    %v2596 = vsel %vm522, %v2592, 0.0
    %2597 = vadd.xlane.f32.xlu0 %v2596
    %v2598 = vpop.xlane.xlu0 %2597
    %v2599 = vmul.f32 %v2595, 0.03125
    %v2600 = vmul.f32 %v2598, 0.03125
    %v2601 = vmul.f32 %v2589, %v2589
    %v2602 = vmul.f32 %v2590, %v2590
    %v2603 = vsub.f32 %v2599, %v2601
    %v2604 = vsub.f32 %v2600, %v2602
    %v2605 = vsub.f32 %v2579, %v2589
    %v2606 = vsub.f32 %v2580, %v2590
    %v2607 = vadd.f32 %v2603, 1e-05
    %v2608 = vadd.f32 %v2604, 1e-05
    %v2609 = vrsqrt.pop %v2607
    %v2610 = vrsqrt.pop %v2608
    %v2611 = vmul.f32 %v2605, %v2609
    %v2612 = vmul.f32 %v2606, %v2610
    %v2613 = vlaneseq
    %v2614 = vshrl.u32 %v2613, 7
    %v2615 = vsub.s32 0, %v2614
    %v2616 = vrot.slane %v2581, %v2615
    %v2617 = vmul.f32 %v2611, %v2616
    %v2618 = vmul.f32 %v2612, %v2616
    %v2619 = vlaneseq
    %v2620 = vshrl.u32 %v2619, 7
    %v2621 = vsub.s32 0, %v2620
    %v2622 = vrot.slane %v2582, %v2621
    %v2623 = vadd.f32 %v2617, %v2622
    %v2624 = vadd.f32 %v2618, %v2622
    %s2625 = scalar_lea.vmem %s5, 16
    %v2626 = vld [vmem:[%s2625] sm:$0xf]
    %v2627 = vld [vmem:[%s2625 + $0x4] sm:$0xf]
    %v2628 = vld [vmem:[%s2625 + $0x8] sm:$0xf]
    %v2629 = vld [vmem:[%s2625 + $0xc] sm:$0xf]
    %v2630 = vpack.c.bf16 %v2624, %v2623
    %v2631 = vld [vmem:[%s2571 + $0x3] sm:$0x1]
    %v2632 = vlaneseq
    %v2633 = vshrl.u32 %v2632, 7
    %v2634 = vsub.s32 0, %v2633
    %v2635 = vrot.slane %v2631, %v2634
    %v2640 = vunpack.c.l.b16 %v2626
    %v2641 = vunpack.c.l.b16 %v2627
    %v2642 = vunpack.c.l.b16 %v2628
    %v2643 = vunpack.c.l.b16 %v2629
    %v2644 = vpack.c.b16 %v2641, %v2640
    %v2645 = vpack.c.b16 %v2643, %v2642
    %v2649 = vsel %vm522, %v2630, 0
    %2651 = vmatprep.subr.bf16.mxu0 0
    %2652 = vmatpush1.bf16.msra.mxu0 %v2644
    %2653 = vmatprep.subr.bf16.mxu0 0
    %2654 = vmatpush1.bf16.msra.mxu0 %v2645
    %2655 = vmatprep.subr.bf16.mxu0 0
    %2656 = vmatpush1.bf16.msra.mxu0 0
    %2657 = vmatprep.subr.bf16.mxu0 0
    %2658 = vmatpush1.bf16.msra.mxu0 0
    %2659 = vmatprep.subr.bf16.mxu0 0
    %2660 = vmatpush1.bf16.msra.mxu0 0
    %2661 = vmatprep.subr.bf16.mxu0 0
    %2662 = vmatpush1.bf16.msra.mxu0 0
    %2663 = vmatprep.subr.bf16.mxu0 0
    %2664 = vmatpush1.bf16.msra.mxu0 0
    %2665 = vmatprep.subr.bf16.mxu0 0
    %2666 = vmatpush1.bf16.msra.mxu0 0
    %2667 = vmatprep.subr.bf16.mxu0 0
    %2668 = vmatpush1.bf16.msra.mxu0 0
    %2669 = vmatprep.subr.bf16.mxu0 0
    %2670 = vmatpush1.bf16.msra.mxu0 0
    %2671 = vmatprep.subr.bf16.mxu0 0
    %2672 = vmatpush1.bf16.msra.mxu0 0
    %2673 = vmatprep.subr.bf16.mxu0 0
    %2674 = vmatpush1.bf16.msra.mxu0 0
    %2675 = vmatprep.subr.bf16.mxu0 0
    %2676 = vmatpush1.bf16.msra.mxu0 0
    %2677 = vmatprep.subr.bf16.mxu0 0
    %2678 = vmatpush1.bf16.msra.mxu0 0
    %2679 = vmatprep.subr.bf16.mxu0 0
    %2680 = vmatpush1.bf16.msra.mxu0 0
    %2681 = vmatprep.subr.bf16.mxu0 0
    %2682 = vmatpush1.bf16.msra.mxu0 0
    %2683 = vmatprep.mubr.bf16.mxu0 0
    %2684 = vmatmul.mubr.bf16.gmra.mrb[0].mxu0 %v2649
    %v2685 = vpop.f32.mrb[0].mxu0
    %v2686 = vadd.f32 %v2635, %v2685
    %v2687 = vpop.f32.mrb[0].mxu0
    %v2688 = vpop.f32.mrb[0].mxu0
    %v2689 = vadd.f32 %v2635, %v2688
    %v2690 = vpop.f32.mrb[0].mxu0
    %2691 = vdwg.mxu0
    %v2692 = vmul.f32 %v2686, 0.5
    %v2693 = vmul.f32 %v2689, 0.5
    %v2694 = vmul.f32 %v2686, 0.044715
    %v2695 = vmul.f32 %v2689, 0.044715
    %v2696 = vmul.f32 %v2694, %v2686
    %v2697 = vmul.f32 %v2695, %v2689
    %v2698 = vmul.f32 %v2696, %v2686
    %v2699 = vmul.f32 %v2697, %v2689
    %v2700 = vadd.f32 %v2686, %v2698
    %v2701 = vadd.f32 %v2689, %v2699
    %v2702 = vmul.f32 %v2700, 0.7978846
    %v2703 = vmul.f32 %v2701, 0.7978846
    %v2704 = vtanh.pop %v2702
    %v2705 = vtanh.pop %v2703
    %v2706 = vadd.f32 %v2704, 1.0
    %v2707 = vadd.f32 %v2705, 1.0
    %v2708 = vmul.f32 %v2692, %v2706
    %v2709 = vmul.f32 %v2693, %v2707
    %s2710 = scalar_lea.vmem %s6, 32
    %v2711 = vld [vmem:[%s2710] sm:$0xf]
    %v2712 = vld [vmem:[%s2710 + $0x4] sm:$0xf]
    %v2713 = vld [vmem:[%s2710 + $0x8] sm:$0xf]
    %v2714 = vld [vmem:[%s2710 + $0xc] sm:$0xf]
    %v2715 = vld [vmem:[%s2710 + $0x10] sm:$0xf]
    %v2716 = vld [vmem:[%s2710 + $0x14] sm:$0xf]
    %v2717 = vld [vmem:[%s2710 + $0x18] sm:$0xf]
    %v2718 = vld [vmem:[%s2710 + $0x1c] sm:$0xf]
    %v2719 = vpack.c.bf16 %v2709, %v2708
    %v2720 = vld [vmem:[%s2571 + $0x4] sm:$0x1]
    %v2721 = vlaneseq
    %v2722 = vshrl.u32 %v2721, 7
    %v2723 = vsub.s32 0, %v2722
    %v2724 = vrot.slane %v2720, %v2723
    %v2733 = vunpack.c.l.b16 %v2711
    %v2734 = vunpack.c.l.b16 %v2712
    %v2735 = vunpack.c.l.b16 %v2713
    %v2736 = vunpack.c.l.b16 %v2714
    %v2737 = vunpack.c.l.b16 %v2715
    %v2738 = vunpack.c.l.b16 %v2716
    %v2739 = vunpack.c.l.b16 %v2717
    %v2740 = vunpack.c.l.b16 %v2718
    %v2741 = vpack.c.b16 %v2734, %v2733
    %v2742 = vpack.c.b16 %v2736, %v2735
    %v2743 = vpack.c.b16 %v2738, %v2737
    %v2744 = vpack.c.b16 %v2740, %v2739
    %v2750 = vsel %vm1536, %v2719, 0
    %2752 = vmatprep.subr.bf16.mxu0 0
    %2753 = vmatpush1.bf16.msra.mxu0 %v2741
    %2754 = vmatprep.subr.bf16.mxu0 0
    %2755 = vmatpush1.bf16.msra.mxu0 %v2742
    %2756 = vmatprep.subr.bf16.mxu0 0
    %2757 = vmatpush1.bf16.msra.mxu0 %v2743
    %2758 = vmatprep.subr.bf16.mxu0 0
    %2759 = vmatpush1.bf16.msra.mxu0 %v2744
    %2760 = vmatprep.subr.bf16.mxu0 0
    %2761 = vmatpush1.bf16.msra.mxu0 0
    %2762 = vmatprep.subr.bf16.mxu0 0
    %2763 = vmatpush1.bf16.msra.mxu0 0
    %2764 = vmatprep.subr.bf16.mxu0 0
    %2765 = vmatpush1.bf16.msra.mxu0 0
    %2766 = vmatprep.subr.bf16.mxu0 0
    %2767 = vmatpush1.bf16.msra.mxu0 0
    %2768 = vmatprep.subr.bf16.mxu0 0
    %2769 = vmatpush1.bf16.msra.mxu0 0
    %2770 = vmatprep.subr.bf16.mxu0 0
    %2771 = vmatpush1.bf16.msra.mxu0 0
    %2772 = vmatprep.subr.bf16.mxu0 0
    %2773 = vmatpush1.bf16.msra.mxu0 0
    %2774 = vmatprep.subr.bf16.mxu0 0
    %2775 = vmatpush1.bf16.msra.mxu0 0
    %2776 = vmatprep.subr.bf16.mxu0 0
    %2777 = vmatpush1.bf16.msra.mxu0 0
    %2778 = vmatprep.subr.bf16.mxu0 0
    %2779 = vmatpush1.bf16.msra.mxu0 0
    %2780 = vmatprep.subr.bf16.mxu0 0
    %2781 = vmatpush1.bf16.msra.mxu0 0
    %2782 = vmatprep.subr.bf16.mxu0 0
    %2783 = vmatpush1.bf16.msra.mxu0 0
    %2784 = vmatprep.mubr.bf16.mxu0 0
    %2785 = vmatmul.mubr.bf16.gmra.mrb[0].mxu0 %v2750
    %v2786 = vpop.f32.mrb[0].mxu0
    %v2787 = vadd.f32 %v2724, %v2786
    %v2788 = vpop.f32.mrb[0].mxu0
    %v2789 = vpop.f32.mrb[0].mxu0
    %v2790 = vadd.f32 %v2724, %v2789
    %v2791 = vpop.f32.mrb[0].mxu0
    %2792 = vdwg.mxu0
    %v2793 = vadd.f32 %v2623, %v2787
    %v2794 = vadd.f32 %v2624, %v2790
    %v2795 = vld [vmem:[%s2571 + $0x5] sm:$0x1]
    %v2796 = vld [vmem:[%s2571 + $0x6] sm:$0x1]
    %v2797 = vsel %vm522, %v2793, 0.0
    %2798 = vadd.xlane.f32.xlu0 %v2797
    %v2799 = vpop.xlane.xlu0 %2798
    %v2800 = vsel %vm522, %v2794, 0.0
    %2801 = vadd.xlane.f32.xlu0 %v2800
    %v2802 = vpop.xlane.xlu0 %2801
    %v2803 = vmul.f32 %v2799, 0.03125
    %v2804 = vmul.f32 %v2802, 0.03125
    %v2805 = vmul.f32 %v2793, %v2793
    %v2806 = vmul.f32 %v2794, %v2794
    %v2807 = vsel %vm522, %v2805, 0.0
    %2808 = vadd.xlane.f32.xlu0 %v2807
    %v2809 = vpop.xlane.xlu0 %2808
    %v2810 = vsel %vm522, %v2806, 0.0
    %2811 = vadd.xlane.f32.xlu0 %v2810
    %v2812 = vpop.xlane.xlu0 %2811
    %v2813 = vmul.f32 %v2809, 0.03125
    %v2814 = vmul.f32 %v2812, 0.03125
    %v2815 = vmul.f32 %v2803, %v2803
    %v2816 = vmul.f32 %v2804, %v2804
    %v2817 = vsub.f32 %v2813, %v2815
    %v2818 = vsub.f32 %v2814, %v2816
    %v2819 = vsub.f32 %v2793, %v2803
    %v2820 = vsub.f32 %v2794, %v2804
    %v2821 = vadd.f32 %v2817, 1e-05
    %v2822 = vadd.f32 %v2818, 1e-05
    %v2823 = vrsqrt.pop %v2821
    %v2824 = vrsqrt.pop %v2822
    %v2825 = vmul.f32 %v2819, %v2823
    %v2826 = vmul.f32 %v2820, %v2824
    %v2827 = vlaneseq
    %v2828 = vshrl.u32 %v2827, 7
    %v2829 = vsub.s32 0, %v2828
    %v2830 = vrot.slane %v2795, %v2829
    %v2831 = vmul.f32 %v2825, %v2830
    %v2832 = vmul.f32 %v2826, %v2830
    %v2833 = vlaneseq
    %v2834 = vshrl.u32 %v2833, 7
    %v2835 = vsub.s32 0, %v2834
    %v2836 = vrot.slane %v2796, %v2835
    %v2837 = vadd.f32 %v2831, %v2836
    %v2838 = vadd.f32 %v2832, %v2836
    %v2839 = vmul.u32 %v173, 8
    %vm2840 = vcmp.eq.s32.totalorder %v51, %v2839
    %v2841 = vsel %vm2840, 1.0, 0.0
    %v2842 = vpack.c.bf16 %v2841, %v2841
    %v2843 = vpack.c.bf16 %v2838, %v2837
    %vm2844 = vcmask 130048
    %v2846 = vsel %vm2844, %v2842, 0
    %2848 = vmatprep.subr.bf16.mxu0 0
    %2849 = vmatpush1.bf16.msra.mxu0 %v2843
    %2850 = vmatprep.subr.bf16.mxu0 0
    %2851 = vmatpush1.bf16.msra.mxu0 0
    %2852 = vmatprep.subr.bf16.mxu0 0
    %2853 = vmatpush1.bf16.msra.mxu0 0
    %2854 = vmatprep.subr.bf16.mxu0 0
    %2855 = vmatpush1.bf16.msra.mxu0 0
    %2856 = vmatprep.subr.bf16.mxu0 0
    %2857 = vmatpush1.bf16.msra.mxu0 0
    %2858 = vmatprep.subr.bf16.mxu0 0
    %2859 = vmatpush1.bf16.msra.mxu0 0
    %2860 = vmatprep.subr.bf16.mxu0 0
    %2861 = vmatpush1.bf16.msra.mxu0 0
    %2862 = vmatprep.subr.bf16.mxu0 0
    %2863 = vmatpush1.bf16.msra.mxu0 0
    %2864 = vmatprep.subr.bf16.mxu0 0
    %2865 = vmatpush1.bf16.msra.mxu0 0
    %2866 = vmatprep.subr.bf16.mxu0 0
    %2867 = vmatpush1.bf16.msra.mxu0 0
    %2868 = vmatprep.subr.bf16.mxu0 0
    %2869 = vmatpush1.bf16.msra.mxu0 0
    %2870 = vmatprep.subr.bf16.mxu0 0
    %2871 = vmatpush1.bf16.msra.mxu0 0
    %2872 = vmatprep.subr.bf16.mxu0 0
    %2873 = vmatpush1.bf16.msra.mxu0 0
    %2874 = vmatprep.subr.bf16.mxu0 0
    %2875 = vmatpush1.bf16.msra.mxu0 0
    %2876 = vmatprep.subr.bf16.mxu0 0
    %2877 = vmatpush1.bf16.msra.mxu0 0
    %2878 = vmatprep.subr.bf16.mxu0 0
    %2879 = vmatpush1.bf16.msra.mxu0 0
    %2880 = vmatprep.mubr.bf16.mxu0 0
    %2881 = vmatmul.mubr.bf16.gmra.mrb[0].mxu0 %v2846
    %v2882 = vpop.f32.mrb[0].mxu0
    %v2883 = vadd.f32 0.0, %v2882
    %v2884 = vpop.f32.mrb[0].mxu0
    %v2885 = vpop.f32.mrb[0].mxu0
    %v2886 = vpop.f32.mrb[0].mxu0
    %2887 = vdwg.mxu0
    %v2888 = vld [vmem:[%s8] sm:$0xf]
    %v2889 = vld [vmem:[%s8 + $0x8] sm:$0xf]
    %v2890 = vld [vmem:[%s8 + $0x10] sm:$0xf]
    %v2891 = vld [vmem:[%s8 + $0x18] sm:$0xf]
    %v2892 = vld [vmem:[%s8 + $0x4] sm:$0xf]
    %v2893 = vld [vmem:[%s8 + $0xc] sm:$0xf]
    %v2894 = vld [vmem:[%s8 + $0x14] sm:$0xf]
    %v2895 = vld [vmem:[%s8 + $0x1c] sm:$0xf]
    %v2896 = vld [vmem:[%s9] sm:$0x1]
    %v2897 = vld [vmem:[%s9 + $0x1] sm:$0x1]
    %v2898 = vpack.c.bf16 %v2883, %v2883
    %v2899 = vlaneseq
    %v2900 = vshrl.u32 %v2899, 7
    %v2901 = vsub.s32 0, %v2900
    %v2902 = vrot.slane %v2896, %v2901
    %v2907 = vunpack.c.l.b16 %v2888
    %v2908 = vunpack.c.l.b16 %v2889
    %v2909 = vunpack.c.l.b16 %v2890
    %v2910 = vunpack.c.l.b16 %v2891
    %v2911 = vpack.c.b16 %v2908, %v2907
    %v2912 = vpack.c.b16 %v2910, %v2909
    %v2916 = vsel %vm522, %v2898, 0
    %2918 = vmatprep.subr.bf16.mxu0 0
    %2919 = vmatpush1.bf16.msra.mxu0 %v2911
    %2920 = vmatprep.subr.bf16.mxu0 0
    %2921 = vmatpush1.bf16.msra.mxu0 %v2912
    %2922 = vmatprep.subr.bf16.mxu0 0
    %2923 = vmatpush1.bf16.msra.mxu0 0
    %2924 = vmatprep.subr.bf16.mxu0 0
    %2925 = vmatpush1.bf16.msra.mxu0 0
    %2926 = vmatprep.subr.bf16.mxu0 0
    %2927 = vmatpush1.bf16.msra.mxu0 0
    %2928 = vmatprep.subr.bf16.mxu0 0
    %2929 = vmatpush1.bf16.msra.mxu0 0
    %2930 = vmatprep.subr.bf16.mxu0 0
    %2931 = vmatpush1.bf16.msra.mxu0 0
    %2932 = vmatprep.subr.bf16.mxu0 0
    %2933 = vmatpush1.bf16.msra.mxu0 0
    %2934 = vmatprep.subr.bf16.mxu0 0
    %2935 = vmatpush1.bf16.msra.mxu0 0
    %2936 = vmatprep.subr.bf16.mxu0 0
    %2937 = vmatpush1.bf16.msra.mxu0 0
    %2938 = vmatprep.subr.bf16.mxu0 0
    %2939 = vmatpush1.bf16.msra.mxu0 0
    %2940 = vmatprep.subr.bf16.mxu0 0
    %2941 = vmatpush1.bf16.msra.mxu0 0
    %2942 = vmatprep.subr.bf16.mxu0 0
    %2943 = vmatpush1.bf16.msra.mxu0 0
    %2944 = vmatprep.subr.bf16.mxu0 0
    %2945 = vmatpush1.bf16.msra.mxu0 0
    %2946 = vmatprep.subr.bf16.mxu0 0
    %2947 = vmatpush1.bf16.msra.mxu0 0
    %2948 = vmatprep.subr.bf16.mxu0 0
    %2949 = vmatpush1.bf16.msra.mxu0 0
    %2950 = vmatprep.mubr.bf16.mxu0 0
    %2951 = vmatmul.mubr.bf16.gmra.mrb[0].mxu0 %v2916
    %v2952 = vpop.f32.mrb[0].mxu0
    %v2953 = vadd.f32 %v2902, %v2952
    %v2954 = vpop.f32.mrb[0].mxu0
    %v2955 = vpop.f32.mrb[0].mxu0
    %v2956 = vpop.f32.mrb[0].mxu0
    %2957 = vdwg.mxu0
    %v2958 = vtanh.pop %v2953
    %v2959 = vpack.c.bf16 %v2958, %v2958
    %v2960 = vlaneseq
    %v2961 = vshrl.u32 %v2960, 7
    %v2962 = vsub.s32 0, %v2961
    %v2963 = vrot.slane %v2897, %v2962
    %v2968 = vunpack.c.l.b16 %v2892
    %v2969 = vunpack.c.l.b16 %v2893
    %v2970 = vunpack.c.l.b16 %v2894
    %v2971 = vunpack.c.l.b16 %v2895
    %v2972 = vpack.c.b16 %v2969, %v2968
    %v2973 = vpack.c.b16 %v2971, %v2970
    %v2977 = vsel %vm522, %v2959, 0
    %2979 = vmatprep.subr.bf16.mxu0 0
    %2980 = vmatpush1.bf16.msra.mxu0 %v2972
    %2981 = vmatprep.subr.bf16.mxu0 0
    %2982 = vmatpush1.bf16.msra.mxu0 %v2973
    %2983 = vmatprep.subr.bf16.mxu0 0
    %2984 = vmatpush1.bf16.msra.mxu0 0
    %2985 = vmatprep.subr.bf16.mxu0 0
    %2986 = vmatpush1.bf16.msra.mxu0 0
    %2987 = vmatprep.subr.bf16.mxu0 0
    %2988 = vmatpush1.bf16.msra.mxu0 0
    %2989 = vmatprep.subr.bf16.mxu0 0
    %2990 = vmatpush1.bf16.msra.mxu0 0
    %2991 = vmatprep.subr.bf16.mxu0 0
    %2992 = vmatpush1.bf16.msra.mxu0 0
    %2993 = vmatprep.subr.bf16.mxu0 0
    %2994 = vmatpush1.bf16.msra.mxu0 0
    %2995 = vmatprep.subr.bf16.mxu0 0
    %2996 = vmatpush1.bf16.msra.mxu0 0
    %2997 = vmatprep.subr.bf16.mxu0 0
    %2998 = vmatpush1.bf16.msra.mxu0 0
    %2999 = vmatprep.subr.bf16.mxu0 0
    %3000 = vmatpush1.bf16.msra.mxu0 0
    %3001 = vmatprep.subr.bf16.mxu0 0
    %3002 = vmatpush1.bf16.msra.mxu0 0
    %3003 = vmatprep.subr.bf16.mxu0 0
    %3004 = vmatpush1.bf16.msra.mxu0 0
    %3005 = vmatprep.subr.bf16.mxu0 0
    %3006 = vmatpush1.bf16.msra.mxu0 0
    %3007 = vmatprep.subr.bf16.mxu0 0
    %3008 = vmatpush1.bf16.msra.mxu0 0
    %3009 = vmatprep.subr.bf16.mxu0 0
    %3010 = vmatpush1.bf16.msra.mxu0 0
    %3011 = vmatprep.mubr.bf16.mxu0 0
    %3012 = vmatmul.mubr.bf16.gmra.mrb[0].mxu0 %v2977
    %v3013 = vpop.f32.mrb[0].mxu0
    %v3014 = vadd.f32 %v2963, %v3013
    %v3015 = vpop.f32.mrb[0].mxu0
    %v3016 = vpop.f32.mrb[0].mxu0
    %v3017 = vpop.f32.mrb[0].mxu0
    %3018 = vdwg.mxu0
    %3019 = vst [vmem:[#allocation5] sm:$0x3] %v3014
    // Predicated region
    $region46: #{tpu_custom_call.1} parent=1 // pred_check
      _
    $region47: #{tpu_custom_call.1} parent=1 // pred_check_branch
      %3021 = sbr.rel (0) target = $region49
    $region48: #{tpu_custom_call.1} parent=1 // pred_region
      %s3023 = ssub.s32 32, 32
      %3024 = vsyncadd [#allocation3], %s3023
      %s3026 = sshll.u32 [#allocation5], 4
      %s3027 = int_to_ptr.vmem [resolvable:$true] %s3026
      %3029 = dma.vmem_to_hbm [thread:$0]  %s3027, 32, %s10, [#allocation3]
    $region49: #{tpu_custom_call.1} parent=1 // pred_fallthru
      _
    // Predicated region
    $region50: #{tpu_custom_call.1} parent=1 // pred_check
      _
    $region51: #{tpu_custom_call.1} parent=1 // pred_check_branch
      %3031 = sbr.rel (0) target = $region53
    $region52: #{tpu_custom_call.1} parent=1 // pred_region
      %3032 = dma.done [#allocation3], 32
    $region53: #{tpu_custom_call.1} parent=1 // pred_fallthru
      _
    %3033 = vsyncpa [#allocation3], 1
    %3034 = vsyncpa [#allocation4], 1

</llo_original>
